<compile_context>
chip_gen: v7x
topology: tpu7x:2x2x1
jax: 0.10.0
libtpu: 0.0.40
codegen_flags: <defaults>
</compile_context>

<pallas_src>
import jax
import jax.numpy as jnp
from jax.experimental import pallas as pl
from jax.experimental.pallas import tpu as pltpu

# ------------------------- static configuration -------------------------
B = 2            # batch of graphs
N = 16           # nodes per graph (max_len after unbatch-padding)
BN = B * N       # stacked node axis
IN_DIM = 16      # DevignModel input_dim        (orig 100)
OUT_DIM = 32     # DevignModel output_dim       (orig 128)
E_TYPES = 3      # max_edge_types
N_STEPS = 6      # GGNN timesteps
CONCAT_DIM = IN_DIM + OUT_DIM
CLR_DIM = 32     # clr_model hidden_size        (orig 768)
COMB_DIM = 32    # combined_output_dim          (orig 128)
SEQ = 8          # token sequence length for the CLR stand-in
VOCAB = 50

GATE3 = 3 * OUT_DIM                 # GRU gate width (96)
W_EXT_LANES = (E_TYPES + 1) * 128   # lane-aligned fused GGNN weight width (512)
ADJ_LANES = E_TYPES * 128           # lane-aligned adjacency slab width (384)
BIAS_LANES = 128                    # packed bias lane width
FUSE_C = OUT_DIM + CONCAT_DIM       # fused Y/Z conv channel width (80)

M1 = N - 2                          # per-graph Conv1d(k=3) output length (14)
L1 = (M1 - 3) // 2 + 1              # after MaxPool1d(3, stride=2)        (6)
L2 = (L1 - 2) // 2 + 1              # after MaxPool1d(2, stride=2)        (3)
M_ALL = BN - 2                      # stacked conv output length          (30)
TEMP_DIM = OUT_DIM + CONCAT_DIM
# TODO(synk): the original fc1 is sized clr_hidden + concat_dim, but the actual
# concatenated devign feature is output_dim + concat_dim wide (the PyTorch spec is
# internally inconsistent); fc1 is sized to the actual width so the forward runs.
FEAT_DIM = CLR_DIM + TEMP_DIM       # 112
OUT_LANES = 128                     # lane-dense output slab width

# The block-diagonal conv over the stacked node axis is only valid because the
# pooling (floor semantics) never selects the two boundary-straddling conv rows.
assert 2 * (L1 - 1) + 2 < M1, "maxpool1 window would cross the graph boundary"
assert 2 * (L2 - 1) + 1 < L1, "maxpool2 window would cross the graph boundary"


# ------------------------- the fused kernel -------------------------
def combined_kernel(h0_ref, adj_ref, bih_ref, clr_ref, wext_ref, bias_ref,
                    wc1_ref, wc2_ref, wm_ref, w1_ref, w2_ref, out_ref,
                    y_s, q_s):
    f32 = jnp.float32
    bf16 = jnp.bfloat16

    h = h0_ref[...]                          # (BN, OUT_DIM) f32: [x | 0]
    x = h[:, 0:IN_DIM]

    # ---- hoisted invariant loads / broadcasts (unrolled GGNN loop below) ----
    adj_slab = adj_ref[...]                  # (BN, 384) bf16, lane-aligned planes
    adj0 = adj_slab[:, 0:BN]
    adj1 = adj_slab[:, 128:128 + BN]
    adj2 = adj_slab[:, 256:256 + BN]
    w_ext = wext_ref[...]                    # (OUT_DIM, 512) bf16:
                                             #  [wg0@wih |pad| wg1@wih |pad| wg2@wih |pad| whh |pad]
    bih_eff = bih_ref[...]                   # (BN, GATE3) f32: bih + adjacency-folded bg@wih
    biases = bias_ref[...]                   # (8, 128) f32 packed constants
    bhh = jnp.broadcast_to(biases[0:1, 0:GATE3], (BN, GATE3))

    # ---------------- GatedGraphConv (dense message passing + GRUCell) ----------
    for _ in range(N_STEPS):
        hb = h.astype(bf16)
        # one wide MXU push: per-etype folded message weights + GRU hidden weight
        msg = jnp.dot(hb, w_ext, preferred_element_type=f32)            # (BN, 512)
        m0 = msg[:, 0:GATE3].astype(bf16)
        m1 = msg[:, 128:128 + GATE3].astype(bf16)
        m2 = msg[:, 256:256 + GATE3].astype(bf16)
        gi = (jnp.dot(adj0, m0, preferred_element_type=f32)
              + jnp.dot(adj1, m1, preferred_element_type=f32)
              + jnp.dot(adj2, m2, preferred_element_type=f32)
              + bih_eff)                                                 # (BN, 96)
        gh = msg[:, E_TYPES * 128:E_TYPES * 128 + GATE3] + bhh          # (BN, 96)
        rz = jax.nn.sigmoid(gi[:, 0:2 * OUT_DIM] + gh[:, 0:2 * OUT_DIM])
        r = rz[:, 0:OUT_DIM]
        z = rz[:, OUT_DIM:2 * OUT_DIM]
        n = jnp.tanh(gi[:, 2 * OUT_DIM:GATE3] + r * gh[:, 2 * OUT_DIM:GATE3])
        h = (1.0 - z) * n + z * h

    # ---------------- fused Y/Z conv branches (channels-last) -------------------
    # Y input = h (32 ch), Z input = [h, x] (48 ch)  ->  fused hc = [h | h | x].
    hc = jnp.concatenate([h, h, x], axis=-1)                             # (BN, 80)
    # three conv taps fused into one K=240 matmul
    hc3 = jnp.concatenate([hc[0:M_ALL], hc[1:M_ALL + 1], hc[2:M_ALL + 2]],
                          axis=-1).astype(bf16)                          # (30, 240)
    bc1 = jnp.broadcast_to(biases[1:2, 0:FUSE_C], (M_ALL, FUSE_C))
    y = jnp.maximum(
        jnp.dot(hc3, wc1_ref[...], preferred_element_type=f32) + bc1, 0.0)  # (30, 80)
    y_s[...] = y

    # MaxPool1d(3, stride=2) per graph: strided sublane loads from scratch
    p1_parts = []
    for g in range(B):
        base = g * N
        p1_parts.append(jnp.maximum(
            jnp.maximum(y_s[pl.ds(base, L1, stride=2), :],
                        y_s[pl.ds(base + 1, L1, stride=2), :]),
            y_s[pl.ds(base + 2, L1, stride=2), :]))
    p1 = jnp.concatenate(p1_parts, axis=0)                               # (B*L1, 80)

    # Conv1d(k=1) + ReLU + MaxPool1d(2, stride=2)
    bc2 = jnp.broadcast_to(biases[2:3, 0:FUSE_C], (B * L1, FUSE_C))
    q = jnp.maximum(
        jnp.dot(p1.astype(bf16), wc2_ref[...], preferred_element_type=f32) + bc2,
        0.0)                                                             # (12, 80)
    q_s[...] = q
    f2_parts = []
    for g in range(B):
        base = g * L1
        f2_parts.append(jnp.maximum(q_s[pl.ds(base, L2, stride=2), :],
                                    q_s[pl.ds(base + 1, L2, stride=2), :]))
    f2 = jnp.concatenate(f2_parts, axis=0)                               # (B*L2, 80)

    # ---------------- Devign heads (mlp_y / mlp_z fused into one matmul) --------
    bm = biases[3:4, 0:2]
    yz = jnp.dot(f2, wm_ref[...], preferred_element_type=f32) + bm       # (B*L2, 2)
    before = yz[:, 0:1] * yz[:, 1:2]                                     # (B*L2, 1)
    avg = jnp.concatenate(
        [jnp.sum(before[g * L2:(g + 1) * L2], axis=0, keepdims=True)
         for g in range(B)], axis=0) * (1.0 / L2)                        # (B, 1)
    temp = jnp.concatenate(
        [jnp.sum(f2[g * L2:(g + 1) * L2], axis=0, keepdims=True)
         for g in range(B)], axis=0)                                     # (B, 80)
    result = jax.nn.sigmoid(avg)                                         # (B, 1)

    # ---------------- Combined head: fc1 -> ReLU -> fc2 -> sigmoid --------------
    clr = clr_ref[...]                                                   # (B, CLR_DIM)
    feat = jnp.concatenate([clr, temp], axis=-1)                         # (B, FEAT_DIM)
    b1 = biases[4:5, 0:COMB_DIM]
    b2 = biases[5:6, 0:1]
    x1 = jnp.maximum(jnp.dot(feat, w1_ref[...], preferred_element_type=f32) + b1, 0.0)
    logit = jnp.dot(x1, w2_ref[...], preferred_element_type=f32) + b2
    prob = jax.nn.sigmoid(logit)                                         # (B, 1)

    # Single lane-dense output slab: [prob | devign_result | devign_avg | 0...]
    out_ref[...] = jnp.concatenate(
        [prob, result, avg, jnp.zeros((B, OUT_LANES - 3), f32)], axis=-1)


# ------------------------- wrapper -------------------------
def _full_spec(shape):
    nd = len(shape)
    return pl.BlockSpec(shape, lambda i, _nd=nd: (0,) * _nd)


def build_combined_call():
    in_specs = [
        _full_spec((BN, OUT_DIM)),             # h0 (initial GGNN state, x in cols 0:IN)
        _full_spec((BN, ADJ_LANES)),           # lane-aligned block-diag adjacency slab
        _full_spec((BN, GATE3)),               # effective bih (bias folded through adj)
        _full_spec((B, CLR_DIM)),              # clr_features
        _full_spec((OUT_DIM, W_EXT_LANES)),    # fused GGNN msg + GRU hidden weight
        _full_spec((8, BIAS_LANES)),           # packed biases
        _full_spec((3 * FUSE_C, FUSE_C)),      # fused conv taps (k=3, vstacked)
        _full_spec((FUSE_C, FUSE_C)),          # fused conv_l2 (k=1)
        _full_spec((FUSE_C, 2)),               # fused mlp_y / mlp_z
        _full_spec((FEAT_DIM, COMB_DIM)),      # fc1
        _full_spec((COMB_DIM, 1)),             # fc2
    ]
    out_specs = _full_spec((B, OUT_LANES))
    out_shape = jax.ShapeDtypeStruct((B, OUT_LANES), jnp.float32)
    return pl.pallas_call(
        combined_kernel,
        out_shape=out_shape,
        grid_spec=pltpu.PrefetchScalarGridSpec(
            num_scalar_prefetch=0,
            grid=(1,),
            in_specs=in_specs,
            out_specs=out_specs,
            scratch_shapes=[pltpu.VMEM((M_ALL, FUSE_C), jnp.float32),
                            pltpu.VMEM((B * L1, FUSE_C), jnp.float32)],
        ),
        compiler_params=pltpu.CompilerParams(dimension_semantics=("arbitrary",)),
    )


def _blkdiag(a, b):
    top = jnp.concatenate([a, jnp.zeros((a.shape[0], b.shape[1]), jnp.float32)], axis=1)
    bot = jnp.concatenate([jnp.zeros((b.shape[0], a.shape[1]), jnp.float32), b], axis=1)
    return jnp.concatenate([top, bot], axis=0)


def _pad_lanes(v, width=BIAS_LANES):
    return jnp.pad(v, ((0, 0), (0, width - v.shape[1])))


def pack_params(params):
    """One-time, parameter-only packing (hoisted out of the per-call jit)."""
    # lane-aligned fused GGNN weight: [wg_e@wih at lane e*128] + [whh at lane 384]
    w_ext = jnp.zeros((OUT_DIM, W_EXT_LANES), jnp.float32)
    for e in range(E_TYPES):
        w_ext = w_ext.at[:, e * 128:e * 128 + GATE3].set(params["wg"][e] @ params["wih"])
    w_ext = w_ext.at[:, E_TYPES * 128:E_TYPES * 128 + GATE3].set(params["whh"])
    w_ext = w_ext.astype(jnp.bfloat16)

    # per-etype message bias folded with the GRU input weight (used per-call)
    bgi = jnp.stack([params["bg"][e] @ params["wih"] for e in range(E_TYPES)], axis=0)

    # fused Y/Z conv weights (block-diagonal over channels); 3 taps vstacked (K=240)
    wc1 = jnp.concatenate(
        [_blkdiag(params["wy1"][t], params["wz1"][t]) for t in range(3)],
        axis=0).astype(jnp.bfloat16)                                     # (240, 80)
    wc2 = _blkdiag(params["wy2"], params["wz2"]).astype(jnp.bfloat16)    # (80, 80)

    # fused mlp_y / mlp_z
    col0 = jnp.concatenate([params["wmy"], jnp.zeros((CONCAT_DIM, 1), jnp.float32)], 0)
    col1 = jnp.concatenate([jnp.zeros((OUT_DIM, 1), jnp.float32), params["wmz"]], 0)
    wm_head = jnp.concatenate([col0, col1], axis=1)                      # (80, 2)

    # packed tiny biases -> one (8, 128) constant
    bias_pack = jnp.concatenate([
        _pad_lanes(params["bhh"]),
        _pad_lanes(jnp.concatenate([params["by1"], params["bz1"]], axis=-1)),
        _pad_lanes(jnp.concatenate([params["by2"], params["bz2"]], axis=-1)),
        _pad_lanes(jnp.concatenate([params["bmy"], params["bmz"]], axis=-1)),
        _pad_lanes(params["b1"]),
        _pad_lanes(params["b2"]),
        jnp.zeros((2, BIAS_LANES), jnp.float32),
    ], axis=0)

    return {"w_ext": w_ext, "bgi": bgi, "bih": params["bih"], "bias": bias_pack,
            "wc1": wc1, "wc2": wc2, "wm": wm_head,
            "w1": params["w1"], "w2": params["w2"]}


def prepare_call_inputs(packed, node_feats, adj, clr_feat):
    """Per-call (data-dependent) prep: h0, adjacency slab, effective bih."""
    x_flat = node_feats.reshape(BN, IN_DIM)
    h0 = jnp.concatenate(
        [x_flat, jnp.zeros((BN, OUT_DIM - IN_DIM), jnp.float32)], axis=-1)

    # lane-aligned block-diagonal adjacency slab, bf16 (0/1 values are exact)
    adj_slab = jnp.zeros((BN, ADJ_LANES), jnp.float32)
    for e in range(E_TYPES):
        for g in range(B):
            adj_slab = adj_slab.at[
                g * N:(g + 1) * N, e * 128 + g * N:e * 128 + (g + 1) * N].set(adj[g, e])
    adj_slab = adj_slab.astype(jnp.bfloat16)

    # message bias folded through the step-invariant adjacency:
    #   sum_e adj_e @ bcast(bg_e@wih) = rowdeg_e[:, None] * (bg_e@wih)
    bih_eff = jnp.broadcast_to(packed["bih"], (BN, GATE3))
    for e in range(E_TYPES):
        rowdeg = adj[:, e].sum(axis=-1).reshape(BN, 1)
        bih_eff = bih_eff + rowdeg * packed["bgi"][e]

    return (h0, adj_slab, bih_eff, clr_feat, packed["w_ext"], packed["bias"],
            packed["wc1"], packed["wc2"], packed["wm"], packed["w1"], packed["w2"])


@jax.jit
def combined_forward(packed, node_feats, adj, clr_feat):
    """CombinedModel.forward with labels=None -> prob (plus devign result/avg)."""
    call = build_combined_call()
    out = call(*prepare_call_inputs(packed, node_feats, adj, clr_feat))
    return out[:, 0], out[:, 1], out[:, 2]


def clr_standin(params, input_ids, attention_mask):
    # TODO(synk): CLRModel wraps roberta-base; the transformer encoder is not
    # reimplemented.  Stand-in: embedding lookup + masked mean pool + tanh(Linear)
    # producing clr_features of shape (B, CLR_DIM), computed in plain JAX.
    emb = jnp.take(params["clr_emb"], input_ids, axis=0)
    m = attention_mask[..., None].astype(jnp.float32)
    pooled = (emb * m).sum(axis=1) / jnp.maximum(m.sum(axis=1), 1.0)
    return jnp.tanh(pooled @ params["clr_w"] + params["clr_b"])


# ------------------------- pure-JAX reference (unfused, per graph) -------------
def _ref_conv3_relu(inp, w, b):
    m = inp.shape[0] - 2
    y = inp[0:m] @ w[0] + inp[1:m + 1] @ w[1] + inp[2:m + 2] @ w[2] + b
    return jnp.maximum(y, 0.0)


def _ref_maxpool(y, k, s):
    n_out = (y.shape[0] - k) // s + 1
    return jnp.stack([jnp.max(y[i * s:i * s + k], axis=0) for i in range(n_out)], 0)


def reference_forward(params, node_feats, adj, clr_feat):
    probs, results, avgs = [], [], []
    for g in range(B):
        x = node_feats[g]
        h = jnp.concatenate([x, jnp.zeros((N, OUT_DIM - IN_DIM), jnp.float32)], -1)
        for _ in range(N_STEPS):
            a = jnp.zeros((N, OUT_DIM), jnp.float32)
            for e in range(E_TYPES):
                msg = h @ params["wg"][e] + params["bg"][e]
                a = a + adj[g, e] @ msg
            gi = a @ params["wih"] + params["bih"]
            gh = h @ params["whh"] + params["bhh"]
            r = jax.nn.sigmoid(gi[:, :OUT_DIM] + gh[:, :OUT_DIM])
            z = jax.nn.sigmoid(gi[:, OUT_DIM:2 * OUT_DIM] + gh[:, OUT_DIM:2 * OUT_DIM])
            n = jnp.tanh(gi[:, 2 * OUT_DIM:] + r * gh[:, 2 * OUT_DIM:])
            h = (1.0 - z) * n + z * h
        c = jnp.concatenate([h, x], -1)
        y1 = _ref_maxpool(_ref_conv3_relu(h, params["wy1"], params["by1"]), 3, 2)
        y2 = _ref_maxpool(jnp.maximum(y1 @ params["wy2"] + params["by2"], 0.0), 2, 2)
        z1 = _ref_maxpool(_ref_conv3_relu(c, params["wz1"], params["bz1"]), 3, 2)
        z2 = _ref_maxpool(jnp.maximum(z1 @ params["wz2"] + params["bz2"], 0.0), 2, 2)
        ym = y2 @ params["wmy"] + params["bmy"]
        zm = z2 @ params["wmz"] + params["bmz"]
        before = ym * zm
        avg = jnp.mean(before, axis=0, keepdims=True)
        temp = jnp.concatenate([y2.sum(0, keepdims=True), z2.sum(0, keepdims=True)], -1)
        feat = jnp.concatenate([clr_feat[g:g + 1], temp], -1)
        x1 = jnp.maximum(feat @ params["w1"] + params["b1"], 0.0)
        prob = jax.nn.sigmoid(x1 @ params["w2"] + params["b2"])
        probs.append(prob[0, 0])
        results.append(jax.nn.sigmoid(avg)[0, 0])
        avgs.append(avg[0, 0])
    return jnp.stack(probs), jnp.stack(results), jnp.stack(avgs)


# ------------------------- main -------------------------
if __name__ == "__main__":
    key = jax.random.PRNGKey(0)
    ks = iter(jax.random.split(key, 40))

    def rnd(shape, scale=0.1):
        return (scale * jax.random.normal(next(ks), shape)).astype(jnp.float32)

    params = {
        # CLR stand-in
        "clr_emb": rnd((VOCAB, CLR_DIM), 0.5),
        "clr_w": rnd((CLR_DIM, CLR_DIM)),
        "clr_b": rnd((1, CLR_DIM)),
        # GatedGraphConv
        "wg": rnd((E_TYPES, OUT_DIM, OUT_DIM)),
        "bg": rnd((E_TYPES, 1, OUT_DIM)),
        "wih": rnd((OUT_DIM, 3 * OUT_DIM)),
        "whh": rnd((OUT_DIM, 3 * OUT_DIM)),
        "bih": rnd((1, 3 * OUT_DIM)),
        "bhh": rnd((1, 3 * OUT_DIM)),
        # Devign conv branches ((tap, Cin, Cout) / (Cin, Cout) channels-last layout)
        "wy1": rnd((3, OUT_DIM, OUT_DIM)),
        "by1": rnd((1, OUT_DIM)),
        "wy2": rnd((OUT_DIM, OUT_DIM)),
        "by2": rnd((1, OUT_DIM)),
        "wz1": rnd((3, CONCAT_DIM, CONCAT_DIM)),
        "bz1": rnd((1, CONCAT_DIM)),
        "wz2": rnd((CONCAT_DIM, CONCAT_DIM)),
        "bz2": rnd((1, CONCAT_DIM)),
        # Devign heads
        "wmy": rnd((OUT_DIM, 1)),
        "bmy": rnd((1, 1)),
        "wmz": rnd((CONCAT_DIM, 1)),
        "bmz": rnd((1, 1)),
        # Combined head
        "w1": rnd((FEAT_DIM, COMB_DIM)),
        "b1": rnd((1, COMB_DIM)),
        "w2": rnd((COMB_DIM, 1)),
        "b2": rnd((1, 1)),
    }

    # Graph inputs: node features + dense per-edge-type adjacency (dst, src).
    node_feats = rnd((B, N, IN_DIM), 1.0)
    adj = (jax.random.uniform(next(ks), (B, E_TYPES, N, N)) < 0.25).astype(jnp.float32)

    # CLR inputs.
    input_ids = jax.random.randint(next(ks), (B, SEQ), 0, VOCAB)
    attention_mask = jnp.ones((B, SEQ), jnp.float32)
    clr_features = clr_standin(params, input_ids, attention_mask)

    # One-time parameter packing (hoisted out of the per-call jit).
    packed = jax.tree_util.tree_map(jnp.asarray, pack_params(params))

    prob, devign_result, devign_avg = combined_forward(
        packed, params, node_feats, adj, clr_features)[0:3] if False else \
        combined_forward(packed, node_feats, adj, clr_features)
    jax.block_until_ready(prob)
    assert prob.shape == (B,)

    # Correctness check against an unfused pure-JAX f32 reference.  Tolerance is
    # 2e-2 (not 5e-3) to cover bf16 matmul-operand rounding accumulated through the
    # 6-step GGNN recurrence + conv stack (all gate math / accumulation stays f32).
    with jax.default_matmul_precision("float32"):
        p_ref, r_ref, a_ref = reference_forward(params, node_feats, adj, clr_features)
    tol = dict(atol=2e-2, rtol=2e-2)
    d = max(float(jnp.max(jnp.abs(prob - p_ref))),
            float(jnp.max(jnp.abs(devign_result - r_ref))),
            float(jnp.max(jnp.abs(devign_avg - a_ref))))
    ok = (jnp.allclose(prob, p_ref, **tol)
          and jnp.allclose(devign_result, r_ref, **tol)
          and jnp.allclose(devign_avg, a_ref, **tol))
    assert bool(ok), f"kernel/reference mismatch (max abs diff {d:.4g})"

    print("KERNEL_OK")
</pallas_src>

<mosaic_0001>
module attributes {stable_mosaic.version = 11 : i64} {
  func.func @combined_kernel(%arg0: i32, %arg1: memref<32x32xf32, #tpu.memory_space<vmem>>, %arg2: memref<32x384xbf16, #tpu.memory_space<vmem>>, %arg3: memref<32x96xf32, #tpu.memory_space<vmem>>, %arg4: memref<2x32xf32, #tpu.memory_space<vmem>>, %arg5: memref<32x512xbf16, #tpu.memory_space<vmem>>, %arg6: memref<8x128xf32, #tpu.memory_space<vmem>>, %arg7: memref<240x80xbf16, #tpu.memory_space<vmem>>, %arg8: memref<80x80xbf16, #tpu.memory_space<vmem>>, %arg9: memref<80x2xf32, #tpu.memory_space<vmem>>, %arg10: memref<112x32xf32, #tpu.memory_space<vmem>>, %arg11: memref<32x1xf32, #tpu.memory_space<vmem>>, %arg12: memref<2x128xf32, #tpu.memory_space<vmem>>, %arg13: memref<30x80xf32, #tpu.memory_space<vmem>>, %arg14: memref<12x80xf32, #tpu.memory_space<vmem>>) attributes {dimension_semantics = [#tpu.dimension_semantics<arbitrary>], iteration_bounds = array<i64: 1>, scalar_prefetch = 0 : i64, scratch_operands = 2 : i64, tpu.core_type = #tpu.core_type<tc>, window_params = [{pipeline_mode = #tpu.pipeline_mode<synchronous>, transform_indices = @transform_0, window_bounds = array<i64: 32, 32>}, {pipeline_mode = #tpu.pipeline_mode<synchronous>, transform_indices = @transform_1, window_bounds = array<i64: 32, 384>}, {pipeline_mode = #tpu.pipeline_mode<synchronous>, transform_indices = @transform_2, window_bounds = array<i64: 32, 96>}, {pipeline_mode = #tpu.pipeline_mode<synchronous>, transform_indices = @transform_3, window_bounds = array<i64: 2, 32>}, {pipeline_mode = #tpu.pipeline_mode<synchronous>, transform_indices = @transform_4, window_bounds = array<i64: 32, 512>}, {pipeline_mode = #tpu.pipeline_mode<synchronous>, transform_indices = @transform_5, window_bounds = array<i64: 8, 128>}, {pipeline_mode = #tpu.pipeline_mode<synchronous>, transform_indices = @transform_6, window_bounds = array<i64: 240, 80>}, {pipeline_mode = #tpu.pipeline_mode<synchronous>, transform_indices = @transform_7, window_bounds = array<i64: 80, 80>}, {pipeline_mode = #tpu.pipeline_mode<synchronous>, transform_indices = @transform_8, window_bounds = array<i64: 80, 2>}, {pipeline_mode = #tpu.pipeline_mode<synchronous>, transform_indices = @transform_9, window_bounds = array<i64: 112, 32>}, {pipeline_mode = #tpu.pipeline_mode<synchronous>, transform_indices = @transform_10, window_bounds = array<i64: 32, 1>}, {pipeline_mode = #tpu.pipeline_mode<synchronous>, transform_indices = @transform_11, window_bounds = array<i64: 2, 128>}]} {
    %c0 = arith.constant 0 : index
    %c0_0 = arith.constant 0 : index
    %0 = vector.load %arg1[%c0, %c0_0] : memref<32x32xf32, #tpu.memory_space<vmem>>, vector<32x32xf32>
    %1 = vector.extract_strided_slice %0 {offsets = [0, 0], sizes = [32, 16], strides = [1, 1]} : vector<32x32xf32> to vector<32x16xf32>
    %c0_1 = arith.constant 0 : index
    %c0_2 = arith.constant 0 : index
    %2 = vector.load %arg2[%c0_1, %c0_2] : memref<32x384xbf16, #tpu.memory_space<vmem>>, vector<32x384xbf16>
    %3 = vector.extract_strided_slice %2 {offsets = [0, 0], sizes = [32, 32], strides = [1, 1]} : vector<32x384xbf16> to vector<32x32xbf16>
    %4 = vector.extract_strided_slice %2 {offsets = [0, 128], sizes = [32, 32], strides = [1, 1]} : vector<32x384xbf16> to vector<32x32xbf16>
    %5 = vector.extract_strided_slice %2 {offsets = [0, 256], sizes = [32, 32], strides = [1, 1]} : vector<32x384xbf16> to vector<32x32xbf16>
    %c0_3 = arith.constant 0 : index
    %c0_4 = arith.constant 0 : index
    %6 = vector.load %arg5[%c0_3, %c0_4] : memref<32x512xbf16, #tpu.memory_space<vmem>>, vector<32x512xbf16>
    %c0_5 = arith.constant 0 : index
    %c0_6 = arith.constant 0 : index
    %7 = vector.load %arg3[%c0_5, %c0_6] : memref<32x96xf32, #tpu.memory_space<vmem>>, vector<32x96xf32>
    %c0_7 = arith.constant 0 : index
    %c0_8 = arith.constant 0 : index
    %8 = vector.load %arg6[%c0_7, %c0_8] : memref<8x128xf32, #tpu.memory_space<vmem>>, vector<8x128xf32>
    %9 = vector.extract_strided_slice %8 {offsets = [0, 0], sizes = [1, 96], strides = [1, 1]} : vector<8x128xf32> to vector<1x96xf32>
    %10 = vector.shape_cast %9 : vector<1x96xf32> to vector<1x96xf32>
    %11 = vector.broadcast %10 : vector<1x96xf32> to vector<32x96xf32>
    %12 = arith.truncf %0 : vector<32x32xf32> to vector<32x32xbf16>
    %cst = arith.constant dense<0.000000e+00> : vector<32x512xf32>
    %13 = tpu.matmul %12, %6, %cst {dimension_numbers = #tpu.dot_dimension_numbers<[1], [0], [0], [1], [0, 0, 1, 1], [], []>} : vector<32x32xbf16>, vector<32x512xbf16>, vector<32x512xf32> -> vector<32x512xf32>
    %14 = vector.extract_strided_slice %13 {offsets = [0, 0], sizes = [32, 96], strides = [1, 1]} : vector<32x512xf32> to vector<32x96xf32>
    %15 = arith.truncf %14 : vector<32x96xf32> to vector<32x96xbf16>
    %16 = vector.extract_strided_slice %13 {offsets = [0, 128], sizes = [32, 96], strides = [1, 1]} : vector<32x512xf32> to vector<32x96xf32>
    %17 = arith.truncf %16 : vector<32x96xf32> to vector<32x96xbf16>
    %18 = vector.extract_strided_slice %13 {offsets = [0, 256], sizes = [32, 96], strides = [1, 1]} : vector<32x512xf32> to vector<32x96xf32>
    %19 = arith.truncf %18 : vector<32x96xf32> to vector<32x96xbf16>
    %cst_9 = arith.constant dense<0.000000e+00> : vector<32x96xf32>
    %20 = tpu.matmul %3, %15, %cst_9 {dimension_numbers = #tpu.dot_dimension_numbers<[1], [0], [0], [1], [0, 0, 1, 1], [], []>} : vector<32x32xbf16>, vector<32x96xbf16>, vector<32x96xf32> -> vector<32x96xf32>
    %cst_10 = arith.constant dense<0.000000e+00> : vector<32x96xf32>
    %21 = tpu.matmul %4, %17, %cst_10 {dimension_numbers = #tpu.dot_dimension_numbers<[1], [0], [0], [1], [0, 0, 1, 1], [], []>} : vector<32x32xbf16>, vector<32x96xbf16>, vector<32x96xf32> -> vector<32x96xf32>
    %22 = arith.addf %20, %21 : vector<32x96xf32>
    %cst_11 = arith.constant dense<0.000000e+00> : vector<32x96xf32>
    %23 = tpu.matmul %5, %19, %cst_11 {dimension_numbers = #tpu.dot_dimension_numbers<[1], [0], [0], [1], [0, 0, 1, 1], [], []>} : vector<32x32xbf16>, vector<32x96xbf16>, vector<32x96xf32> -> vector<32x96xf32>
    %24 = arith.addf %22, %23 : vector<32x96xf32>
    %25 = arith.addf %24, %7 : vector<32x96xf32>
    %26 = vector.extract_strided_slice %13 {offsets = [0, 384], sizes = [32, 96], strides = [1, 1]} : vector<32x512xf32> to vector<32x96xf32>
    %27 = arith.addf %26, %11 : vector<32x96xf32>
    %28 = vector.extract_strided_slice %25 {offsets = [0, 0], sizes = [32, 64], strides = [1, 1]} : vector<32x96xf32> to vector<32x64xf32>
    %29 = vector.extract_strided_slice %27 {offsets = [0, 0], sizes = [32, 64], strides = [1, 1]} : vector<32x96xf32> to vector<32x64xf32>
    %30 = arith.addf %28, %29 : vector<32x64xf32>
    %31 = arith.negf %30 : vector<32x64xf32>
    %32 = math.exp %31 : vector<32x64xf32>
    %cst_12 = arith.constant 1.000000e+00 : f32
    %33 = vector.broadcast %cst_12 : f32 to vector<32x64xf32>
    %34 = arith.addf %33, %32 : vector<32x64xf32>
    %35 = arith.divf %33, %34 : vector<32x64xf32>
    %36 = vector.extract_strided_slice %35 {offsets = [0, 0], sizes = [32, 32], strides = [1, 1]} : vector<32x64xf32> to vector<32x32xf32>
    %37 = vector.extract_strided_slice %35 {offsets = [0, 32], sizes = [32, 32], strides = [1, 1]} : vector<32x64xf32> to vector<32x32xf32>
    %38 = vector.extract_strided_slice %25 {offsets = [0, 64], sizes = [32, 32], strides = [1, 1]} : vector<32x96xf32> to vector<32x32xf32>
    %39 = vector.extract_strided_slice %27 {offsets = [0, 64], sizes = [32, 32], strides = [1, 1]} : vector<32x96xf32> to vector<32x32xf32>
    %40 = arith.mulf %36, %39 : vector<32x32xf32>
    %41 = arith.addf %38, %40 : vector<32x32xf32>
    %42 = math.tanh %41 : vector<32x32xf32>
    %cst_13 = arith.constant 1.000000e+00 : f32
    %43 = vector.broadcast %cst_13 : f32 to vector<32x32xf32>
    %44 = arith.subf %43, %37 : vector<32x32xf32>
    %45 = arith.mulf %44, %42 : vector<32x32xf32>
    %46 = arith.mulf %37, %0 : vector<32x32xf32>
    %47 = arith.addf %45, %46 : vector<32x32xf32>
    %48 = arith.truncf %47 : vector<32x32xf32> to vector<32x32xbf16>
    %cst_14 = arith.constant dense<0.000000e+00> : vector<32x512xf32>
    %49 = tpu.matmul %48, %6, %cst_14 {dimension_numbers = #tpu.dot_dimension_numbers<[1], [0], [0], [1], [0, 0, 1, 1], [], []>} : vector<32x32xbf16>, vector<32x512xbf16>, vector<32x512xf32> -> vector<32x512xf32>
    %50 = vector.extract_strided_slice %49 {offsets = [0, 0], sizes = [32, 96], strides = [1, 1]} : vector<32x512xf32> to vector<32x96xf32>
    %51 = arith.truncf %50 : vector<32x96xf32> to vector<32x96xbf16>
    %52 = vector.extract_strided_slice %49 {offsets = [0, 128], sizes = [32, 96], strides = [1, 1]} : vector<32x512xf32> to vector<32x96xf32>
    %53 = arith.truncf %52 : vector<32x96xf32> to vector<32x96xbf16>
    %54 = vector.extract_strided_slice %49 {offsets = [0, 256], sizes = [32, 96], strides = [1, 1]} : vector<32x512xf32> to vector<32x96xf32>
    %55 = arith.truncf %54 : vector<32x96xf32> to vector<32x96xbf16>
    %cst_15 = arith.constant dense<0.000000e+00> : vector<32x96xf32>
    %56 = tpu.matmul %3, %51, %cst_15 {dimension_numbers = #tpu.dot_dimension_numbers<[1], [0], [0], [1], [0, 0, 1, 1], [], []>} : vector<32x32xbf16>, vector<32x96xbf16>, vector<32x96xf32> -> vector<32x96xf32>
    %cst_16 = arith.constant dense<0.000000e+00> : vector<32x96xf32>
    %57 = tpu.matmul %4, %53, %cst_16 {dimension_numbers = #tpu.dot_dimension_numbers<[1], [0], [0], [1], [0, 0, 1, 1], [], []>} : vector<32x32xbf16>, vector<32x96xbf16>, vector<32x96xf32> -> vector<32x96xf32>
    %58 = arith.addf %56, %57 : vector<32x96xf32>
    %cst_17 = arith.constant dense<0.000000e+00> : vector<32x96xf32>
    %59 = tpu.matmul %5, %55, %cst_17 {dimension_numbers = #tpu.dot_dimension_numbers<[1], [0], [0], [1], [0, 0, 1, 1], [], []>} : vector<32x32xbf16>, vector<32x96xbf16>, vector<32x96xf32> -> vector<32x96xf32>
    %60 = arith.addf %58, %59 : vector<32x96xf32>
    %61 = arith.addf %60, %7 : vector<32x96xf32>
    %62 = vector.extract_strided_slice %49 {offsets = [0, 384], sizes = [32, 96], strides = [1, 1]} : vector<32x512xf32> to vector<32x96xf32>
    %63 = arith.addf %62, %11 : vector<32x96xf32>
    %64 = vector.extract_strided_slice %61 {offsets = [0, 0], sizes = [32, 64], strides = [1, 1]} : vector<32x96xf32> to vector<32x64xf32>
    %65 = vector.extract_strided_slice %63 {offsets = [0, 0], sizes = [32, 64], strides = [1, 1]} : vector<32x96xf32> to vector<32x64xf32>
    %66 = arith.addf %64, %65 : vector<32x64xf32>
    %67 = arith.negf %66 : vector<32x64xf32>
    %68 = math.exp %67 : vector<32x64xf32>
    %cst_18 = arith.constant 1.000000e+00 : f32
    %69 = vector.broadcast %cst_18 : f32 to vector<32x64xf32>
    %70 = arith.addf %69, %68 : vector<32x64xf32>
    %71 = arith.divf %69, %70 : vector<32x64xf32>
    %72 = vector.extract_strided_slice %71 {offsets = [0, 0], sizes = [32, 32], strides = [1, 1]} : vector<32x64xf32> to vector<32x32xf32>
    %73 = vector.extract_strided_slice %71 {offsets = [0, 32], sizes = [32, 32], strides = [1, 1]} : vector<32x64xf32> to vector<32x32xf32>
    %74 = vector.extract_strided_slice %61 {offsets = [0, 64], sizes = [32, 32], strides = [1, 1]} : vector<32x96xf32> to vector<32x32xf32>
    %75 = vector.extract_strided_slice %63 {offsets = [0, 64], sizes = [32, 32], strides = [1, 1]} : vector<32x96xf32> to vector<32x32xf32>
    %76 = arith.mulf %72, %75 : vector<32x32xf32>
    %77 = arith.addf %74, %76 : vector<32x32xf32>
    %78 = math.tanh %77 : vector<32x32xf32>
    %cst_19 = arith.constant 1.000000e+00 : f32
    %79 = vector.broadcast %cst_19 : f32 to vector<32x32xf32>
    %80 = arith.subf %79, %73 : vector<32x32xf32>
    %81 = arith.mulf %80, %78 : vector<32x32xf32>
    %82 = arith.mulf %73, %47 : vector<32x32xf32>
    %83 = arith.addf %81, %82 : vector<32x32xf32>
    %84 = arith.truncf %83 : vector<32x32xf32> to vector<32x32xbf16>
    %cst_20 = arith.constant dense<0.000000e+00> : vector<32x512xf32>
    %85 = tpu.matmul %84, %6, %cst_20 {dimension_numbers = #tpu.dot_dimension_numbers<[1], [0], [0], [1], [0, 0, 1, 1], [], []>} : vector<32x32xbf16>, vector<32x512xbf16>, vector<32x512xf32> -> vector<32x512xf32>
    %86 = vector.extract_strided_slice %85 {offsets = [0, 0], sizes = [32, 96], strides = [1, 1]} : vector<32x512xf32> to vector<32x96xf32>
    %87 = arith.truncf %86 : vector<32x96xf32> to vector<32x96xbf16>
    %88 = vector.extract_strided_slice %85 {offsets = [0, 128], sizes = [32, 96], strides = [1, 1]} : vector<32x512xf32> to vector<32x96xf32>
    %89 = arith.truncf %88 : vector<32x96xf32> to vector<32x96xbf16>
    %90 = vector.extract_strided_slice %85 {offsets = [0, 256], sizes = [32, 96], strides = [1, 1]} : vector<32x512xf32> to vector<32x96xf32>
    %91 = arith.truncf %90 : vector<32x96xf32> to vector<32x96xbf16>
    %cst_21 = arith.constant dense<0.000000e+00> : vector<32x96xf32>
    %92 = tpu.matmul %3, %87, %cst_21 {dimension_numbers = #tpu.dot_dimension_numbers<[1], [0], [0], [1], [0, 0, 1, 1], [], []>} : vector<32x32xbf16>, vector<32x96xbf16>, vector<32x96xf32> -> vector<32x96xf32>
    %cst_22 = arith.constant dense<0.000000e+00> : vector<32x96xf32>
    %93 = tpu.matmul %4, %89, %cst_22 {dimension_numbers = #tpu.dot_dimension_numbers<[1], [0], [0], [1], [0, 0, 1, 1], [], []>} : vector<32x32xbf16>, vector<32x96xbf16>, vector<32x96xf32> -> vector<32x96xf32>
    %94 = arith.addf %92, %93 : vector<32x96xf32>
    %cst_23 = arith.constant dense<0.000000e+00> : vector<32x96xf32>
    %95 = tpu.matmul %5, %91, %cst_23 {dimension_numbers = #tpu.dot_dimension_numbers<[1], [0], [0], [1], [0, 0, 1, 1], [], []>} : vector<32x32xbf16>, vector<32x96xbf16>, vector<32x96xf32> -> vector<32x96xf32>
    %96 = arith.addf %94, %95 : vector<32x96xf32>
    %97 = arith.addf %96, %7 : vector<32x96xf32>
    %98 = vector.extract_strided_slice %85 {offsets = [0, 384], sizes = [32, 96], strides = [1, 1]} : vector<32x512xf32> to vector<32x96xf32>
    %99 = arith.addf %98, %11 : vector<32x96xf32>
    %100 = vector.extract_strided_slice %97 {offsets = [0, 0], sizes = [32, 64], strides = [1, 1]} : vector<32x96xf32> to vector<32x64xf32>
    %101 = vector.extract_strided_slice %99 {offsets = [0, 0], sizes = [32, 64], strides = [1, 1]} : vector<32x96xf32> to vector<32x64xf32>
    %102 = arith.addf %100, %101 : vector<32x64xf32>
    %103 = arith.negf %102 : vector<32x64xf32>
    %104 = math.exp %103 : vector<32x64xf32>
    %cst_24 = arith.constant 1.000000e+00 : f32
    %105 = vector.broadcast %cst_24 : f32 to vector<32x64xf32>
    %106 = arith.addf %105, %104 : vector<32x64xf32>
    %107 = arith.divf %105, %106 : vector<32x64xf32>
    %108 = vector.extract_strided_slice %107 {offsets = [0, 0], sizes = [32, 32], strides = [1, 1]} : vector<32x64xf32> to vector<32x32xf32>
    %109 = vector.extract_strided_slice %107 {offsets = [0, 32], sizes = [32, 32], strides = [1, 1]} : vector<32x64xf32> to vector<32x32xf32>
    %110 = vector.extract_strided_slice %97 {offsets = [0, 64], sizes = [32, 32], strides = [1, 1]} : vector<32x96xf32> to vector<32x32xf32>
    %111 = vector.extract_strided_slice %99 {offsets = [0, 64], sizes = [32, 32], strides = [1, 1]} : vector<32x96xf32> to vector<32x32xf32>
    %112 = arith.mulf %108, %111 : vector<32x32xf32>
    %113 = arith.addf %110, %112 : vector<32x32xf32>
    %114 = math.tanh %113 : vector<32x32xf32>
    %cst_25 = arith.constant 1.000000e+00 : f32
    %115 = vector.broadcast %cst_25 : f32 to vector<32x32xf32>
    %116 = arith.subf %115, %109 : vector<32x32xf32>
    %117 = arith.mulf %116, %114 : vector<32x32xf32>
    %118 = arith.mulf %109, %83 : vector<32x32xf32>
    %119 = arith.addf %117, %118 : vector<32x32xf32>
    %120 = arith.truncf %119 : vector<32x32xf32> to vector<32x32xbf16>
    %cst_26 = arith.constant dense<0.000000e+00> : vector<32x512xf32>
    %121 = tpu.matmul %120, %6, %cst_26 {dimension_numbers = #tpu.dot_dimension_numbers<[1], [0], [0], [1], [0, 0, 1, 1], [], []>} : vector<32x32xbf16>, vector<32x512xbf16>, vector<32x512xf32> -> vector<32x512xf32>
    %122 = vector.extract_strided_slice %121 {offsets = [0, 0], sizes = [32, 96], strides = [1, 1]} : vector<32x512xf32> to vector<32x96xf32>
    %123 = arith.truncf %122 : vector<32x96xf32> to vector<32x96xbf16>
    %124 = vector.extract_strided_slice %121 {offsets = [0, 128], sizes = [32, 96], strides = [1, 1]} : vector<32x512xf32> to vector<32x96xf32>
    %125 = arith.truncf %124 : vector<32x96xf32> to vector<32x96xbf16>
    %126 = vector.extract_strided_slice %121 {offsets = [0, 256], sizes = [32, 96], strides = [1, 1]} : vector<32x512xf32> to vector<32x96xf32>
    %127 = arith.truncf %126 : vector<32x96xf32> to vector<32x96xbf16>
    %cst_27 = arith.constant dense<0.000000e+00> : vector<32x96xf32>
    %128 = tpu.matmul %3, %123, %cst_27 {dimension_numbers = #tpu.dot_dimension_numbers<[1], [0], [0], [1], [0, 0, 1, 1], [], []>} : vector<32x32xbf16>, vector<32x96xbf16>, vector<32x96xf32> -> vector<32x96xf32>
    %cst_28 = arith.constant dense<0.000000e+00> : vector<32x96xf32>
    %129 = tpu.matmul %4, %125, %cst_28 {dimension_numbers = #tpu.dot_dimension_numbers<[1], [0], [0], [1], [0, 0, 1, 1], [], []>} : vector<32x32xbf16>, vector<32x96xbf16>, vector<32x96xf32> -> vector<32x96xf32>
    %130 = arith.addf %128, %129 : vector<32x96xf32>
    %cst_29 = arith.constant dense<0.000000e+00> : vector<32x96xf32>
    %131 = tpu.matmul %5, %127, %cst_29 {dimension_numbers = #tpu.dot_dimension_numbers<[1], [0], [0], [1], [0, 0, 1, 1], [], []>} : vector<32x32xbf16>, vector<32x96xbf16>, vector<32x96xf32> -> vector<32x96xf32>
    %132 = arith.addf %130, %131 : vector<32x96xf32>
    %133 = arith.addf %132, %7 : vector<32x96xf32>
    %134 = vector.extract_strided_slice %121 {offsets = [0, 384], sizes = [32, 96], strides = [1, 1]} : vector<32x512xf32> to vector<32x96xf32>
    %135 = arith.addf %134, %11 : vector<32x96xf32>
    %136 = vector.extract_strided_slice %133 {offsets = [0, 0], sizes = [32, 64], strides = [1, 1]} : vector<32x96xf32> to vector<32x64xf32>
    %137 = vector.extract_strided_slice %135 {offsets = [0, 0], sizes = [32, 64], strides = [1, 1]} : vector<32x96xf32> to vector<32x64xf32>
    %138 = arith.addf %136, %137 : vector<32x64xf32>
    %139 = arith.negf %138 : vector<32x64xf32>
    %140 = math.exp %139 : vector<32x64xf32>
    %cst_30 = arith.constant 1.000000e+00 : f32
    %141 = vector.broadcast %cst_30 : f32 to vector<32x64xf32>
    %142 = arith.addf %141, %140 : vector<32x64xf32>
    %143 = arith.divf %141, %142 : vector<32x64xf32>
    %144 = vector.extract_strided_slice %143 {offsets = [0, 0], sizes = [32, 32], strides = [1, 1]} : vector<32x64xf32> to vector<32x32xf32>
    %145 = vector.extract_strided_slice %143 {offsets = [0, 32], sizes = [32, 32], strides = [1, 1]} : vector<32x64xf32> to vector<32x32xf32>
    %146 = vector.extract_strided_slice %133 {offsets = [0, 64], sizes = [32, 32], strides = [1, 1]} : vector<32x96xf32> to vector<32x32xf32>
    %147 = vector.extract_strided_slice %135 {offsets = [0, 64], sizes = [32, 32], strides = [1, 1]} : vector<32x96xf32> to vector<32x32xf32>
    %148 = arith.mulf %144, %147 : vector<32x32xf32>
    %149 = arith.addf %146, %148 : vector<32x32xf32>
    %150 = math.tanh %149 : vector<32x32xf32>
    %cst_31 = arith.constant 1.000000e+00 : f32
    %151 = vector.broadcast %cst_31 : f32 to vector<32x32xf32>
    %152 = arith.subf %151, %145 : vector<32x32xf32>
    %153 = arith.mulf %152, %150 : vector<32x32xf32>
    %154 = arith.mulf %145, %119 : vector<32x32xf32>
    %155 = arith.addf %153, %154 : vector<32x32xf32>
    %156 = arith.truncf %155 : vector<32x32xf32> to vector<32x32xbf16>
    %cst_32 = arith.constant dense<0.000000e+00> : vector<32x512xf32>
    %157 = tpu.matmul %156, %6, %cst_32 {dimension_numbers = #tpu.dot_dimension_numbers<[1], [0], [0], [1], [0, 0, 1, 1], [], []>} : vector<32x32xbf16>, vector<32x512xbf16>, vector<32x512xf32> -> vector<32x512xf32>
    %158 = vector.extract_strided_slice %157 {offsets = [0, 0], sizes = [32, 96], strides = [1, 1]} : vector<32x512xf32> to vector<32x96xf32>
    %159 = arith.truncf %158 : vector<32x96xf32> to vector<32x96xbf16>
    %160 = vector.extract_strided_slice %157 {offsets = [0, 128], sizes = [32, 96], strides = [1, 1]} : vector<32x512xf32> to vector<32x96xf32>
    %161 = arith.truncf %160 : vector<32x96xf32> to vector<32x96xbf16>
    %162 = vector.extract_strided_slice %157 {offsets = [0, 256], sizes = [32, 96], strides = [1, 1]} : vector<32x512xf32> to vector<32x96xf32>
    %163 = arith.truncf %162 : vector<32x96xf32> to vector<32x96xbf16>
    %cst_33 = arith.constant dense<0.000000e+00> : vector<32x96xf32>
    %164 = tpu.matmul %3, %159, %cst_33 {dimension_numbers = #tpu.dot_dimension_numbers<[1], [0], [0], [1], [0, 0, 1, 1], [], []>} : vector<32x32xbf16>, vector<32x96xbf16>, vector<32x96xf32> -> vector<32x96xf32>
    %cst_34 = arith.constant dense<0.000000e+00> : vector<32x96xf32>
    %165 = tpu.matmul %4, %161, %cst_34 {dimension_numbers = #tpu.dot_dimension_numbers<[1], [0], [0], [1], [0, 0, 1, 1], [], []>} : vector<32x32xbf16>, vector<32x96xbf16>, vector<32x96xf32> -> vector<32x96xf32>
    %166 = arith.addf %164, %165 : vector<32x96xf32>
    %cst_35 = arith.constant dense<0.000000e+00> : vector<32x96xf32>
    %167 = tpu.matmul %5, %163, %cst_35 {dimension_numbers = #tpu.dot_dimension_numbers<[1], [0], [0], [1], [0, 0, 1, 1], [], []>} : vector<32x32xbf16>, vector<32x96xbf16>, vector<32x96xf32> -> vector<32x96xf32>
    %168 = arith.addf %166, %167 : vector<32x96xf32>
    %169 = arith.addf %168, %7 : vector<32x96xf32>
    %170 = vector.extract_strided_slice %157 {offsets = [0, 384], sizes = [32, 96], strides = [1, 1]} : vector<32x512xf32> to vector<32x96xf32>
    %171 = arith.addf %170, %11 : vector<32x96xf32>
    %172 = vector.extract_strided_slice %169 {offsets = [0, 0], sizes = [32, 64], strides = [1, 1]} : vector<32x96xf32> to vector<32x64xf32>
    %173 = vector.extract_strided_slice %171 {offsets = [0, 0], sizes = [32, 64], strides = [1, 1]} : vector<32x96xf32> to vector<32x64xf32>
    %174 = arith.addf %172, %173 : vector<32x64xf32>
    %175 = arith.negf %174 : vector<32x64xf32>
    %176 = math.exp %175 : vector<32x64xf32>
    %cst_36 = arith.constant 1.000000e+00 : f32
    %177 = vector.broadcast %cst_36 : f32 to vector<32x64xf32>
    %178 = arith.addf %177, %176 : vector<32x64xf32>
    %179 = arith.divf %177, %178 : vector<32x64xf32>
    %180 = vector.extract_strided_slice %179 {offsets = [0, 0], sizes = [32, 32], strides = [1, 1]} : vector<32x64xf32> to vector<32x32xf32>
    %181 = vector.extract_strided_slice %179 {offsets = [0, 32], sizes = [32, 32], strides = [1, 1]} : vector<32x64xf32> to vector<32x32xf32>
    %182 = vector.extract_strided_slice %169 {offsets = [0, 64], sizes = [32, 32], strides = [1, 1]} : vector<32x96xf32> to vector<32x32xf32>
    %183 = vector.extract_strided_slice %171 {offsets = [0, 64], sizes = [32, 32], strides = [1, 1]} : vector<32x96xf32> to vector<32x32xf32>
    %184 = arith.mulf %180, %183 : vector<32x32xf32>
    %185 = arith.addf %182, %184 : vector<32x32xf32>
    %186 = math.tanh %185 : vector<32x32xf32>
    %cst_37 = arith.constant 1.000000e+00 : f32
    %187 = vector.broadcast %cst_37 : f32 to vector<32x32xf32>
    %188 = arith.subf %187, %181 : vector<32x32xf32>
    %189 = arith.mulf %188, %186 : vector<32x32xf32>
    %190 = arith.mulf %181, %155 : vector<32x32xf32>
    %191 = arith.addf %189, %190 : vector<32x32xf32>
    %192 = arith.truncf %191 : vector<32x32xf32> to vector<32x32xbf16>
    %cst_38 = arith.constant dense<0.000000e+00> : vector<32x512xf32>
    %193 = tpu.matmul %192, %6, %cst_38 {dimension_numbers = #tpu.dot_dimension_numbers<[1], [0], [0], [1], [0, 0, 1, 1], [], []>} : vector<32x32xbf16>, vector<32x512xbf16>, vector<32x512xf32> -> vector<32x512xf32>
    %194 = vector.extract_strided_slice %193 {offsets = [0, 0], sizes = [32, 96], strides = [1, 1]} : vector<32x512xf32> to vector<32x96xf32>
    %195 = arith.truncf %194 : vector<32x96xf32> to vector<32x96xbf16>
    %196 = vector.extract_strided_slice %193 {offsets = [0, 128], sizes = [32, 96], strides = [1, 1]} : vector<32x512xf32> to vector<32x96xf32>
    %197 = arith.truncf %196 : vector<32x96xf32> to vector<32x96xbf16>
    %198 = vector.extract_strided_slice %193 {offsets = [0, 256], sizes = [32, 96], strides = [1, 1]} : vector<32x512xf32> to vector<32x96xf32>
    %199 = arith.truncf %198 : vector<32x96xf32> to vector<32x96xbf16>
    %cst_39 = arith.constant dense<0.000000e+00> : vector<32x96xf32>
    %200 = tpu.matmul %3, %195, %cst_39 {dimension_numbers = #tpu.dot_dimension_numbers<[1], [0], [0], [1], [0, 0, 1, 1], [], []>} : vector<32x32xbf16>, vector<32x96xbf16>, vector<32x96xf32> -> vector<32x96xf32>
    %cst_40 = arith.constant dense<0.000000e+00> : vector<32x96xf32>
    %201 = tpu.matmul %4, %197, %cst_40 {dimension_numbers = #tpu.dot_dimension_numbers<[1], [0], [0], [1], [0, 0, 1, 1], [], []>} : vector<32x32xbf16>, vector<32x96xbf16>, vector<32x96xf32> -> vector<32x96xf32>
    %202 = arith.addf %200, %201 : vector<32x96xf32>
    %cst_41 = arith.constant dense<0.000000e+00> : vector<32x96xf32>
    %203 = tpu.matmul %5, %199, %cst_41 {dimension_numbers = #tpu.dot_dimension_numbers<[1], [0], [0], [1], [0, 0, 1, 1], [], []>} : vector<32x32xbf16>, vector<32x96xbf16>, vector<32x96xf32> -> vector<32x96xf32>
    %204 = arith.addf %202, %203 : vector<32x96xf32>
    %205 = arith.addf %204, %7 : vector<32x96xf32>
    %206 = vector.extract_strided_slice %193 {offsets = [0, 384], sizes = [32, 96], strides = [1, 1]} : vector<32x512xf32> to vector<32x96xf32>
    %207 = arith.addf %206, %11 : vector<32x96xf32>
    %208 = vector.extract_strided_slice %205 {offsets = [0, 0], sizes = [32, 64], strides = [1, 1]} : vector<32x96xf32> to vector<32x64xf32>
    %209 = vector.extract_strided_slice %207 {offsets = [0, 0], sizes = [32, 64], strides = [1, 1]} : vector<32x96xf32> to vector<32x64xf32>
    %210 = arith.addf %208, %209 : vector<32x64xf32>
    %211 = arith.negf %210 : vector<32x64xf32>
    %212 = math.exp %211 : vector<32x64xf32>
    %cst_42 = arith.constant 1.000000e+00 : f32
    %213 = vector.broadcast %cst_42 : f32 to vector<32x64xf32>
    %214 = arith.addf %213, %212 : vector<32x64xf32>
    %215 = arith.divf %213, %214 : vector<32x64xf32>
    %216 = vector.extract_strided_slice %215 {offsets = [0, 0], sizes = [32, 32], strides = [1, 1]} : vector<32x64xf32> to vector<32x32xf32>
    %217 = vector.extract_strided_slice %215 {offsets = [0, 32], sizes = [32, 32], strides = [1, 1]} : vector<32x64xf32> to vector<32x32xf32>
    %218 = vector.extract_strided_slice %205 {offsets = [0, 64], sizes = [32, 32], strides = [1, 1]} : vector<32x96xf32> to vector<32x32xf32>
    %219 = vector.extract_strided_slice %207 {offsets = [0, 64], sizes = [32, 32], strides = [1, 1]} : vector<32x96xf32> to vector<32x32xf32>
    %220 = arith.mulf %216, %219 : vector<32x32xf32>
    %221 = arith.addf %218, %220 : vector<32x32xf32>
    %222 = math.tanh %221 : vector<32x32xf32>
    %cst_43 = arith.constant 1.000000e+00 : f32
    %223 = vector.broadcast %cst_43 : f32 to vector<32x32xf32>
    %224 = arith.subf %223, %217 : vector<32x32xf32>
    %225 = arith.mulf %224, %222 : vector<32x32xf32>
    %226 = arith.mulf %217, %191 : vector<32x32xf32>
    %227 = arith.addf %225, %226 : vector<32x32xf32>
    %228 = tpu.concatenate %227, %227, %1 in 1 : vector<32x32xf32>, vector<32x32xf32>, vector<32x16xf32> -> vector<32x80xf32>
    %229 = vector.extract_strided_slice %228 {offsets = [0, 0], sizes = [30, 80], strides = [1, 1]} : vector<32x80xf32> to vector<30x80xf32>
    %230 = vector.extract_strided_slice %228 {offsets = [1, 0], sizes = [30, 80], strides = [1, 1]} : vector<32x80xf32> to vector<30x80xf32>
    %231 = vector.extract_strided_slice %228 {offsets = [2, 0], sizes = [30, 80], strides = [1, 1]} : vector<32x80xf32> to vector<30x80xf32>
    %232 = tpu.concatenate %229, %230, %231 in 1 : vector<30x80xf32>, vector<30x80xf32>, vector<30x80xf32> -> vector<30x240xf32>
    %233 = arith.truncf %232 : vector<30x240xf32> to vector<30x240xbf16>
    %234 = vector.extract_strided_slice %8 {offsets = [1, 0], sizes = [1, 80], strides = [1, 1]} : vector<8x128xf32> to vector<1x80xf32>
    %235 = vector.shape_cast %234 : vector<1x80xf32> to vector<1x80xf32>
    %236 = vector.broadcast %235 : vector<1x80xf32> to vector<30x80xf32>
    %c0_44 = arith.constant 0 : index
    %c0_45 = arith.constant 0 : index
    %237 = vector.load %arg7[%c0_44, %c0_45] : memref<240x80xbf16, #tpu.memory_space<vmem>>, vector<240x80xbf16>
    %cst_46 = arith.constant dense<0.000000e+00> : vector<30x80xf32>
    %238 = tpu.matmul %233, %237, %cst_46 {dimension_numbers = #tpu.dot_dimension_numbers<[1], [0], [0], [1], [0, 0, 1, 1], [], []>} : vector<30x240xbf16>, vector<240x80xbf16>, vector<30x80xf32> -> vector<30x80xf32>
    %239 = arith.addf %238, %236 : vector<30x80xf32>
    %cst_47 = arith.constant 0.000000e+00 : f32
    %240 = vector.broadcast %cst_47 : f32 to vector<30x80xf32>
    %241 = arith.maximumf %239, %240 : vector<30x80xf32>
    %c0_48 = arith.constant 0 : index
    %c0_49 = arith.constant 0 : index
    %242 = vector.load %arg13[%c0_48, %c0_49] : memref<30x80xf32, #tpu.memory_space<vmem>>, vector<30x80xf32>
    tpu.vector_store %arg13[%c0_48, %c0_49], %241 {strides = array<i32>} : memref<30x80xf32, #tpu.memory_space<vmem>>, vector<30x80xf32>,
    %c0_50 = arith.constant 0 : index
    %c0_51 = arith.constant 0 : index
    %243 = tpu.strided_load %arg13[%c0_50, %c0_51] {strides = array<i32: 2, 1>} : memref<30x80xf32, #tpu.memory_space<vmem>>, vector<6x80xf32>
    %c1 = arith.constant 1 : index
    %c0_52 = arith.constant 0 : index
    %244 = tpu.strided_load %arg13[%c1, %c0_52] {strides = array<i32: 2, 1>} : memref<30x80xf32, #tpu.memory_space<vmem>>, vector<6x80xf32>
    %245 = arith.maximumf %243, %244 : vector<6x80xf32>
    %c2 = arith.constant 2 : index
    %c0_53 = arith.constant 0 : index
    %246 = tpu.strided_load %arg13[%c2, %c0_53] {strides = array<i32: 2, 1>} : memref<30x80xf32, #tpu.memory_space<vmem>>, vector<6x80xf32>
    %247 = arith.maximumf %245, %246 : vector<6x80xf32>
    %c16 = arith.constant 16 : index
    %c0_54 = arith.constant 0 : index
    %248 = tpu.strided_load %arg13[%c16, %c0_54] {strides = array<i32: 2, 1>} : memref<30x80xf32, #tpu.memory_space<vmem>>, vector<6x80xf32>
    %c17 = arith.constant 17 : index
    %c0_55 = arith.constant 0 : index
    %249 = tpu.strided_load %arg13[%c17, %c0_55] {strides = array<i32: 2, 1>} : memref<30x80xf32, #tpu.memory_space<vmem>>, vector<6x80xf32>
    %250 = arith.maximumf %248, %249 : vector<6x80xf32>
    %c18 = arith.constant 18 : index
    %c0_56 = arith.constant 0 : index
    %251 = tpu.strided_load %arg13[%c18, %c0_56] {strides = array<i32: 2, 1>} : memref<30x80xf32, #tpu.memory_space<vmem>>, vector<6x80xf32>
    %252 = arith.maximumf %250, %251 : vector<6x80xf32>
    %253 = tpu.concatenate %247, %252 in 0 : vector<6x80xf32>, vector<6x80xf32> -> vector<12x80xf32>
    %254 = vector.extract_strided_slice %8 {offsets = [2, 0], sizes = [1, 80], strides = [1, 1]} : vector<8x128xf32> to vector<1x80xf32>
    %255 = vector.shape_cast %254 : vector<1x80xf32> to vector<1x80xf32>
    %256 = vector.broadcast %255 : vector<1x80xf32> to vector<12x80xf32>
    %257 = arith.truncf %253 : vector<12x80xf32> to vector<12x80xbf16>
    %c0_57 = arith.constant 0 : index
    %c0_58 = arith.constant 0 : index
    %258 = vector.load %arg8[%c0_57, %c0_58] : memref<80x80xbf16, #tpu.memory_space<vmem>>, vector<80x80xbf16>
    %cst_59 = arith.constant dense<0.000000e+00> : vector<12x80xf32>
    %259 = tpu.matmul %257, %258, %cst_59 {dimension_numbers = #tpu.dot_dimension_numbers<[1], [0], [0], [1], [0, 0, 1, 1], [], []>} : vector<12x80xbf16>, vector<80x80xbf16>, vector<12x80xf32> -> vector<12x80xf32>
    %260 = arith.addf %259, %256 : vector<12x80xf32>
    %cst_60 = arith.constant 0.000000e+00 : f32
    %261 = vector.broadcast %cst_60 : f32 to vector<12x80xf32>
    %262 = arith.maximumf %260, %261 : vector<12x80xf32>
    %c0_61 = arith.constant 0 : index
    %c0_62 = arith.constant 0 : index
    %263 = vector.load %arg14[%c0_61, %c0_62] : memref<12x80xf32, #tpu.memory_space<vmem>>, vector<12x80xf32>
    tpu.vector_store %arg14[%c0_61, %c0_62], %262 {strides = array<i32>} : memref<12x80xf32, #tpu.memory_space<vmem>>, vector<12x80xf32>,
    %c0_63 = arith.constant 0 : index
    %c0_64 = arith.constant 0 : index
    %264 = tpu.strided_load %arg14[%c0_63, %c0_64] {strides = array<i32: 2, 1>} : memref<12x80xf32, #tpu.memory_space<vmem>>, vector<3x80xf32>
    %c1_65 = arith.constant 1 : index
    %c0_66 = arith.constant 0 : index
    %265 = tpu.strided_load %arg14[%c1_65, %c0_66] {strides = array<i32: 2, 1>} : memref<12x80xf32, #tpu.memory_space<vmem>>, vector<3x80xf32>
    %266 = arith.maximumf %264, %265 : vector<3x80xf32>
    %c6 = arith.constant 6 : index
    %c0_67 = arith.constant 0 : index
    %267 = tpu.strided_load %arg14[%c6, %c0_67] {strides = array<i32: 2, 1>} : memref<12x80xf32, #tpu.memory_space<vmem>>, vector<3x80xf32>
    %c7 = arith.constant 7 : index
    %c0_68 = arith.constant 0 : index
    %268 = tpu.strided_load %arg14[%c7, %c0_68] {strides = array<i32: 2, 1>} : memref<12x80xf32, #tpu.memory_space<vmem>>, vector<3x80xf32>
    %269 = arith.maximumf %267, %268 : vector<3x80xf32>
    %270 = tpu.concatenate %266, %269 in 0 : vector<3x80xf32>, vector<3x80xf32> -> vector<6x80xf32>
    %271 = vector.extract_strided_slice %8 {offsets = [3, 0], sizes = [1, 2], strides = [1, 1]} : vector<8x128xf32> to vector<1x2xf32>
    %c0_69 = arith.constant 0 : index
    %c0_70 = arith.constant 0 : index
    %272 = vector.load %arg9[%c0_69, %c0_70] : memref<80x2xf32, #tpu.memory_space<vmem>>, vector<80x2xf32>
    %cst_71 = arith.constant dense<0.000000e+00> : vector<6x2xf32>
    %273 = tpu.matmul %270, %272, %cst_71 {dimension_numbers = #tpu.dot_dimension_numbers<[1], [0], [0], [1], [0, 0, 1, 1], [], []>} : vector<6x80xf32>, vector<80x2xf32>, vector<6x2xf32> -> vector<6x2xf32>
    %274 = vector.broadcast %271 : vector<1x2xf32> to vector<6x2xf32>
    %275 = arith.addf %273, %274 : vector<6x2xf32>
    %276 = vector.extract_strided_slice %275 {offsets = [0, 0], sizes = [6, 1], strides = [1, 1]} : vector<6x2xf32> to vector<6x1xf32>
    %277 = vector.extract_strided_slice %275 {offsets = [0, 1], sizes = [6, 1], strides = [1, 1]} : vector<6x2xf32> to vector<6x1xf32>
    %278 = arith.mulf %276, %277 : vector<6x1xf32>
    %279 = vector.extract_strided_slice %278 {offsets = [0, 0], sizes = [3, 1], strides = [1, 1]} : vector<6x1xf32> to vector<3x1xf32>
    %cst_72 = arith.constant dense<0.000000e+00> : vector<1xf32>
    %280 = vector.multi_reduction <add>, %279, %cst_72 [0] : vector<3x1xf32> to vector<1xf32>
    %281 = vector.shape_cast %280 : vector<1xf32> to vector<1x1xf32>
    %282 = vector.extract_strided_slice %278 {offsets = [3, 0], sizes = [3, 1], strides = [1, 1]} : vector<6x1xf32> to vector<3x1xf32>
    %cst_73 = arith.constant dense<0.000000e+00> : vector<1xf32>
    %283 = vector.multi_reduction <add>, %282, %cst_73 [0] : vector<3x1xf32> to vector<1xf32>
    %284 = vector.shape_cast %283 : vector<1xf32> to vector<1x1xf32>
    %285 = tpu.concatenate %281, %284 in 0 : vector<1x1xf32>, vector<1x1xf32> -> vector<2x1xf32>
    %cst_74 = arith.constant 0.333333343 : f32
    %286 = vector.broadcast %cst_74 : f32 to vector<2x1xf32>
    %287 = arith.mulf %285, %286 : vector<2x1xf32>
    %288 = vector.extract_strided_slice %270 {offsets = [0, 0], sizes = [3, 80], strides = [1, 1]} : vector<6x80xf32> to vector<3x80xf32>
    %cst_75 = arith.constant dense<0.000000e+00> : vector<80xf32>
    %289 = vector.multi_reduction <add>, %288, %cst_75 [0] : vector<3x80xf32> to vector<80xf32>
    %290 = vector.shape_cast %289 : vector<80xf32> to vector<1x80xf32>
    %291 = vector.extract_strided_slice %270 {offsets = [3, 0], sizes = [3, 80], strides = [1, 1]} : vector<6x80xf32> to vector<3x80xf32>
    %cst_76 = arith.constant dense<0.000000e+00> : vector<80xf32>
    %292 = vector.multi_reduction <add>, %291, %cst_76 [0] : vector<3x80xf32> to vector<80xf32>
    %293 = vector.shape_cast %292 : vector<80xf32> to vector<1x80xf32>
    %294 = tpu.concatenate %290, %293 in 0 : vector<1x80xf32>, vector<1x80xf32> -> vector<2x80xf32>
    %295 = arith.negf %287 : vector<2x1xf32>
    %296 = math.exp %295 : vector<2x1xf32>
    %cst_77 = arith.constant 1.000000e+00 : f32
    %297 = vector.broadcast %cst_77 : f32 to vector<2x1xf32>
    %298 = arith.addf %297, %296 : vector<2x1xf32>
    %299 = arith.divf %297, %298 : vector<2x1xf32>
    %c0_78 = arith.constant 0 : index
    %c0_79 = arith.constant 0 : index
    %300 = vector.load %arg4[%c0_78, %c0_79] : memref<2x32xf32, #tpu.memory_space<vmem>>, vector<2x32xf32>
    %301 = tpu.concatenate %300, %294 in 1 : vector<2x32xf32>, vector<2x80xf32> -> vector<2x112xf32>
    %302 = vector.extract_strided_slice %8 {offsets = [4, 0], sizes = [1, 32], strides = [1, 1]} : vector<8x128xf32> to vector<1x32xf32>
    %303 = vector.extract_strided_slice %8 {offsets = [5, 0], sizes = [1, 1], strides = [1, 1]} : vector<8x128xf32> to vector<1x1xf32>
    %c0_80 = arith.constant 0 : index
    %c0_81 = arith.constant 0 : index
    %304 = vector.load %arg10[%c0_80, %c0_81] : memref<112x32xf32, #tpu.memory_space<vmem>>, vector<112x32xf32>
    %cst_82 = arith.constant dense<0.000000e+00> : vector<2x32xf32>
    %305 = tpu.matmul %301, %304, %cst_82 {dimension_numbers = #tpu.dot_dimension_numbers<[1], [0], [0], [1], [0, 0, 1, 1], [], []>} : vector<2x112xf32>, vector<112x32xf32>, vector<2x32xf32> -> vector<2x32xf32>
    %306 = vector.broadcast %302 : vector<1x32xf32> to vector<2x32xf32>
    %307 = arith.addf %305, %306 : vector<2x32xf32>
    %cst_83 = arith.constant 0.000000e+00 : f32
    %308 = vector.broadcast %cst_83 : f32 to vector<2x32xf32>
    %309 = arith.maximumf %307, %308 : vector<2x32xf32>
    %c0_84 = arith.constant 0 : index
    %c0_85 = arith.constant 0 : index
    %310 = vector.load %arg11[%c0_84, %c0_85] : memref<32x1xf32, #tpu.memory_space<vmem>>, vector<32x1xf32>
    %cst_86 = arith.constant dense<0.000000e+00> : vector<2x1xf32>
    %311 = tpu.matmul %309, %310, %cst_86 {dimension_numbers = #tpu.dot_dimension_numbers<[1], [0], [0], [1], [0, 0, 1, 1], [], []>} : vector<2x32xf32>, vector<32x1xf32>, vector<2x1xf32> -> vector<2x1xf32>
    %312 = vector.broadcast %303 : vector<1x1xf32> to vector<2x1xf32>
    %313 = arith.addf %311, %312 : vector<2x1xf32>
    %314 = arith.negf %313 : vector<2x1xf32>
    %315 = math.exp %314 : vector<2x1xf32>
    %cst_87 = arith.constant 1.000000e+00 : f32
    %316 = vector.broadcast %cst_87 : f32 to vector<2x1xf32>
    %317 = arith.addf %316, %315 : vector<2x1xf32>
    %318 = arith.divf %316, %317 : vector<2x1xf32>
    %cst_88 = arith.constant 0.000000e+00 : f32
    %319 = vector.broadcast %cst_88 : f32 to vector<2x125xf32>
    %320 = tpu.concatenate %318, %299, %287, %319 in 1 : vector<2x1xf32>, vector<2x1xf32>, vector<2x1xf32>, vector<2x125xf32> -> vector<2x128xf32>
    %c0_89 = arith.constant 0 : index
    %c0_90 = arith.constant 0 : index
    %321 = vector.load %arg12[%c0_89, %c0_90] : memref<2x128xf32, #tpu.memory_space<vmem>>, vector<2x128xf32>
    tpu.vector_store %arg12[%c0_89, %c0_90], %320 {strides = array<i32>} : memref<2x128xf32, #tpu.memory_space<vmem>>, vector<2x128xf32>,
    return
  }
  func.func @transform_0(%arg0: i32) -> (i32, i32) {
    %c0_i32 = arith.constant 0 : i32
    %c0_i32_0 = arith.constant 0 : i32
    %c0_i32_1 = arith.constant 0 : i32
    return %c0_i32, %c0_i32_0 : i32, i32
  }
  func.func @transform_1(%arg0: i32) -> (i32, i32) {
    %c0_i32 = arith.constant 0 : i32
    %c0_i32_0 = arith.constant 0 : i32
    %c0_i32_1 = arith.constant 0 : i32
    return %c0_i32, %c0_i32_0 : i32, i32
  }
  func.func @transform_2(%arg0: i32) -> (i32, i32) {
    %c0_i32 = arith.constant 0 : i32
    %c0_i32_0 = arith.constant 0 : i32
    %c0_i32_1 = arith.constant 0 : i32
    return %c0_i32, %c0_i32_0 : i32, i32
  }
  func.func @transform_3(%arg0: i32) -> (i32, i32) {
    %c0_i32 = arith.constant 0 : i32
    %c0_i32_0 = arith.constant 0 : i32
    %c0_i32_1 = arith.constant 0 : i32
    return %c0_i32, %c0_i32_0 : i32, i32
  }
  func.func @transform_4(%arg0: i32) -> (i32, i32) {
    %c0_i32 = arith.constant 0 : i32
    %c0_i32_0 = arith.constant 0 : i32
    %c0_i32_1 = arith.constant 0 : i32
    return %c0_i32, %c0_i32_0 : i32, i32
  }
  func.func @transform_5(%arg0: i32) -> (i32, i32) {
    %c0_i32 = arith.constant 0 : i32
    %c0_i32_0 = arith.constant 0 : i32
    %c0_i32_1 = arith.constant 0 : i32
    return %c0_i32, %c0_i32_0 : i32, i32
  }
  func.func @transform_6(%arg0: i32) -> (i32, i32) {
    %c0_i32 = arith.constant 0 : i32
    %c0_i32_0 = arith.constant 0 : i32
    %c0_i32_1 = arith.constant 0 : i32
    return %c0_i32, %c0_i32_0 : i32, i32
  }
  func.func @transform_7(%arg0: i32) -> (i32, i32) {
    %c0_i32 = arith.constant 0 : i32
    %c0_i32_0 = arith.constant 0 : i32
    %c0_i32_1 = arith.constant 0 : i32
    return %c0_i32, %c0_i32_0 : i32, i32
  }
  func.func @transform_8(%arg0: i32) -> (i32, i32) {
    %c0_i32 = arith.constant 0 : i32
    %c0_i32_0 = arith.constant 0 : i32
    %c0_i32_1 = arith.constant 0 : i32
    return %c0_i32, %c0_i32_0 : i32, i32
  }
  func.func @transform_9(%arg0: i32) -> (i32, i32) {
    %c0_i32 = arith.constant 0 : i32
    %c0_i32_0 = arith.constant 0 : i32
    %c0_i32_1 = arith.constant 0 : i32
    return %c0_i32, %c0_i32_0 : i32, i32
  }
  func.func @transform_10(%arg0: i32) -> (i32, i32) {
    %c0_i32 = arith.constant 0 : i32
    %c0_i32_0 = arith.constant 0 : i32
    %c0_i32_1 = arith.constant 0 : i32
    return %c0_i32, %c0_i32_0 : i32, i32
  }
  func.func @transform_11(%arg0: i32) -> (i32, i32) {
    %c0_i32 = arith.constant 0 : i32
    %c0_i32_0 = arith.constant 0 : i32
    %c0_i32_1 = arith.constant 0 : i32
    return %c0_i32, %c0_i32_0 : i32, i32
  }
}

</mosaic_0001>

<llo_original>
// kernel: mul.22
$region0: #{mul.22}
  %s0 = inlined_call_operand.vmem [shape: f32[2,16], index: 0, kind: input, shape index: {}]
  %s1 = inlined_call_operand.vmem [shape: f32[32], index: 1, kind: output, shape index: {}]
  $region1: #{mul.22} parent=0
    #allocation0 [shape = 'u8[4096]{0}', space=vmem, size = 0x1000, scoped, tag = 'scoped mem for output reshape']
    #allocation1 [shape = 'u8[4096]{0}', space=vmem, size = 0x1000, scoped, tag = 'scoped mem for input reshape']
    %s3 = sshllo.u32 0, 2
    %v4 = vld [vmem:[%s0] sm:%s3]
    %5 = vst [vmem:[#allocation1] sm:%s3] %v4
    %v6 = vld [vmem:[#allocation1] sm:$0x1]
    %vm7 = vcmask 130048
    %8 = vst.msk [vmem:[#allocation0] sm:$0x1] %vm7, %v6
    %s9 = scalar_lea.vmem [#allocation1], 1
    %v10 = vld [vmem:[%s9] sm:$0x1]
    %11 = vrot.lane.b32.xlu0 %v10, 16
    %v12 = vpop.permute.xlu0 %11
    %vm13 = vcmask 261248
    %14 = vst.msk [vmem:[#allocation0] sm:$0x1] %vm13, %v12
    %s16 = sshllo.u32 0, 1
    %v18 = vld [vmem:[#allocation0] sm:%s16]
    %s19 = sshllo.u32 0, 1
    %20 = vst [vmem:[%s1] sm:%s19] %v18

// kernel: combined_forward.1
$region0: #{combined_forward.1}
  #allocation0 [shape = 'u32[]', space=smem, size = 0x4, offset = 0x4, fixed_abs, tag = 'smem constant byte address 0x4 - core index']
  #allocation1 [shape = 'u32[144,128]{1,0:T(1,128)}', space=vmem, size = 0x12000, scoped, tag = 'internal scratch']
  #allocation2 [shape = 'f32[30,80]{1,0:T(8,128)}', space=vmem, size = 0x4000, scoped, tag = 'scratch operand']
  #allocation3 [shape = 'f32[12,80]{1,0:T(8,128)}', space=vmem, size = 0x2000, scoped, tag = 'scratch operand']
  %s0 = inlined_call_operand.vmem [shape: f32[32,32], index: 0, kind: input, shape index: {}]
  %s1 = inlined_call_operand.vmem [shape: bf16[32,384], index: 1, kind: input, shape index: {}]
  %s2 = inlined_call_operand.vmem [shape: f32[32,96], index: 2, kind: input, shape index: {}]
  %s3 = inlined_call_operand.vmem [shape: f32[2,32], index: 3, kind: input, shape index: {}]
  %s4 = inlined_call_operand.vmem [shape: bf16[32,512], index: 4, kind: input, shape index: {}]
  %s5 = inlined_call_operand.vmem [shape: f32[8,128], index: 5, kind: input, shape index: {}]
  %s6 = inlined_call_operand.vmem [shape: bf16[240,80], index: 6, kind: input, shape index: {}]
  %s7 = inlined_call_operand.vmem [shape: bf16[80,80], index: 7, kind: input, shape index: {}]
  %s8 = inlined_call_operand.vmem [shape: f32[80,2], index: 8, kind: input, shape index: {}]
  %s9 = inlined_call_operand.vmem [shape: f32[112,32], index: 9, kind: input, shape index: {}]
  %s10 = inlined_call_operand.vmem [shape: f32[32,1], index: 10, kind: input, shape index: {}]
  %s11 = inlined_call_operand.vmem [shape: f32[2,128], index: 11, kind: output, shape index: {}]
  %s12 = sld [smem:[#allocation0]]
  $region54: #{combined_forward.1} parent=0
    _
  %s14 = ssub.s32 1, %s12
  %s15 = scalar_select 0, %s14, %s12
  // Predicated region
  $region2: #{combined_forward.1} parent=0 // pred_check
    _
  $region3: #{combined_forward.1} parent=0 // pred_check_branch
    %17 = sbr.rel (0) target = $region5
  $region4: #{combined_forward.1} parent=0 // pred_region
    _
  $region5: #{combined_forward.1} parent=0 // pred_fallthru
    _
  // Predicated region
  $region6: #{combined_forward.1} parent=0 // pred_check
    _
  $region7: #{combined_forward.1} parent=0 // pred_check_branch
    %19 = sbr.rel (0) target = $region9
  $region8: #{combined_forward.1} parent=0 // pred_region
    _
  $region9: #{combined_forward.1} parent=0 // pred_fallthru
    _
  // Predicated region
  $region10: #{combined_forward.1} parent=0 // pred_check
    _
  $region11: #{combined_forward.1} parent=0 // pred_check_branch
    %21 = sbr.rel (0) target = $region13
  $region12: #{combined_forward.1} parent=0 // pred_region
    _
  $region13: #{combined_forward.1} parent=0 // pred_fallthru
    _
  // Predicated region
  $region14: #{combined_forward.1} parent=0 // pred_check
    _
  $region15: #{combined_forward.1} parent=0 // pred_check_branch
    %23 = sbr.rel (0) target = $region17
  $region16: #{combined_forward.1} parent=0 // pred_region
    _
  $region17: #{combined_forward.1} parent=0 // pred_fallthru
    _
  // Predicated region
  $region18: #{combined_forward.1} parent=0 // pred_check
    _
  $region19: #{combined_forward.1} parent=0 // pred_check_branch
    %25 = sbr.rel (0) target = $region21
  $region20: #{combined_forward.1} parent=0 // pred_region
    _
  $region21: #{combined_forward.1} parent=0 // pred_fallthru
    _
  // Predicated region
  $region22: #{combined_forward.1} parent=0 // pred_check
    _
  $region23: #{combined_forward.1} parent=0 // pred_check_branch
    %27 = sbr.rel (0) target = $region25
  $region24: #{combined_forward.1} parent=0 // pred_region
    _
  $region25: #{combined_forward.1} parent=0 // pred_fallthru
    _
  // Predicated region
  $region26: #{combined_forward.1} parent=0 // pred_check
    _
  $region27: #{combined_forward.1} parent=0 // pred_check_branch
    %29 = sbr.rel (0) target = $region29
  $region28: #{combined_forward.1} parent=0 // pred_region
    _
  $region29: #{combined_forward.1} parent=0 // pred_fallthru
    _
  // Predicated region
  $region30: #{combined_forward.1} parent=0 // pred_check
    _
  $region31: #{combined_forward.1} parent=0 // pred_check_branch
    %31 = sbr.rel (0) target = $region33
  $region32: #{combined_forward.1} parent=0 // pred_region
    _
  $region33: #{combined_forward.1} parent=0 // pred_fallthru
    _
  // Predicated region
  $region34: #{combined_forward.1} parent=0 // pred_check
    _
  $region35: #{combined_forward.1} parent=0 // pred_check_branch
    %33 = sbr.rel (0) target = $region37
  $region36: #{combined_forward.1} parent=0 // pred_region
    _
  $region37: #{combined_forward.1} parent=0 // pred_fallthru
    _
  // Predicated region
  $region38: #{combined_forward.1} parent=0 // pred_check
    _
  $region39: #{combined_forward.1} parent=0 // pred_check_branch
    %35 = sbr.rel (0) target = $region41
  $region40: #{combined_forward.1} parent=0 // pred_region
    _
  $region41: #{combined_forward.1} parent=0 // pred_fallthru
    _
  // Predicated region
  $region42: #{combined_forward.1} parent=0 // pred_check
    _
  $region43: #{combined_forward.1} parent=0 // pred_check_branch
    %37 = sbr.rel (0) target = $region45
  $region44: #{combined_forward.1} parent=0 // pred_region
    _
  $region45: #{combined_forward.1} parent=0 // pred_fallthru
    _
  %v39 = vld [vmem:[%s0] sm:$0xff]
  %v40 = vld [vmem:[%s0 + $0x8] sm:$0xff]
  %v41 = vld [vmem:[%s0 + $0x10] sm:$0xff]
  %v42 = vld [vmem:[%s0 + $0x18] sm:$0xff]
  %v43 = vld [vmem:[%s1] sm:$0xff]
  %v44 = vld [vmem:[%s1 + $0x8] sm:$0xf]
  %v45 = vld [vmem:[%s1 + $0xc] sm:$0xff]
  %v46 = vld [vmem:[%s1 + $0x14] sm:$0xf]
  %v47 = vld [vmem:[%s1 + $0x18] sm:$0xff]
  %v48 = vld [vmem:[%s1 + $0x20] sm:$0xf]
  %v49 = vld [vmem:[%s1 + $0x24] sm:$0xff]
  %v50 = vld [vmem:[%s1 + $0x2c] sm:$0xf]
  %v51 = vld [vmem:[%s4] sm:$0xff]
  %v52 = vld [vmem:[%s4 + $0x8] sm:$0xff]
  %v53 = vld [vmem:[%s4 + $0x10] sm:$0xff]
  %v54 = vld [vmem:[%s4 + $0x18] sm:$0xff]
  %v55 = vld [vmem:[%s4 + $0x20] sm:$0xff]
  %v56 = vld [vmem:[%s4 + $0x28] sm:$0xff]
  %v57 = vld [vmem:[%s4 + $0x30] sm:$0xff]
  %v58 = vld [vmem:[%s4 + $0x38] sm:$0xff]
  %v59 = vld [vmem:[%s2] sm:$0xff]
  %v60 = vld [vmem:[%s2 + $0x8] sm:$0xff]
  %v61 = vld [vmem:[%s2 + $0x10] sm:$0xff]
  %v62 = vld [vmem:[%s2 + $0x18] sm:$0xff]
  %v63 = vld [vmem:[%s5] sm:$0xff]
  %v64 = vlaneseq
  %v65 = vshrl.u32 %v64, 7
  %v66 = vsub.s32 0, %v65
  %v67 = vrot.slane %v63, %v66
  %v68 = vpack.c.bf16 %v40, %v39
  %v69 = vpack.c.bf16 %v42, %v41
  %v78 = vunpack.c.l.b16 %v51
  %v79 = vunpack.c.h.b16 %v51
  %v80 = vunpack.c.l.b16 %v52
  %v81 = vunpack.c.h.b16 %v52
  %v82 = vunpack.c.l.b16 %v53
  %v83 = vunpack.c.h.b16 %v53
  %v84 = vunpack.c.l.b16 %v54
  %v85 = vunpack.c.h.b16 %v54
  %v86 = vunpack.c.l.b16 %v55
  %v87 = vunpack.c.h.b16 %v55
  %v88 = vunpack.c.l.b16 %v56
  %v89 = vunpack.c.h.b16 %v56
  %v90 = vunpack.c.l.b16 %v57
  %v91 = vunpack.c.h.b16 %v57
  %v92 = vunpack.c.l.b16 %v58
  %v93 = vunpack.c.h.b16 %v58
  %v94 = vpack.c.b16 %v82, %v78
  %v95 = vpack.c.b16 %v83, %v79
  %v96 = vpack.c.b16 %v84, %v80
  %v97 = vpack.c.b16 %v85, %v81
  %v98 = vpack.c.b16 %v90, %v86
  %v99 = vpack.c.b16 %v91, %v87
  %v100 = vpack.c.b16 %v92, %v88
  %v101 = vpack.c.b16 %v93, %v89
  %vm110 = vcmask 261120
  %v112 = vsel %vm110, %v68, 0
  %v115 = vsel %vm110, %v69, 0
  %117 = vmatprep.subr.bf16.mxu0 %v95
  %118 = vmatpush1.bf16.msra.mxu0 %v94
  %119 = vmatprep.subr.bf16.mxu0 %v99
  %120 = vmatpush1.bf16.msra.mxu0 %v98
  %121 = vmatprep.subr.bf16.mxu0 0
  %122 = vmatpush1.bf16.msra.mxu0 0
  %123 = vmatprep.subr.bf16.mxu0 0
  %124 = vmatpush1.bf16.msra.mxu0 0
  %125 = vmatprep.subr.bf16.mxu0 0
  %126 = vmatpush1.bf16.msra.mxu0 0
  %127 = vmatprep.subr.bf16.mxu0 0
  %128 = vmatpush1.bf16.msra.mxu0 0
  %129 = vmatprep.subr.bf16.mxu0 0
  %130 = vmatpush1.bf16.msra.mxu0 0
  %131 = vmatprep.subr.bf16.mxu0 0
  %132 = vmatpush1.bf16.msra.mxu0 0
  %133 = vmatprep.subr.bf16.mxu0 0
  %134 = vmatpush1.bf16.msra.mxu0 0
  %135 = vmatprep.subr.bf16.mxu0 0
  %136 = vmatpush1.bf16.msra.mxu0 0
  %137 = vmatprep.subr.bf16.mxu0 0
  %138 = vmatpush1.bf16.msra.mxu0 0
  %139 = vmatprep.subr.bf16.mxu0 0
  %140 = vmatpush1.bf16.msra.mxu0 0
  %141 = vmatprep.subr.bf16.mxu0 0
  %142 = vmatpush1.bf16.msra.mxu0 0
  %143 = vmatprep.subr.bf16.mxu0 0
  %144 = vmatpush1.bf16.msra.mxu0 0
  %145 = vmatprep.subr.bf16.mxu0 0
  %146 = vmatpush1.bf16.msra.mxu0 0
  %147 = vmatprep.subr.bf16.mxu0 0
  %148 = vmatpush1.bf16.msra.mxu0 0
  %149 = vmatprep.mubr.bf16.mxu0 0
  %150 = vmatmul.mubr.bf16.gmra.mrb[0].mxu0 %v112
  %v151 = vpop.f32.mrb[0].mxu0
  %v152 = vadd.f32 0.0, %v151
  %v153 = vpop.f32.mrb[0].mxu0
  %v154 = vadd.f32 0.0, %v153
  %v155 = vpop.f32.mrb[0].mxu0
  %v156 = vadd.f32 0.0, %v155
  %v157 = vpop.f32.mrb[0].mxu0
  %v158 = vadd.f32 0.0, %v157
  %159 = vmatprep.mubr.bf16.mxu0 0
  %160 = vmatmul.mubr.bf16.gmra.mrb[0].mxu0 %v115
  %v161 = vpop.f32.mrb[0].mxu0
  %v162 = vadd.f32 0.0, %v161
  %v163 = vpop.f32.mrb[0].mxu0
  %v164 = vadd.f32 0.0, %v163
  %v165 = vpop.f32.mrb[0].mxu0
  %v166 = vadd.f32 0.0, %v165
  %v167 = vpop.f32.mrb[0].mxu0
  %v168 = vadd.f32 0.0, %v167
  %169 = vdwg.mxu0
  %170 = vmatprep.subr.bf16.mxu0 %v97
  %171 = vmatpush1.bf16.msra.mxu0 %v96
  %172 = vmatprep.subr.bf16.mxu0 %v101
  %173 = vmatpush1.bf16.msra.mxu0 %v100
  %174 = vmatprep.subr.bf16.mxu0 0
  %175 = vmatpush1.bf16.msra.mxu0 0
  %176 = vmatprep.subr.bf16.mxu0 0
  %177 = vmatpush1.bf16.msra.mxu0 0
  %178 = vmatprep.subr.bf16.mxu0 0
  %179 = vmatpush1.bf16.msra.mxu0 0
  %180 = vmatprep.subr.bf16.mxu0 0
  %181 = vmatpush1.bf16.msra.mxu0 0
  %182 = vmatprep.subr.bf16.mxu0 0
  %183 = vmatpush1.bf16.msra.mxu0 0
  %184 = vmatprep.subr.bf16.mxu0 0
  %185 = vmatpush1.bf16.msra.mxu0 0
  %186 = vmatprep.subr.bf16.mxu0 0
  %187 = vmatpush1.bf16.msra.mxu0 0
  %188 = vmatprep.subr.bf16.mxu0 0
  %189 = vmatpush1.bf16.msra.mxu0 0
  %190 = vmatprep.subr.bf16.mxu0 0
  %191 = vmatpush1.bf16.msra.mxu0 0
  %192 = vmatprep.subr.bf16.mxu0 0
  %193 = vmatpush1.bf16.msra.mxu0 0
  %194 = vmatprep.subr.bf16.mxu0 0
  %195 = vmatpush1.bf16.msra.mxu0 0
  %196 = vmatprep.subr.bf16.mxu0 0
  %197 = vmatpush1.bf16.msra.mxu0 0
  %198 = vmatprep.subr.bf16.mxu0 0
  %199 = vmatpush1.bf16.msra.mxu0 0
  %200 = vmatprep.subr.bf16.mxu0 0
  %201 = vmatpush1.bf16.msra.mxu0 0
  %202 = vmatprep.mubr.bf16.mxu0 0
  %203 = vmatmul.mubr.bf16.gmra.mrb[0].mxu0 %v112
  %v204 = vpop.f32.mrb[0].mxu0
  %v205 = vadd.f32 0.0, %v204
  %v206 = vpop.f32.mrb[0].mxu0
  %v207 = vadd.f32 0.0, %v206
  %v208 = vpop.f32.mrb[0].mxu0
  %v209 = vadd.f32 0.0, %v208
  %v210 = vpop.f32.mrb[0].mxu0
  %v211 = vadd.f32 0.0, %v210
  %212 = vmatprep.mubr.bf16.mxu0 0
  %213 = vmatmul.mubr.bf16.gmra.mrb[0].mxu0 %v115
  %v214 = vpop.f32.mrb[0].mxu0
  %v215 = vadd.f32 0.0, %v214
  %v216 = vpop.f32.mrb[0].mxu0
  %v217 = vadd.f32 0.0, %v216
  %v218 = vpop.f32.mrb[0].mxu0
  %v219 = vadd.f32 0.0, %v218
  %v220 = vpop.f32.mrb[0].mxu0
  %v221 = vadd.f32 0.0, %v220
  %222 = vdwg.mxu0
  %v223 = vpack.c.bf16 %v156, %v152
  %v224 = vpack.c.bf16 %v166, %v162
  %v225 = vpack.c.bf16 %v158, %v154
  %v226 = vpack.c.bf16 %v168, %v164
  %v227 = vpack.c.bf16 %v209, %v205
  %v228 = vpack.c.bf16 %v219, %v215
  %v233 = vunpack.c.h.b16 %v43
  %v234 = vunpack.c.h.b16 %v45
  %v235 = vunpack.c.h.b16 %v47
  %v236 = vunpack.c.h.b16 %v49
  %v237 = vpack.c.b16 %v234, %v233
  %v238 = vpack.c.b16 %v236, %v235
  %v240 = vsel %vm110, %v237, 0
  %v243 = vsel %vm110, %v238, 0
  %245 = vmatprep.subr.bf16.mxu0 0
  %246 = vmatpush1.bf16.msra.mxu0 %v225
  %247 = vmatprep.subr.bf16.mxu0 0
  %248 = vmatpush1.bf16.msra.mxu0 %v226
  %249 = vmatprep.subr.bf16.mxu0 0
  %250 = vmatpush1.bf16.msra.mxu0 0
  %251 = vmatprep.subr.bf16.mxu0 0
  %252 = vmatpush1.bf16.msra.mxu0 0
  %253 = vmatprep.subr.bf16.mxu0 0
  %254 = vmatpush1.bf16.msra.mxu0 0
  %255 = vmatprep.subr.bf16.mxu0 0
  %256 = vmatpush1.bf16.msra.mxu0 0
  %257 = vmatprep.subr.bf16.mxu0 0
  %258 = vmatpush1.bf16.msra.mxu0 0
  %259 = vmatprep.subr.bf16.mxu0 0
  %260 = vmatpush1.bf16.msra.mxu0 0
  %261 = vmatprep.subr.bf16.mxu0 0
  %262 = vmatpush1.bf16.msra.mxu0 0
  %263 = vmatprep.subr.bf16.mxu0 0
  %264 = vmatpush1.bf16.msra.mxu0 0
  %265 = vmatprep.subr.bf16.mxu0 0
  %266 = vmatpush1.bf16.msra.mxu0 0
  %267 = vmatprep.subr.bf16.mxu0 0
  %268 = vmatpush1.bf16.msra.mxu0 0
  %269 = vmatprep.subr.bf16.mxu0 0
  %270 = vmatpush1.bf16.msra.mxu0 0
  %271 = vmatprep.subr.bf16.mxu0 0
  %272 = vmatpush1.bf16.msra.mxu0 0
  %273 = vmatprep.subr.bf16.mxu0 0
  %274 = vmatpush1.bf16.msra.mxu0 0
  %275 = vmatprep.subr.bf16.mxu0 0
  %276 = vmatpush1.bf16.msra.mxu0 0
  %277 = vmatprep.mubr.bf16.mxu0 0
  %278 = vmatmul.mubr.bf16.gmra.mrb[0].mxu0 %v240
  %v279 = vpop.f32.mrb[0].mxu0
  %v280 = vadd.f32 0.0, %v279
  %v281 = vpop.f32.mrb[0].mxu0
  %v282 = vpop.f32.mrb[0].mxu0
  %v283 = vadd.f32 0.0, %v282
  %v284 = vpop.f32.mrb[0].mxu0
  %285 = vmatprep.mubr.bf16.mxu0 0
  %286 = vmatmul.mubr.bf16.gmra.mrb[0].mxu0 %v243
  %v287 = vpop.f32.mrb[0].mxu0
  %v288 = vadd.f32 0.0, %v287
  %v289 = vpop.f32.mrb[0].mxu0
  %v290 = vpop.f32.mrb[0].mxu0
  %v291 = vadd.f32 0.0, %v290
  %v292 = vpop.f32.mrb[0].mxu0
  %293 = vdwg.mxu0
  %v294 = vunpack.c.l.b16 %v43
  %v295 = vunpack.c.l.b16 %v45
  %v296 = vunpack.c.l.b16 %v47
  %v297 = vunpack.c.l.b16 %v49
  %v298 = vpack.c.b16 %v295, %v294
  %v299 = vpack.c.b16 %v297, %v296
  %v301 = vsel %vm110, %v298, 0
  %v304 = vsel %vm110, %v299, 0
  %306 = vmatprep.subr.bf16.mxu0 0
  %307 = vmatpush1.bf16.msra.mxu0 %v223
  %308 = vmatprep.subr.bf16.mxu0 0
  %309 = vmatpush1.bf16.msra.mxu0 %v224
  %310 = vmatprep.subr.bf16.mxu0 0
  %311 = vmatpush1.bf16.msra.mxu0 0
  %312 = vmatprep.subr.bf16.mxu0 0
  %313 = vmatpush1.bf16.msra.mxu0 0
  %314 = vmatprep.subr.bf16.mxu0 0
  %315 = vmatpush1.bf16.msra.mxu0 0
  %316 = vmatprep.subr.bf16.mxu0 0
  %317 = vmatpush1.bf16.msra.mxu0 0
  %318 = vmatprep.subr.bf16.mxu0 0
  %319 = vmatpush1.bf16.msra.mxu0 0
  %320 = vmatprep.subr.bf16.mxu0 0
  %321 = vmatpush1.bf16.msra.mxu0 0
  %322 = vmatprep.subr.bf16.mxu0 0
  %323 = vmatpush1.bf16.msra.mxu0 0
  %324 = vmatprep.subr.bf16.mxu0 0
  %325 = vmatpush1.bf16.msra.mxu0 0
  %326 = vmatprep.subr.bf16.mxu0 0
  %327 = vmatpush1.bf16.msra.mxu0 0
  %328 = vmatprep.subr.bf16.mxu0 0
  %329 = vmatpush1.bf16.msra.mxu0 0
  %330 = vmatprep.subr.bf16.mxu0 0
  %331 = vmatpush1.bf16.msra.mxu0 0
  %332 = vmatprep.subr.bf16.mxu0 0
  %333 = vmatpush1.bf16.msra.mxu0 0
  %334 = vmatprep.subr.bf16.mxu0 0
  %335 = vmatpush1.bf16.msra.mxu0 0
  %336 = vmatprep.subr.bf16.mxu0 0
  %337 = vmatpush1.bf16.msra.mxu0 0
  %338 = vmatprep.mubr.bf16.mxu0 0
  %339 = vmatmul.mubr.bf16.gmra.mrb[0].mxu0 %v301
  %v340 = vpop.f32.mrb[0].mxu0
  %v341 = vadd.f32 %v280, %v340
  %v342 = vpop.f32.mrb[0].mxu0
  %v343 = vpop.f32.mrb[0].mxu0
  %v344 = vadd.f32 %v283, %v343
  %v345 = vpop.f32.mrb[0].mxu0
  %346 = vmatprep.mubr.bf16.mxu0 0
  %347 = vmatmul.mubr.bf16.gmra.mrb[0].mxu0 %v304
  %v348 = vpop.f32.mrb[0].mxu0
  %v349 = vadd.f32 %v288, %v348
  %v350 = vpop.f32.mrb[0].mxu0
  %v351 = vpop.f32.mrb[0].mxu0
  %v352 = vadd.f32 %v291, %v351
  %v353 = vpop.f32.mrb[0].mxu0
  %354 = vdwg.mxu0
  %v359 = vunpack.c.l.b16 %v44
  %v360 = vunpack.c.l.b16 %v46
  %v361 = vunpack.c.l.b16 %v48
  %v362 = vunpack.c.l.b16 %v50
  %v363 = vpack.c.b16 %v360, %v359
  %v364 = vpack.c.b16 %v362, %v361
  %v366 = vsel %vm110, %v363, 0
  %v369 = vsel %vm110, %v364, 0
  %371 = vmatprep.subr.bf16.mxu0 0
  %372 = vmatpush1.bf16.msra.mxu0 %v227
  %373 = vmatprep.subr.bf16.mxu0 0
  %374 = vmatpush1.bf16.msra.mxu0 %v228
  %375 = vmatprep.subr.bf16.mxu0 0
  %376 = vmatpush1.bf16.msra.mxu0 0
  %377 = vmatprep.subr.bf16.mxu0 0
  %378 = vmatpush1.bf16.msra.mxu0 0
  %379 = vmatprep.subr.bf16.mxu0 0
  %380 = vmatpush1.bf16.msra.mxu0 0
  %381 = vmatprep.subr.bf16.mxu0 0
  %382 = vmatpush1.bf16.msra.mxu0 0
  %383 = vmatprep.subr.bf16.mxu0 0
  %384 = vmatpush1.bf16.msra.mxu0 0
  %385 = vmatprep.subr.bf16.mxu0 0
  %386 = vmatpush1.bf16.msra.mxu0 0
  %387 = vmatprep.subr.bf16.mxu0 0
  %388 = vmatpush1.bf16.msra.mxu0 0
  %389 = vmatprep.subr.bf16.mxu0 0
  %390 = vmatpush1.bf16.msra.mxu0 0
  %391 = vmatprep.subr.bf16.mxu0 0
  %392 = vmatpush1.bf16.msra.mxu0 0
  %393 = vmatprep.subr.bf16.mxu0 0
  %394 = vmatpush1.bf16.msra.mxu0 0
  %395 = vmatprep.subr.bf16.mxu0 0
  %396 = vmatpush1.bf16.msra.mxu0 0
  %397 = vmatprep.subr.bf16.mxu0 0
  %398 = vmatpush1.bf16.msra.mxu0 0
  %399 = vmatprep.subr.bf16.mxu0 0
  %400 = vmatpush1.bf16.msra.mxu0 0
  %401 = vmatprep.subr.bf16.mxu0 0
  %402 = vmatpush1.bf16.msra.mxu0 0
  %403 = vmatprep.mubr.bf16.mxu0 0
  %404 = vmatmul.mubr.bf16.gmra.mrb[0].mxu0 %v366
  %v405 = vpop.f32.mrb[0].mxu0
  %v406 = vadd.f32 0.0, %v405
  %v407 = vpop.f32.mrb[0].mxu0
  %v408 = vpop.f32.mrb[0].mxu0
  %v409 = vadd.f32 0.0, %v408
  %v410 = vpop.f32.mrb[0].mxu0
  %411 = vmatprep.mubr.bf16.mxu0 0
  %412 = vmatmul.mubr.bf16.gmra.mrb[0].mxu0 %v369
  %v413 = vpop.f32.mrb[0].mxu0
  %v414 = vadd.f32 0.0, %v413
  %v415 = vpop.f32.mrb[0].mxu0
  %v416 = vpop.f32.mrb[0].mxu0
  %v417 = vadd.f32 0.0, %v416
  %v418 = vpop.f32.mrb[0].mxu0
  %419 = vdwg.mxu0
  %v420 = vadd.f32 %v341, %v406
  %v421 = vadd.f32 %v344, %v409
  %v422 = vadd.f32 %v349, %v414
  %v423 = vadd.f32 %v352, %v417
  %v424 = vadd.f32 %v420, %v59
  %v425 = vadd.f32 %v421, %v60
  %v426 = vadd.f32 %v422, %v61
  %v427 = vadd.f32 %v423, %v62
  %v428 = vadd.f32 %v207, %v67
  %v429 = vadd.f32 %v211, %v67
  %v430 = vadd.f32 %v217, %v67
  %v431 = vadd.f32 %v221, %v67
  %v432 = vadd.f32 %v424, %v428
  %v433 = vadd.f32 %v425, %v429
  %v434 = vadd.f32 %v426, %v430
  %v435 = vadd.f32 %v427, %v431
  %v436 = vxor.u32 %v432, 2147483648
  %v437 = vxor.u32 %v433, 2147483648
  %v438 = vxor.u32 %v434, 2147483648
  %v439 = vxor.u32 %v435, 2147483648
  %v440 = vmul.f32 %v436, 1.442695
  %v441 = vpow.pop %v440
  %v442 = vmul.f32 %v437, 1.442695
  %v443 = vpow.pop %v442
  %v444 = vmul.f32 %v438, 1.442695
  %v445 = vpow.pop %v444
  %v446 = vmul.f32 %v439, 1.442695
  %v447 = vpow.pop %v446
  %v448 = vadd.f32 %v441, 1.0
  %v449 = vadd.f32 %v443, 1.0
  %v450 = vadd.f32 %v445, 1.0
  %v451 = vadd.f32 %v447, 1.0
  %v452 = vrcp.pop %v448
  %v453 = vmul.f32 1.0, %v452
  %v454 = vrcp.pop %v449
  %v455 = vmul.f32 1.0, %v454
  %v456 = vrcp.pop %v450
  %v457 = vmul.f32 1.0, %v456
  %v458 = vrcp.pop %v451
  %v459 = vmul.f32 1.0, %v458
  %464 = vrot.lane.b32.xlu0 %v428, 64
  %v465 = vpop.permute.xlu0 %464
  %466 = vrot.lane.b32.xlu0 %v429, 64
  %v467 = vpop.permute.xlu0 %466
  %468 = vrot.lane.b32.xlu0 %v430, 64
  %v469 = vpop.permute.xlu0 %468
  %470 = vrot.lane.b32.xlu0 %v431, 64
  %v471 = vpop.permute.xlu0 %470
  %v476 = vmul.f32 %v453, %v465
  %v477 = vmul.f32 %v455, %v467
  %v478 = vmul.f32 %v457, %v469
  %v479 = vmul.f32 %v459, %v471
  %484 = vrot.lane.b32.xlu0 %v476, 64
  %v485 = vpop.permute.xlu0 %484
  %486 = vrot.lane.b32.xlu0 %v477, 64
  %v487 = vpop.permute.xlu0 %486
  %488 = vrot.lane.b32.xlu0 %v478, 64
  %v489 = vpop.permute.xlu0 %488
  %490 = vrot.lane.b32.xlu0 %v479, 64
  %v491 = vpop.permute.xlu0 %490
  %v496 = vadd.f32 %v424, %v485
  %v497 = vadd.f32 %v425, %v487
  %v498 = vadd.f32 %v426, %v489
  %v499 = vadd.f32 %v427, %v491
  %v500 = vtanh.pop %v496
  %v501 = vtanh.pop %v497
  %v502 = vtanh.pop %v498
  %v503 = vtanh.pop %v499
  %v504 = vsub.f32 1.0, %v453
  %v505 = vsub.f32 1.0, %v455
  %v506 = vsub.f32 1.0, %v457
  %v507 = vsub.f32 1.0, %v459
  %512 = vrot.lane.b32.xlu0 %v500, 96
  %v513 = vpop.permute.xlu0 %512
  %514 = vrot.lane.b32.xlu0 %v501, 96
  %v515 = vpop.permute.xlu0 %514
  %516 = vrot.lane.b32.xlu0 %v502, 96
  %v517 = vpop.permute.xlu0 %516
  %518 = vrot.lane.b32.xlu0 %v503, 96
  %v519 = vpop.permute.xlu0 %518
  %v524 = vmul.f32 %v504, %v513
  %v525 = vmul.f32 %v505, %v515
  %v526 = vmul.f32 %v506, %v517
  %v527 = vmul.f32 %v507, %v519
  %532 = vrot.lane.b32.xlu0 %v39, 32
  %v533 = vpop.permute.xlu0 %532
  %534 = vrot.lane.b32.xlu0 %v40, 32
  %v535 = vpop.permute.xlu0 %534
  %536 = vrot.lane.b32.xlu0 %v41, 32
  %v537 = vpop.permute.xlu0 %536
  %538 = vrot.lane.b32.xlu0 %v42, 32
  %v539 = vpop.permute.xlu0 %538
  %v544 = vmul.f32 %v453, %v533
  %v545 = vmul.f32 %v455, %v535
  %v546 = vmul.f32 %v457, %v537
  %v547 = vmul.f32 %v459, %v539
  %v548 = vadd.f32 %v524, %v544
  %v549 = vadd.f32 %v525, %v545
  %v550 = vadd.f32 %v526, %v546
  %v551 = vadd.f32 %v527, %v547
  %v552 = vpack.c.bf16 %v549, %v548
  %v553 = vpack.c.bf16 %v551, %v550
  %556 = vrot.lane.b32.xlu0 %v552, 96
  %v557 = vpop.permute.xlu0 %556
  %558 = vrot.lane.b32.xlu0 %v553, 96
  %v559 = vpop.permute.xlu0 %558
  %v561 = vsel %vm110, %v557, 0
  %v564 = vsel %vm110, %v559, 0
  %566 = vmatprep.subr.bf16.mxu0 %v95
  %567 = vmatpush1.bf16.msra.mxu0 %v94
  %568 = vmatprep.subr.bf16.mxu0 %v99
  %569 = vmatpush1.bf16.msra.mxu0 %v98
  %570 = vmatprep.subr.bf16.mxu0 0
  %571 = vmatpush1.bf16.msra.mxu0 0
  %572 = vmatprep.subr.bf16.mxu0 0
  %573 = vmatpush1.bf16.msra.mxu0 0
  %574 = vmatprep.subr.bf16.mxu0 0
  %575 = vmatpush1.bf16.msra.mxu0 0
  %576 = vmatprep.subr.bf16.mxu0 0
  %577 = vmatpush1.bf16.msra.mxu0 0
  %578 = vmatprep.subr.bf16.mxu0 0
  %579 = vmatpush1.bf16.msra.mxu0 0
  %580 = vmatprep.subr.bf16.mxu0 0
  %581 = vmatpush1.bf16.msra.mxu0 0
  %582 = vmatprep.subr.bf16.mxu0 0
  %583 = vmatpush1.bf16.msra.mxu0 0
  %584 = vmatprep.subr.bf16.mxu0 0
  %585 = vmatpush1.bf16.msra.mxu0 0
  %586 = vmatprep.subr.bf16.mxu0 0
  %587 = vmatpush1.bf16.msra.mxu0 0
  %588 = vmatprep.subr.bf16.mxu0 0
  %589 = vmatpush1.bf16.msra.mxu0 0
  %590 = vmatprep.subr.bf16.mxu0 0
  %591 = vmatpush1.bf16.msra.mxu0 0
  %592 = vmatprep.subr.bf16.mxu0 0
  %593 = vmatpush1.bf16.msra.mxu0 0
  %594 = vmatprep.subr.bf16.mxu0 0
  %595 = vmatpush1.bf16.msra.mxu0 0
  %596 = vmatprep.subr.bf16.mxu0 0
  %597 = vmatpush1.bf16.msra.mxu0 0
  %598 = vmatprep.mubr.bf16.mxu0 0
  %599 = vmatmul.mubr.bf16.gmra.mrb[0].mxu0 %v561
  %v600 = vpop.f32.mrb[0].mxu0
  %v601 = vadd.f32 0.0, %v600
  %v602 = vpop.f32.mrb[0].mxu0
  %v603 = vadd.f32 0.0, %v602
  %v604 = vpop.f32.mrb[0].mxu0
  %v605 = vadd.f32 0.0, %v604
  %v606 = vpop.f32.mrb[0].mxu0
  %v607 = vadd.f32 0.0, %v606
  %608 = vmatprep.mubr.bf16.mxu0 0
  %609 = vmatmul.mubr.bf16.gmra.mrb[0].mxu0 %v564
  %v610 = vpop.f32.mrb[0].mxu0
  %v611 = vadd.f32 0.0, %v610
  %v612 = vpop.f32.mrb[0].mxu0
  %v613 = vadd.f32 0.0, %v612
  %v614 = vpop.f32.mrb[0].mxu0
  %v615 = vadd.f32 0.0, %v614
  %v616 = vpop.f32.mrb[0].mxu0
  %v617 = vadd.f32 0.0, %v616
  %618 = vdwg.mxu0
  %619 = vmatprep.subr.bf16.mxu0 %v97
  %620 = vmatpush1.bf16.msra.mxu0 %v96
  %621 = vmatprep.subr.bf16.mxu0 %v101
  %622 = vmatpush1.bf16.msra.mxu0 %v100
  %623 = vmatprep.subr.bf16.mxu0 0
  %624 = vmatpush1.bf16.msra.mxu0 0
  %625 = vmatprep.subr.bf16.mxu0 0
  %626 = vmatpush1.bf16.msra.mxu0 0
  %627 = vmatprep.subr.bf16.mxu0 0
  %628 = vmatpush1.bf16.msra.mxu0 0
  %629 = vmatprep.subr.bf16.mxu0 0
  %630 = vmatpush1.bf16.msra.mxu0 0
  %631 = vmatprep.subr.bf16.mxu0 0
  %632 = vmatpush1.bf16.msra.mxu0 0
  %633 = vmatprep.subr.bf16.mxu0 0
  %634 = vmatpush1.bf16.msra.mxu0 0
  %635 = vmatprep.subr.bf16.mxu0 0
  %636 = vmatpush1.bf16.msra.mxu0 0
  %637 = vmatprep.subr.bf16.mxu0 0
  %638 = vmatpush1.bf16.msra.mxu0 0
  %639 = vmatprep.subr.bf16.mxu0 0
  %640 = vmatpush1.bf16.msra.mxu0 0
  %641 = vmatprep.subr.bf16.mxu0 0
  %642 = vmatpush1.bf16.msra.mxu0 0
  %643 = vmatprep.subr.bf16.mxu0 0
  %644 = vmatpush1.bf16.msra.mxu0 0
  %645 = vmatprep.subr.bf16.mxu0 0
  %646 = vmatpush1.bf16.msra.mxu0 0
  %647 = vmatprep.subr.bf16.mxu0 0
  %648 = vmatpush1.bf16.msra.mxu0 0
  %649 = vmatprep.subr.bf16.mxu0 0
  %650 = vmatpush1.bf16.msra.mxu0 0
  %651 = vmatprep.mubr.bf16.mxu0 0
  %652 = vmatmul.mubr.bf16.gmra.mrb[0].mxu0 %v561
  %v653 = vpop.f32.mrb[0].mxu0
  %v654 = vadd.f32 0.0, %v653
  %v655 = vpop.f32.mrb[0].mxu0
  %v656 = vadd.f32 0.0, %v655
  %v657 = vpop.f32.mrb[0].mxu0
  %v658 = vadd.f32 0.0, %v657
  %v659 = vpop.f32.mrb[0].mxu0
  %v660 = vadd.f32 0.0, %v659
  %661 = vmatprep.mubr.bf16.mxu0 0
  %662 = vmatmul.mubr.bf16.gmra.mrb[0].mxu0 %v564
  %v663 = vpop.f32.mrb[0].mxu0
  %v664 = vadd.f32 0.0, %v663
  %v665 = vpop.f32.mrb[0].mxu0
  %v666 = vadd.f32 0.0, %v665
  %v667 = vpop.f32.mrb[0].mxu0
  %v668 = vadd.f32 0.0, %v667
  %v669 = vpop.f32.mrb[0].mxu0
  %v670 = vadd.f32 0.0, %v669
  %671 = vdwg.mxu0
  %v672 = vpack.c.bf16 %v605, %v601
  %v673 = vpack.c.bf16 %v615, %v611
  %v674 = vpack.c.bf16 %v607, %v603
  %v675 = vpack.c.bf16 %v617, %v613
  %v676 = vpack.c.bf16 %v658, %v654
  %v677 = vpack.c.bf16 %v668, %v664
  %678 = vmatprep.subr.bf16.mxu0 0
  %679 = vmatpush1.bf16.msra.mxu0 %v674
  %680 = vmatprep.subr.bf16.mxu0 0
  %681 = vmatpush1.bf16.msra.mxu0 %v675
  %682 = vmatprep.subr.bf16.mxu0 0
  %683 = vmatpush1.bf16.msra.mxu0 0
  %684 = vmatprep.subr.bf16.mxu0 0
  %685 = vmatpush1.bf16.msra.mxu0 0
  %686 = vmatprep.subr.bf16.mxu0 0
  %687 = vmatpush1.bf16.msra.mxu0 0
  %688 = vmatprep.subr.bf16.mxu0 0
  %689 = vmatpush1.bf16.msra.mxu0 0
  %690 = vmatprep.subr.bf16.mxu0 0
  %691 = vmatpush1.bf16.msra.mxu0 0
  %692 = vmatprep.subr.bf16.mxu0 0
  %693 = vmatpush1.bf16.msra.mxu0 0
  %694 = vmatprep.subr.bf16.mxu0 0
  %695 = vmatpush1.bf16.msra.mxu0 0
  %696 = vmatprep.subr.bf16.mxu0 0
  %697 = vmatpush1.bf16.msra.mxu0 0
  %698 = vmatprep.subr.bf16.mxu0 0
  %699 = vmatpush1.bf16.msra.mxu0 0
  %700 = vmatprep.subr.bf16.mxu0 0
  %701 = vmatpush1.bf16.msra.mxu0 0
  %702 = vmatprep.subr.bf16.mxu0 0
  %703 = vmatpush1.bf16.msra.mxu0 0
  %704 = vmatprep.subr.bf16.mxu0 0
  %705 = vmatpush1.bf16.msra.mxu0 0
  %706 = vmatprep.subr.bf16.mxu0 0
  %707 = vmatpush1.bf16.msra.mxu0 0
  %708 = vmatprep.subr.bf16.mxu0 0
  %709 = vmatpush1.bf16.msra.mxu0 0
  %710 = vmatprep.mubr.bf16.mxu0 0
  %711 = vmatmul.mubr.bf16.gmra.mrb[0].mxu0 %v240
  %v712 = vpop.f32.mrb[0].mxu0
  %v713 = vadd.f32 0.0, %v712
  %v714 = vpop.f32.mrb[0].mxu0
  %v715 = vpop.f32.mrb[0].mxu0
  %v716 = vadd.f32 0.0, %v715
  %v717 = vpop.f32.mrb[0].mxu0
  %718 = vmatprep.mubr.bf16.mxu0 0
  %719 = vmatmul.mubr.bf16.gmra.mrb[0].mxu0 %v243
  %v720 = vpop.f32.mrb[0].mxu0
  %v721 = vadd.f32 0.0, %v720
  %v722 = vpop.f32.mrb[0].mxu0
  %v723 = vpop.f32.mrb[0].mxu0
  %v724 = vadd.f32 0.0, %v723
  %v725 = vpop.f32.mrb[0].mxu0
  %726 = vdwg.mxu0
  %727 = vmatprep.subr.bf16.mxu0 0
  %728 = vmatpush1.bf16.msra.mxu0 %v672
  %729 = vmatprep.subr.bf16.mxu0 0
  %730 = vmatpush1.bf16.msra.mxu0 %v673
  %731 = vmatprep.subr.bf16.mxu0 0
  %732 = vmatpush1.bf16.msra.mxu0 0
  %733 = vmatprep.subr.bf16.mxu0 0
  %734 = vmatpush1.bf16.msra.mxu0 0
  %735 = vmatprep.subr.bf16.mxu0 0
  %736 = vmatpush1.bf16.msra.mxu0 0
  %737 = vmatprep.subr.bf16.mxu0 0
  %738 = vmatpush1.bf16.msra.mxu0 0
  %739 = vmatprep.subr.bf16.mxu0 0
  %740 = vmatpush1.bf16.msra.mxu0 0
  %741 = vmatprep.subr.bf16.mxu0 0
  %742 = vmatpush1.bf16.msra.mxu0 0
  %743 = vmatprep.subr.bf16.mxu0 0
  %744 = vmatpush1.bf16.msra.mxu0 0
  %745 = vmatprep.subr.bf16.mxu0 0
  %746 = vmatpush1.bf16.msra.mxu0 0
  %747 = vmatprep.subr.bf16.mxu0 0
  %748 = vmatpush1.bf16.msra.mxu0 0
  %749 = vmatprep.subr.bf16.mxu0 0
  %750 = vmatpush1.bf16.msra.mxu0 0
  %751 = vmatprep.subr.bf16.mxu0 0
  %752 = vmatpush1.bf16.msra.mxu0 0
  %753 = vmatprep.subr.bf16.mxu0 0
  %754 = vmatpush1.bf16.msra.mxu0 0
  %755 = vmatprep.subr.bf16.mxu0 0
  %756 = vmatpush1.bf16.msra.mxu0 0
  %757 = vmatprep.subr.bf16.mxu0 0
  %758 = vmatpush1.bf16.msra.mxu0 0
  %759 = vmatprep.mubr.bf16.mxu0 0
  %760 = vmatmul.mubr.bf16.gmra.mrb[0].mxu0 %v301
  %v761 = vpop.f32.mrb[0].mxu0
  %v762 = vadd.f32 %v713, %v761
  %v763 = vpop.f32.mrb[0].mxu0
  %v764 = vpop.f32.mrb[0].mxu0
  %v765 = vadd.f32 %v716, %v764
  %v766 = vpop.f32.mrb[0].mxu0
  %767 = vmatprep.mubr.bf16.mxu0 0
  %768 = vmatmul.mubr.bf16.gmra.mrb[0].mxu0 %v304
  %v769 = vpop.f32.mrb[0].mxu0
  %v770 = vadd.f32 %v721, %v769
  %v771 = vpop.f32.mrb[0].mxu0
  %v772 = vpop.f32.mrb[0].mxu0
  %v773 = vadd.f32 %v724, %v772
  %v774 = vpop.f32.mrb[0].mxu0
  %775 = vdwg.mxu0
  %776 = vmatprep.subr.bf16.mxu0 0
  %777 = vmatpush1.bf16.msra.mxu0 %v676
  %778 = vmatprep.subr.bf16.mxu0 0
  %779 = vmatpush1.bf16.msra.mxu0 %v677
  %780 = vmatprep.subr.bf16.mxu0 0
  %781 = vmatpush1.bf16.msra.mxu0 0
  %782 = vmatprep.subr.bf16.mxu0 0
  %783 = vmatpush1.bf16.msra.mxu0 0
  %784 = vmatprep.subr.bf16.mxu0 0
  %785 = vmatpush1.bf16.msra.mxu0 0
  %786 = vmatprep.subr.bf16.mxu0 0
  %787 = vmatpush1.bf16.msra.mxu0 0
  %788 = vmatprep.subr.bf16.mxu0 0
  %789 = vmatpush1.bf16.msra.mxu0 0
  %790 = vmatprep.subr.bf16.mxu0 0
  %791 = vmatpush1.bf16.msra.mxu0 0
  %792 = vmatprep.subr.bf16.mxu0 0
  %793 = vmatpush1.bf16.msra.mxu0 0
  %794 = vmatprep.subr.bf16.mxu0 0
  %795 = vmatpush1.bf16.msra.mxu0 0
  %796 = vmatprep.subr.bf16.mxu0 0
  %797 = vmatpush1.bf16.msra.mxu0 0
  %798 = vmatprep.subr.bf16.mxu0 0
  %799 = vmatpush1.bf16.msra.mxu0 0
  %800 = vmatprep.subr.bf16.mxu0 0
  %801 = vmatpush1.bf16.msra.mxu0 0
  %802 = vmatprep.subr.bf16.mxu0 0
  %803 = vmatpush1.bf16.msra.mxu0 0
  %804 = vmatprep.subr.bf16.mxu0 0
  %805 = vmatpush1.bf16.msra.mxu0 0
  %806 = vmatprep.subr.bf16.mxu0 0
  %807 = vmatpush1.bf16.msra.mxu0 0
  %808 = vmatprep.mubr.bf16.mxu0 0
  %809 = vmatmul.mubr.bf16.gmra.mrb[0].mxu0 %v366
  %v810 = vpop.f32.mrb[0].mxu0
  %v811 = vadd.f32 0.0, %v810
  %v812 = vpop.f32.mrb[0].mxu0
  %v813 = vpop.f32.mrb[0].mxu0
  %v814 = vadd.f32 0.0, %v813
  %v815 = vpop.f32.mrb[0].mxu0
  %816 = vmatprep.mubr.bf16.mxu0 0
  %817 = vmatmul.mubr.bf16.gmra.mrb[0].mxu0 %v369
  %v818 = vpop.f32.mrb[0].mxu0
  %v819 = vadd.f32 0.0, %v818
  %v820 = vpop.f32.mrb[0].mxu0
  %v821 = vpop.f32.mrb[0].mxu0
  %v822 = vadd.f32 0.0, %v821
  %v823 = vpop.f32.mrb[0].mxu0
  %824 = vdwg.mxu0
  %v825 = vadd.f32 %v762, %v811
  %v826 = vadd.f32 %v765, %v814
  %v827 = vadd.f32 %v770, %v819
  %v828 = vadd.f32 %v773, %v822
  %v829 = vadd.f32 %v825, %v59
  %v830 = vadd.f32 %v826, %v60
  %v831 = vadd.f32 %v827, %v61
  %v832 = vadd.f32 %v828, %v62
  %v833 = vadd.f32 %v656, %v67
  %v834 = vadd.f32 %v660, %v67
  %v835 = vadd.f32 %v666, %v67
  %v836 = vadd.f32 %v670, %v67
  %v837 = vadd.f32 %v829, %v833
  %v838 = vadd.f32 %v830, %v834
  %v839 = vadd.f32 %v831, %v835
  %v840 = vadd.f32 %v832, %v836
  %v841 = vxor.u32 %v837, 2147483648
  %v842 = vxor.u32 %v838, 2147483648
  %v843 = vxor.u32 %v839, 2147483648
  %v844 = vxor.u32 %v840, 2147483648
  %v845 = vmul.f32 %v841, 1.442695
  %v846 = vpow.pop %v845
  %v847 = vmul.f32 %v842, 1.442695
  %v848 = vpow.pop %v847
  %v849 = vmul.f32 %v843, 1.442695
  %v850 = vpow.pop %v849
  %v851 = vmul.f32 %v844, 1.442695
  %v852 = vpow.pop %v851
  %v853 = vadd.f32 %v846, 1.0
  %v854 = vadd.f32 %v848, 1.0
  %v855 = vadd.f32 %v850, 1.0
  %v856 = vadd.f32 %v852, 1.0
  %v857 = vrcp.pop %v853
  %v858 = vmul.f32 1.0, %v857
  %v859 = vrcp.pop %v854
  %v860 = vmul.f32 1.0, %v859
  %v861 = vrcp.pop %v855
  %v862 = vmul.f32 1.0, %v861
  %v863 = vrcp.pop %v856
  %v864 = vmul.f32 1.0, %v863
  %869 = vrot.lane.b32.xlu0 %v833, 64
  %v870 = vpop.permute.xlu0 %869
  %871 = vrot.lane.b32.xlu0 %v834, 64
  %v872 = vpop.permute.xlu0 %871
  %873 = vrot.lane.b32.xlu0 %v835, 64
  %v874 = vpop.permute.xlu0 %873
  %875 = vrot.lane.b32.xlu0 %v836, 64
  %v876 = vpop.permute.xlu0 %875
  %v881 = vmul.f32 %v858, %v870
  %v882 = vmul.f32 %v860, %v872
  %v883 = vmul.f32 %v862, %v874
  %v884 = vmul.f32 %v864, %v876
  %889 = vrot.lane.b32.xlu0 %v881, 64
  %v890 = vpop.permute.xlu0 %889
  %891 = vrot.lane.b32.xlu0 %v882, 64
  %v892 = vpop.permute.xlu0 %891
  %893 = vrot.lane.b32.xlu0 %v883, 64
  %v894 = vpop.permute.xlu0 %893
  %895 = vrot.lane.b32.xlu0 %v884, 64
  %v896 = vpop.permute.xlu0 %895
  %v901 = vadd.f32 %v829, %v890
  %v902 = vadd.f32 %v830, %v892
  %v903 = vadd.f32 %v831, %v894
  %v904 = vadd.f32 %v832, %v896
  %v905 = vtanh.pop %v901
  %v906 = vtanh.pop %v902
  %v907 = vtanh.pop %v903
  %v908 = vtanh.pop %v904
  %v909 = vsub.f32 1.0, %v858
  %v910 = vsub.f32 1.0, %v860
  %v911 = vsub.f32 1.0, %v862
  %v912 = vsub.f32 1.0, %v864
  %917 = vrot.lane.b32.xlu0 %v905, 96
  %v918 = vpop.permute.xlu0 %917
  %919 = vrot.lane.b32.xlu0 %v906, 96
  %v920 = vpop.permute.xlu0 %919
  %921 = vrot.lane.b32.xlu0 %v907, 96
  %v922 = vpop.permute.xlu0 %921
  %923 = vrot.lane.b32.xlu0 %v908, 96
  %v924 = vpop.permute.xlu0 %923
  %v929 = vmul.f32 %v909, %v918
  %v930 = vmul.f32 %v910, %v920
  %v931 = vmul.f32 %v911, %v922
  %v932 = vmul.f32 %v912, %v924
  %v933 = vmul.f32 %v858, %v548
  %v934 = vmul.f32 %v860, %v549
  %v935 = vmul.f32 %v862, %v550
  %v936 = vmul.f32 %v864, %v551
  %v937 = vadd.f32 %v929, %v933
  %v938 = vadd.f32 %v930, %v934
  %v939 = vadd.f32 %v931, %v935
  %v940 = vadd.f32 %v932, %v936
  %v941 = vpack.c.bf16 %v938, %v937
  %v942 = vpack.c.bf16 %v940, %v939
  %945 = vrot.lane.b32.xlu0 %v941, 96
  %v946 = vpop.permute.xlu0 %945
  %947 = vrot.lane.b32.xlu0 %v942, 96
  %v948 = vpop.permute.xlu0 %947
  %v950 = vsel %vm110, %v946, 0
  %v953 = vsel %vm110, %v948, 0
  %955 = vmatprep.subr.bf16.mxu0 %v95
  %956 = vmatpush1.bf16.msra.mxu0 %v94
  %957 = vmatprep.subr.bf16.mxu0 %v99
  %958 = vmatpush1.bf16.msra.mxu0 %v98
  %959 = vmatprep.subr.bf16.mxu0 0
  %960 = vmatpush1.bf16.msra.mxu0 0
  %961 = vmatprep.subr.bf16.mxu0 0
  %962 = vmatpush1.bf16.msra.mxu0 0
  %963 = vmatprep.subr.bf16.mxu0 0
  %964 = vmatpush1.bf16.msra.mxu0 0
  %965 = vmatprep.subr.bf16.mxu0 0
  %966 = vmatpush1.bf16.msra.mxu0 0
  %967 = vmatprep.subr.bf16.mxu0 0
  %968 = vmatpush1.bf16.msra.mxu0 0
  %969 = vmatprep.subr.bf16.mxu0 0
  %970 = vmatpush1.bf16.msra.mxu0 0
  %971 = vmatprep.subr.bf16.mxu0 0
  %972 = vmatpush1.bf16.msra.mxu0 0
  %973 = vmatprep.subr.bf16.mxu0 0
  %974 = vmatpush1.bf16.msra.mxu0 0
  %975 = vmatprep.subr.bf16.mxu0 0
  %976 = vmatpush1.bf16.msra.mxu0 0
  %977 = vmatprep.subr.bf16.mxu0 0
  %978 = vmatpush1.bf16.msra.mxu0 0
  %979 = vmatprep.subr.bf16.mxu0 0
  %980 = vmatpush1.bf16.msra.mxu0 0
  %981 = vmatprep.subr.bf16.mxu0 0
  %982 = vmatpush1.bf16.msra.mxu0 0
  %983 = vmatprep.subr.bf16.mxu0 0
  %984 = vmatpush1.bf16.msra.mxu0 0
  %985 = vmatprep.subr.bf16.mxu0 0
  %986 = vmatpush1.bf16.msra.mxu0 0
  %987 = vmatprep.mubr.bf16.mxu0 0
  %988 = vmatmul.mubr.bf16.gmra.mrb[0].mxu0 %v950
  %v989 = vpop.f32.mrb[0].mxu0
  %v990 = vadd.f32 0.0, %v989
  %v991 = vpop.f32.mrb[0].mxu0
  %v992 = vadd.f32 0.0, %v991
  %v993 = vpop.f32.mrb[0].mxu0
  %v994 = vadd.f32 0.0, %v993
  %v995 = vpop.f32.mrb[0].mxu0
  %v996 = vadd.f32 0.0, %v995
  %997 = vmatprep.mubr.bf16.mxu0 0
  %998 = vmatmul.mubr.bf16.gmra.mrb[0].mxu0 %v953
  %v999 = vpop.f32.mrb[0].mxu0
  %v1000 = vadd.f32 0.0, %v999
  %v1001 = vpop.f32.mrb[0].mxu0
  %v1002 = vadd.f32 0.0, %v1001
  %v1003 = vpop.f32.mrb[0].mxu0
  %v1004 = vadd.f32 0.0, %v1003
  %v1005 = vpop.f32.mrb[0].mxu0
  %v1006 = vadd.f32 0.0, %v1005
  %1007 = vdwg.mxu0
  %1008 = vmatprep.subr.bf16.mxu0 %v97
  %1009 = vmatpush1.bf16.msra.mxu0 %v96
  %1010 = vmatprep.subr.bf16.mxu0 %v101
  %1011 = vmatpush1.bf16.msra.mxu0 %v100
  %1012 = vmatprep.subr.bf16.mxu0 0
  %1013 = vmatpush1.bf16.msra.mxu0 0
  %1014 = vmatprep.subr.bf16.mxu0 0
  %1015 = vmatpush1.bf16.msra.mxu0 0
  %1016 = vmatprep.subr.bf16.mxu0 0
  %1017 = vmatpush1.bf16.msra.mxu0 0
  %1018 = vmatprep.subr.bf16.mxu0 0
  %1019 = vmatpush1.bf16.msra.mxu0 0
  %1020 = vmatprep.subr.bf16.mxu0 0
  %1021 = vmatpush1.bf16.msra.mxu0 0
  %1022 = vmatprep.subr.bf16.mxu0 0
  %1023 = vmatpush1.bf16.msra.mxu0 0
  %1024 = vmatprep.subr.bf16.mxu0 0
  %1025 = vmatpush1.bf16.msra.mxu0 0
  %1026 = vmatprep.subr.bf16.mxu0 0
  %1027 = vmatpush1.bf16.msra.mxu0 0
  %1028 = vmatprep.subr.bf16.mxu0 0
  %1029 = vmatpush1.bf16.msra.mxu0 0
  %1030 = vmatprep.subr.bf16.mxu0 0
  %1031 = vmatpush1.bf16.msra.mxu0 0
  %1032 = vmatprep.subr.bf16.mxu0 0
  %1033 = vmatpush1.bf16.msra.mxu0 0
  %1034 = vmatprep.subr.bf16.mxu0 0
  %1035 = vmatpush1.bf16.msra.mxu0 0
  %1036 = vmatprep.subr.bf16.mxu0 0
  %1037 = vmatpush1.bf16.msra.mxu0 0
  %1038 = vmatprep.subr.bf16.mxu0 0
  %1039 = vmatpush1.bf16.msra.mxu0 0
  %1040 = vmatprep.mubr.bf16.mxu0 0
  %1041 = vmatmul.mubr.bf16.gmra.mrb[0].mxu0 %v950
  %v1042 = vpop.f32.mrb[0].mxu0
  %v1043 = vadd.f32 0.0, %v1042
  %v1044 = vpop.f32.mrb[0].mxu0
  %v1045 = vadd.f32 0.0, %v1044
  %v1046 = vpop.f32.mrb[0].mxu0
  %v1047 = vadd.f32 0.0, %v1046
  %v1048 = vpop.f32.mrb[0].mxu0
  %v1049 = vadd.f32 0.0, %v1048
  %1050 = vmatprep.mubr.bf16.mxu0 0
  %1051 = vmatmul.mubr.bf16.gmra.mrb[0].mxu0 %v953
  %v1052 = vpop.f32.mrb[0].mxu0
  %v1053 = vadd.f32 0.0, %v1052
  %v1054 = vpop.f32.mrb[0].mxu0
  %v1055 = vadd.f32 0.0, %v1054
  %v1056 = vpop.f32.mrb[0].mxu0
  %v1057 = vadd.f32 0.0, %v1056
  %v1058 = vpop.f32.mrb[0].mxu0
  %v1059 = vadd.f32 0.0, %v1058
  %1060 = vdwg.mxu0
  %v1061 = vpack.c.bf16 %v994, %v990
  %v1062 = vpack.c.bf16 %v1004, %v1000
  %v1063 = vpack.c.bf16 %v996, %v992
  %v1064 = vpack.c.bf16 %v1006, %v1002
  %v1065 = vpack.c.bf16 %v1047, %v1043
  %v1066 = vpack.c.bf16 %v1057, %v1053
  %1067 = vmatprep.subr.bf16.mxu0 0
  %1068 = vmatpush1.bf16.msra.mxu0 %v1063
  %1069 = vmatprep.subr.bf16.mxu0 0
  %1070 = vmatpush1.bf16.msra.mxu0 %v1064
  %1071 = vmatprep.subr.bf16.mxu0 0
  %1072 = vmatpush1.bf16.msra.mxu0 0
  %1073 = vmatprep.subr.bf16.mxu0 0
  %1074 = vmatpush1.bf16.msra.mxu0 0
  %1075 = vmatprep.subr.bf16.mxu0 0
  %1076 = vmatpush1.bf16.msra.mxu0 0
  %1077 = vmatprep.subr.bf16.mxu0 0
  %1078 = vmatpush1.bf16.msra.mxu0 0
  %1079 = vmatprep.subr.bf16.mxu0 0
  %1080 = vmatpush1.bf16.msra.mxu0 0
  %1081 = vmatprep.subr.bf16.mxu0 0
  %1082 = vmatpush1.bf16.msra.mxu0 0
  %1083 = vmatprep.subr.bf16.mxu0 0
  %1084 = vmatpush1.bf16.msra.mxu0 0
  %1085 = vmatprep.subr.bf16.mxu0 0
  %1086 = vmatpush1.bf16.msra.mxu0 0
  %1087 = vmatprep.subr.bf16.mxu0 0
  %1088 = vmatpush1.bf16.msra.mxu0 0
  %1089 = vmatprep.subr.bf16.mxu0 0
  %1090 = vmatpush1.bf16.msra.mxu0 0
  %1091 = vmatprep.subr.bf16.mxu0 0
  %1092 = vmatpush1.bf16.msra.mxu0 0
  %1093 = vmatprep.subr.bf16.mxu0 0
  %1094 = vmatpush1.bf16.msra.mxu0 0
  %1095 = vmatprep.subr.bf16.mxu0 0
  %1096 = vmatpush1.bf16.msra.mxu0 0
  %1097 = vmatprep.subr.bf16.mxu0 0
  %1098 = vmatpush1.bf16.msra.mxu0 0
  %1099 = vmatprep.mubr.bf16.mxu0 0
  %1100 = vmatmul.mubr.bf16.gmra.mrb[0].mxu0 %v240
  %v1101 = vpop.f32.mrb[0].mxu0
  %v1102 = vadd.f32 0.0, %v1101
  %v1103 = vpop.f32.mrb[0].mxu0
  %v1104 = vpop.f32.mrb[0].mxu0
  %v1105 = vadd.f32 0.0, %v1104
  %v1106 = vpop.f32.mrb[0].mxu0
  %1107 = vmatprep.mubr.bf16.mxu0 0
  %1108 = vmatmul.mubr.bf16.gmra.mrb[0].mxu0 %v243
  %v1109 = vpop.f32.mrb[0].mxu0
  %v1110 = vadd.f32 0.0, %v1109
  %v1111 = vpop.f32.mrb[0].mxu0
  %v1112 = vpop.f32.mrb[0].mxu0
  %v1113 = vadd.f32 0.0, %v1112
  %v1114 = vpop.f32.mrb[0].mxu0
  %1115 = vdwg.mxu0
  %1116 = vmatprep.subr.bf16.mxu0 0
  %1117 = vmatpush1.bf16.msra.mxu0 %v1061
  %1118 = vmatprep.subr.bf16.mxu0 0
  %1119 = vmatpush1.bf16.msra.mxu0 %v1062
  %1120 = vmatprep.subr.bf16.mxu0 0
  %1121 = vmatpush1.bf16.msra.mxu0 0
  %1122 = vmatprep.subr.bf16.mxu0 0
  %1123 = vmatpush1.bf16.msra.mxu0 0
  %1124 = vmatprep.subr.bf16.mxu0 0
  %1125 = vmatpush1.bf16.msra.mxu0 0
  %1126 = vmatprep.subr.bf16.mxu0 0
  %1127 = vmatpush1.bf16.msra.mxu0 0
  %1128 = vmatprep.subr.bf16.mxu0 0
  %1129 = vmatpush1.bf16.msra.mxu0 0
  %1130 = vmatprep.subr.bf16.mxu0 0
  %1131 = vmatpush1.bf16.msra.mxu0 0
  %1132 = vmatprep.subr.bf16.mxu0 0
  %1133 = vmatpush1.bf16.msra.mxu0 0
  %1134 = vmatprep.subr.bf16.mxu0 0
  %1135 = vmatpush1.bf16.msra.mxu0 0
  %1136 = vmatprep.subr.bf16.mxu0 0
  %1137 = vmatpush1.bf16.msra.mxu0 0
  %1138 = vmatprep.subr.bf16.mxu0 0
  %1139 = vmatpush1.bf16.msra.mxu0 0
  %1140 = vmatprep.subr.bf16.mxu0 0
  %1141 = vmatpush1.bf16.msra.mxu0 0
  %1142 = vmatprep.subr.bf16.mxu0 0
  %1143 = vmatpush1.bf16.msra.mxu0 0
  %1144 = vmatprep.subr.bf16.mxu0 0
  %1145 = vmatpush1.bf16.msra.mxu0 0
  %1146 = vmatprep.subr.bf16.mxu0 0
  %1147 = vmatpush1.bf16.msra.mxu0 0
  %1148 = vmatprep.mubr.bf16.mxu0 0
  %1149 = vmatmul.mubr.bf16.gmra.mrb[0].mxu0 %v301
  %v1150 = vpop.f32.mrb[0].mxu0
  %v1151 = vadd.f32 %v1102, %v1150
  %v1152 = vpop.f32.mrb[0].mxu0
  %v1153 = vpop.f32.mrb[0].mxu0
  %v1154 = vadd.f32 %v1105, %v1153
  %v1155 = vpop.f32.mrb[0].mxu0
  %1156 = vmatprep.mubr.bf16.mxu0 0
  %1157 = vmatmul.mubr.bf16.gmra.mrb[0].mxu0 %v304
  %v1158 = vpop.f32.mrb[0].mxu0
  %v1159 = vadd.f32 %v1110, %v1158
  %v1160 = vpop.f32.mrb[0].mxu0
  %v1161 = vpop.f32.mrb[0].mxu0
  %v1162 = vadd.f32 %v1113, %v1161
  %v1163 = vpop.f32.mrb[0].mxu0
  %1164 = vdwg.mxu0
  %1165 = vmatprep.subr.bf16.mxu0 0
  %1166 = vmatpush1.bf16.msra.mxu0 %v1065
  %1167 = vmatprep.subr.bf16.mxu0 0
  %1168 = vmatpush1.bf16.msra.mxu0 %v1066
  %1169 = vmatprep.subr.bf16.mxu0 0
  %1170 = vmatpush1.bf16.msra.mxu0 0
  %1171 = vmatprep.subr.bf16.mxu0 0
  %1172 = vmatpush1.bf16.msra.mxu0 0
  %1173 = vmatprep.subr.bf16.mxu0 0
  %1174 = vmatpush1.bf16.msra.mxu0 0
  %1175 = vmatprep.subr.bf16.mxu0 0
  %1176 = vmatpush1.bf16.msra.mxu0 0
  %1177 = vmatprep.subr.bf16.mxu0 0
  %1178 = vmatpush1.bf16.msra.mxu0 0
  %1179 = vmatprep.subr.bf16.mxu0 0
  %1180 = vmatpush1.bf16.msra.mxu0 0
  %1181 = vmatprep.subr.bf16.mxu0 0
  %1182 = vmatpush1.bf16.msra.mxu0 0
  %1183 = vmatprep.subr.bf16.mxu0 0
  %1184 = vmatpush1.bf16.msra.mxu0 0
  %1185 = vmatprep.subr.bf16.mxu0 0
  %1186 = vmatpush1.bf16.msra.mxu0 0
  %1187 = vmatprep.subr.bf16.mxu0 0
  %1188 = vmatpush1.bf16.msra.mxu0 0
  %1189 = vmatprep.subr.bf16.mxu0 0
  %1190 = vmatpush1.bf16.msra.mxu0 0
  %1191 = vmatprep.subr.bf16.mxu0 0
  %1192 = vmatpush1.bf16.msra.mxu0 0
  %1193 = vmatprep.subr.bf16.mxu0 0
  %1194 = vmatpush1.bf16.msra.mxu0 0
  %1195 = vmatprep.subr.bf16.mxu0 0
  %1196 = vmatpush1.bf16.msra.mxu0 0
  %1197 = vmatprep.mubr.bf16.mxu0 0
  %1198 = vmatmul.mubr.bf16.gmra.mrb[0].mxu0 %v366
  %v1199 = vpop.f32.mrb[0].mxu0
  %v1200 = vadd.f32 0.0, %v1199
  %v1201 = vpop.f32.mrb[0].mxu0
  %v1202 = vpop.f32.mrb[0].mxu0
  %v1203 = vadd.f32 0.0, %v1202
  %v1204 = vpop.f32.mrb[0].mxu0
  %1205 = vmatprep.mubr.bf16.mxu0 0
  %1206 = vmatmul.mubr.bf16.gmra.mrb[0].mxu0 %v369
  %v1207 = vpop.f32.mrb[0].mxu0
  %v1208 = vadd.f32 0.0, %v1207
  %v1209 = vpop.f32.mrb[0].mxu0
  %v1210 = vpop.f32.mrb[0].mxu0
  %v1211 = vadd.f32 0.0, %v1210
  %v1212 = vpop.f32.mrb[0].mxu0
  %1213 = vdwg.mxu0
  %v1214 = vadd.f32 %v1151, %v1200
  %v1215 = vadd.f32 %v1154, %v1203
  %v1216 = vadd.f32 %v1159, %v1208
  %v1217 = vadd.f32 %v1162, %v1211
  %v1218 = vadd.f32 %v1214, %v59
  %v1219 = vadd.f32 %v1215, %v60
  %v1220 = vadd.f32 %v1216, %v61
  %v1221 = vadd.f32 %v1217, %v62
  %v1222 = vadd.f32 %v1045, %v67
  %v1223 = vadd.f32 %v1049, %v67
  %v1224 = vadd.f32 %v1055, %v67
  %v1225 = vadd.f32 %v1059, %v67
  %v1226 = vadd.f32 %v1218, %v1222
  %v1227 = vadd.f32 %v1219, %v1223
  %v1228 = vadd.f32 %v1220, %v1224
  %v1229 = vadd.f32 %v1221, %v1225
  %v1230 = vxor.u32 %v1226, 2147483648
  %v1231 = vxor.u32 %v1227, 2147483648
  %v1232 = vxor.u32 %v1228, 2147483648
  %v1233 = vxor.u32 %v1229, 2147483648
  %v1234 = vmul.f32 %v1230, 1.442695
  %v1235 = vpow.pop %v1234
  %v1236 = vmul.f32 %v1231, 1.442695
  %v1237 = vpow.pop %v1236
  %v1238 = vmul.f32 %v1232, 1.442695
  %v1239 = vpow.pop %v1238
  %v1240 = vmul.f32 %v1233, 1.442695
  %v1241 = vpow.pop %v1240
  %v1242 = vadd.f32 %v1235, 1.0
  %v1243 = vadd.f32 %v1237, 1.0
  %v1244 = vadd.f32 %v1239, 1.0
  %v1245 = vadd.f32 %v1241, 1.0
  %v1246 = vrcp.pop %v1242
  %v1247 = vmul.f32 1.0, %v1246
  %v1248 = vrcp.pop %v1243
  %v1249 = vmul.f32 1.0, %v1248
  %v1250 = vrcp.pop %v1244
  %v1251 = vmul.f32 1.0, %v1250
  %v1252 = vrcp.pop %v1245
  %v1253 = vmul.f32 1.0, %v1252
  %1258 = vrot.lane.b32.xlu0 %v1222, 64
  %v1259 = vpop.permute.xlu0 %1258
  %1260 = vrot.lane.b32.xlu0 %v1223, 64
  %v1261 = vpop.permute.xlu0 %1260
  %1262 = vrot.lane.b32.xlu0 %v1224, 64
  %v1263 = vpop.permute.xlu0 %1262
  %1264 = vrot.lane.b32.xlu0 %v1225, 64
  %v1265 = vpop.permute.xlu0 %1264
  %v1270 = vmul.f32 %v1247, %v1259
  %v1271 = vmul.f32 %v1249, %v1261
  %v1272 = vmul.f32 %v1251, %v1263
  %v1273 = vmul.f32 %v1253, %v1265
  %1278 = vrot.lane.b32.xlu0 %v1270, 64
  %v1279 = vpop.permute.xlu0 %1278
  %1280 = vrot.lane.b32.xlu0 %v1271, 64
  %v1281 = vpop.permute.xlu0 %1280
  %1282 = vrot.lane.b32.xlu0 %v1272, 64
  %v1283 = vpop.permute.xlu0 %1282
  %1284 = vrot.lane.b32.xlu0 %v1273, 64
  %v1285 = vpop.permute.xlu0 %1284
  %v1290 = vadd.f32 %v1218, %v1279
  %v1291 = vadd.f32 %v1219, %v1281
  %v1292 = vadd.f32 %v1220, %v1283
  %v1293 = vadd.f32 %v1221, %v1285
  %v1294 = vtanh.pop %v1290
  %v1295 = vtanh.pop %v1291
  %v1296 = vtanh.pop %v1292
  %v1297 = vtanh.pop %v1293
  %v1298 = vsub.f32 1.0, %v1247
  %v1299 = vsub.f32 1.0, %v1249
  %v1300 = vsub.f32 1.0, %v1251
  %v1301 = vsub.f32 1.0, %v1253
  %1306 = vrot.lane.b32.xlu0 %v1294, 96
  %v1307 = vpop.permute.xlu0 %1306
  %1308 = vrot.lane.b32.xlu0 %v1295, 96
  %v1309 = vpop.permute.xlu0 %1308
  %1310 = vrot.lane.b32.xlu0 %v1296, 96
  %v1311 = vpop.permute.xlu0 %1310
  %1312 = vrot.lane.b32.xlu0 %v1297, 96
  %v1313 = vpop.permute.xlu0 %1312
  %v1318 = vmul.f32 %v1298, %v1307
  %v1319 = vmul.f32 %v1299, %v1309
  %v1320 = vmul.f32 %v1300, %v1311
  %v1321 = vmul.f32 %v1301, %v1313
  %v1322 = vmul.f32 %v1247, %v937
  %v1323 = vmul.f32 %v1249, %v938
  %v1324 = vmul.f32 %v1251, %v939
  %v1325 = vmul.f32 %v1253, %v940
  %v1326 = vadd.f32 %v1318, %v1322
  %v1327 = vadd.f32 %v1319, %v1323
  %v1328 = vadd.f32 %v1320, %v1324
  %v1329 = vadd.f32 %v1321, %v1325
  %v1330 = vpack.c.bf16 %v1327, %v1326
  %v1331 = vpack.c.bf16 %v1329, %v1328
  %1334 = vrot.lane.b32.xlu0 %v1330, 96
  %v1335 = vpop.permute.xlu0 %1334
  %1336 = vrot.lane.b32.xlu0 %v1331, 96
  %v1337 = vpop.permute.xlu0 %1336
  %v1339 = vsel %vm110, %v1335, 0
  %v1342 = vsel %vm110, %v1337, 0
  %1344 = vmatprep.subr.bf16.mxu0 %v95
  %1345 = vmatpush1.bf16.msra.mxu0 %v94
  %1346 = vmatprep.subr.bf16.mxu0 %v99
  %1347 = vmatpush1.bf16.msra.mxu0 %v98
  %1348 = vmatprep.subr.bf16.mxu0 0
  %1349 = vmatpush1.bf16.msra.mxu0 0
  %1350 = vmatprep.subr.bf16.mxu0 0
  %1351 = vmatpush1.bf16.msra.mxu0 0
  %1352 = vmatprep.subr.bf16.mxu0 0
  %1353 = vmatpush1.bf16.msra.mxu0 0
  %1354 = vmatprep.subr.bf16.mxu0 0
  %1355 = vmatpush1.bf16.msra.mxu0 0
  %1356 = vmatprep.subr.bf16.mxu0 0
  %1357 = vmatpush1.bf16.msra.mxu0 0
  %1358 = vmatprep.subr.bf16.mxu0 0
  %1359 = vmatpush1.bf16.msra.mxu0 0
  %1360 = vmatprep.subr.bf16.mxu0 0
  %1361 = vmatpush1.bf16.msra.mxu0 0
  %1362 = vmatprep.subr.bf16.mxu0 0
  %1363 = vmatpush1.bf16.msra.mxu0 0
  %1364 = vmatprep.subr.bf16.mxu0 0
  %1365 = vmatpush1.bf16.msra.mxu0 0
  %1366 = vmatprep.subr.bf16.mxu0 0
  %1367 = vmatpush1.bf16.msra.mxu0 0
  %1368 = vmatprep.subr.bf16.mxu0 0
  %1369 = vmatpush1.bf16.msra.mxu0 0
  %1370 = vmatprep.subr.bf16.mxu0 0
  %1371 = vmatpush1.bf16.msra.mxu0 0
  %1372 = vmatprep.subr.bf16.mxu0 0
  %1373 = vmatpush1.bf16.msra.mxu0 0
  %1374 = vmatprep.subr.bf16.mxu0 0
  %1375 = vmatpush1.bf16.msra.mxu0 0
  %1376 = vmatprep.mubr.bf16.mxu0 0
  %1377 = vmatmul.mubr.bf16.gmra.mrb[0].mxu0 %v1339
  %v1378 = vpop.f32.mrb[0].mxu0
  %v1379 = vadd.f32 0.0, %v1378
  %v1380 = vpop.f32.mrb[0].mxu0
  %v1381 = vadd.f32 0.0, %v1380
  %v1382 = vpop.f32.mrb[0].mxu0
  %v1383 = vadd.f32 0.0, %v1382
  %v1384 = vpop.f32.mrb[0].mxu0
  %v1385 = vadd.f32 0.0, %v1384
  %1386 = vmatprep.mubr.bf16.mxu0 0
  %1387 = vmatmul.mubr.bf16.gmra.mrb[0].mxu0 %v1342
  %v1388 = vpop.f32.mrb[0].mxu0
  %v1389 = vadd.f32 0.0, %v1388
  %v1390 = vpop.f32.mrb[0].mxu0
  %v1391 = vadd.f32 0.0, %v1390
  %v1392 = vpop.f32.mrb[0].mxu0
  %v1393 = vadd.f32 0.0, %v1392
  %v1394 = vpop.f32.mrb[0].mxu0
  %v1395 = vadd.f32 0.0, %v1394
  %1396 = vdwg.mxu0
  %1397 = vmatprep.subr.bf16.mxu0 %v97
  %1398 = vmatpush1.bf16.msra.mxu0 %v96
  %1399 = vmatprep.subr.bf16.mxu0 %v101
  %1400 = vmatpush1.bf16.msra.mxu0 %v100
  %1401 = vmatprep.subr.bf16.mxu0 0
  %1402 = vmatpush1.bf16.msra.mxu0 0
  %1403 = vmatprep.subr.bf16.mxu0 0
  %1404 = vmatpush1.bf16.msra.mxu0 0
  %1405 = vmatprep.subr.bf16.mxu0 0
  %1406 = vmatpush1.bf16.msra.mxu0 0
  %1407 = vmatprep.subr.bf16.mxu0 0
  %1408 = vmatpush1.bf16.msra.mxu0 0
  %1409 = vmatprep.subr.bf16.mxu0 0
  %1410 = vmatpush1.bf16.msra.mxu0 0
  %1411 = vmatprep.subr.bf16.mxu0 0
  %1412 = vmatpush1.bf16.msra.mxu0 0
  %1413 = vmatprep.subr.bf16.mxu0 0
  %1414 = vmatpush1.bf16.msra.mxu0 0
  %1415 = vmatprep.subr.bf16.mxu0 0
  %1416 = vmatpush1.bf16.msra.mxu0 0
  %1417 = vmatprep.subr.bf16.mxu0 0
  %1418 = vmatpush1.bf16.msra.mxu0 0
  %1419 = vmatprep.subr.bf16.mxu0 0
  %1420 = vmatpush1.bf16.msra.mxu0 0
  %1421 = vmatprep.subr.bf16.mxu0 0
  %1422 = vmatpush1.bf16.msra.mxu0 0
  %1423 = vmatprep.subr.bf16.mxu0 0
  %1424 = vmatpush1.bf16.msra.mxu0 0
  %1425 = vmatprep.subr.bf16.mxu0 0
  %1426 = vmatpush1.bf16.msra.mxu0 0
  %1427 = vmatprep.subr.bf16.mxu0 0
  %1428 = vmatpush1.bf16.msra.mxu0 0
  %1429 = vmatprep.mubr.bf16.mxu0 0
  %1430 = vmatmul.mubr.bf16.gmra.mrb[0].mxu0 %v1339
  %v1431 = vpop.f32.mrb[0].mxu0
  %v1432 = vadd.f32 0.0, %v1431
  %v1433 = vpop.f32.mrb[0].mxu0
  %v1434 = vadd.f32 0.0, %v1433
  %v1435 = vpop.f32.mrb[0].mxu0
  %v1436 = vadd.f32 0.0, %v1435
  %v1437 = vpop.f32.mrb[0].mxu0
  %v1438 = vadd.f32 0.0, %v1437
  %1439 = vmatprep.mubr.bf16.mxu0 0
  %1440 = vmatmul.mubr.bf16.gmra.mrb[0].mxu0 %v1342
  %v1441 = vpop.f32.mrb[0].mxu0
  %v1442 = vadd.f32 0.0, %v1441
  %v1443 = vpop.f32.mrb[0].mxu0
  %v1444 = vadd.f32 0.0, %v1443
  %v1445 = vpop.f32.mrb[0].mxu0
  %v1446 = vadd.f32 0.0, %v1445
  %v1447 = vpop.f32.mrb[0].mxu0
  %v1448 = vadd.f32 0.0, %v1447
  %1449 = vdwg.mxu0
  %v1450 = vpack.c.bf16 %v1383, %v1379
  %v1451 = vpack.c.bf16 %v1393, %v1389
  %v1452 = vpack.c.bf16 %v1385, %v1381
  %v1453 = vpack.c.bf16 %v1395, %v1391
  %v1454 = vpack.c.bf16 %v1436, %v1432
  %v1455 = vpack.c.bf16 %v1446, %v1442
  %1456 = vmatprep.subr.bf16.mxu0 0
  %1457 = vmatpush1.bf16.msra.mxu0 %v1452
  %1458 = vmatprep.subr.bf16.mxu0 0
  %1459 = vmatpush1.bf16.msra.mxu0 %v1453
  %1460 = vmatprep.subr.bf16.mxu0 0
  %1461 = vmatpush1.bf16.msra.mxu0 0
  %1462 = vmatprep.subr.bf16.mxu0 0
  %1463 = vmatpush1.bf16.msra.mxu0 0
  %1464 = vmatprep.subr.bf16.mxu0 0
  %1465 = vmatpush1.bf16.msra.mxu0 0
  %1466 = vmatprep.subr.bf16.mxu0 0
  %1467 = vmatpush1.bf16.msra.mxu0 0
  %1468 = vmatprep.subr.bf16.mxu0 0
  %1469 = vmatpush1.bf16.msra.mxu0 0
  %1470 = vmatprep.subr.bf16.mxu0 0
  %1471 = vmatpush1.bf16.msra.mxu0 0
  %1472 = vmatprep.subr.bf16.mxu0 0
  %1473 = vmatpush1.bf16.msra.mxu0 0
  %1474 = vmatprep.subr.bf16.mxu0 0
  %1475 = vmatpush1.bf16.msra.mxu0 0
  %1476 = vmatprep.subr.bf16.mxu0 0
  %1477 = vmatpush1.bf16.msra.mxu0 0
  %1478 = vmatprep.subr.bf16.mxu0 0
  %1479 = vmatpush1.bf16.msra.mxu0 0
  %1480 = vmatprep.subr.bf16.mxu0 0
  %1481 = vmatpush1.bf16.msra.mxu0 0
  %1482 = vmatprep.subr.bf16.mxu0 0
  %1483 = vmatpush1.bf16.msra.mxu0 0
  %1484 = vmatprep.subr.bf16.mxu0 0
  %1485 = vmatpush1.bf16.msra.mxu0 0
  %1486 = vmatprep.subr.bf16.mxu0 0
  %1487 = vmatpush1.bf16.msra.mxu0 0
  %1488 = vmatprep.mubr.bf16.mxu0 0
  %1489 = vmatmul.mubr.bf16.gmra.mrb[0].mxu0 %v240
  %v1490 = vpop.f32.mrb[0].mxu0
  %v1491 = vadd.f32 0.0, %v1490
  %v1492 = vpop.f32.mrb[0].mxu0
  %v1493 = vpop.f32.mrb[0].mxu0
  %v1494 = vadd.f32 0.0, %v1493
  %v1495 = vpop.f32.mrb[0].mxu0
  %1496 = vmatprep.mubr.bf16.mxu0 0
  %1497 = vmatmul.mubr.bf16.gmra.mrb[0].mxu0 %v243
  %v1498 = vpop.f32.mrb[0].mxu0
  %v1499 = vadd.f32 0.0, %v1498
  %v1500 = vpop.f32.mrb[0].mxu0
  %v1501 = vpop.f32.mrb[0].mxu0
  %v1502 = vadd.f32 0.0, %v1501
  %v1503 = vpop.f32.mrb[0].mxu0
  %1504 = vdwg.mxu0
  %1505 = vmatprep.subr.bf16.mxu0 0
  %1506 = vmatpush1.bf16.msra.mxu0 %v1450
  %1507 = vmatprep.subr.bf16.mxu0 0
  %1508 = vmatpush1.bf16.msra.mxu0 %v1451
  %1509 = vmatprep.subr.bf16.mxu0 0
  %1510 = vmatpush1.bf16.msra.mxu0 0
  %1511 = vmatprep.subr.bf16.mxu0 0
  %1512 = vmatpush1.bf16.msra.mxu0 0
  %1513 = vmatprep.subr.bf16.mxu0 0
  %1514 = vmatpush1.bf16.msra.mxu0 0
  %1515 = vmatprep.subr.bf16.mxu0 0
  %1516 = vmatpush1.bf16.msra.mxu0 0
  %1517 = vmatprep.subr.bf16.mxu0 0
  %1518 = vmatpush1.bf16.msra.mxu0 0
  %1519 = vmatprep.subr.bf16.mxu0 0
  %1520 = vmatpush1.bf16.msra.mxu0 0
  %1521 = vmatprep.subr.bf16.mxu0 0
  %1522 = vmatpush1.bf16.msra.mxu0 0
  %1523 = vmatprep.subr.bf16.mxu0 0
  %1524 = vmatpush1.bf16.msra.mxu0 0
  %1525 = vmatprep.subr.bf16.mxu0 0
  %1526 = vmatpush1.bf16.msra.mxu0 0
  %1527 = vmatprep.subr.bf16.mxu0 0
  %1528 = vmatpush1.bf16.msra.mxu0 0
  %1529 = vmatprep.subr.bf16.mxu0 0
  %1530 = vmatpush1.bf16.msra.mxu0 0
  %1531 = vmatprep.subr.bf16.mxu0 0
  %1532 = vmatpush1.bf16.msra.mxu0 0
  %1533 = vmatprep.subr.bf16.mxu0 0
  %1534 = vmatpush1.bf16.msra.mxu0 0
  %1535 = vmatprep.subr.bf16.mxu0 0
  %1536 = vmatpush1.bf16.msra.mxu0 0
  %1537 = vmatprep.mubr.bf16.mxu0 0
  %1538 = vmatmul.mubr.bf16.gmra.mrb[0].mxu0 %v301
  %v1539 = vpop.f32.mrb[0].mxu0
  %v1540 = vadd.f32 %v1491, %v1539
  %v1541 = vpop.f32.mrb[0].mxu0
  %v1542 = vpop.f32.mrb[0].mxu0
  %v1543 = vadd.f32 %v1494, %v1542
  %v1544 = vpop.f32.mrb[0].mxu0
  %1545 = vmatprep.mubr.bf16.mxu0 0
  %1546 = vmatmul.mubr.bf16.gmra.mrb[0].mxu0 %v304
  %v1547 = vpop.f32.mrb[0].mxu0
  %v1548 = vadd.f32 %v1499, %v1547
  %v1549 = vpop.f32.mrb[0].mxu0
  %v1550 = vpop.f32.mrb[0].mxu0
  %v1551 = vadd.f32 %v1502, %v1550
  %v1552 = vpop.f32.mrb[0].mxu0
  %1553 = vdwg.mxu0
  %1554 = vmatprep.subr.bf16.mxu0 0
  %1555 = vmatpush1.bf16.msra.mxu0 %v1454
  %1556 = vmatprep.subr.bf16.mxu0 0
  %1557 = vmatpush1.bf16.msra.mxu0 %v1455
  %1558 = vmatprep.subr.bf16.mxu0 0
  %1559 = vmatpush1.bf16.msra.mxu0 0
  %1560 = vmatprep.subr.bf16.mxu0 0
  %1561 = vmatpush1.bf16.msra.mxu0 0
  %1562 = vmatprep.subr.bf16.mxu0 0
  %1563 = vmatpush1.bf16.msra.mxu0 0
  %1564 = vmatprep.subr.bf16.mxu0 0
  %1565 = vmatpush1.bf16.msra.mxu0 0
  %1566 = vmatprep.subr.bf16.mxu0 0
  %1567 = vmatpush1.bf16.msra.mxu0 0
  %1568 = vmatprep.subr.bf16.mxu0 0
  %1569 = vmatpush1.bf16.msra.mxu0 0
  %1570 = vmatprep.subr.bf16.mxu0 0
  %1571 = vmatpush1.bf16.msra.mxu0 0
  %1572 = vmatprep.subr.bf16.mxu0 0
  %1573 = vmatpush1.bf16.msra.mxu0 0
  %1574 = vmatprep.subr.bf16.mxu0 0
  %1575 = vmatpush1.bf16.msra.mxu0 0
  %1576 = vmatprep.subr.bf16.mxu0 0
  %1577 = vmatpush1.bf16.msra.mxu0 0
  %1578 = vmatprep.subr.bf16.mxu0 0
  %1579 = vmatpush1.bf16.msra.mxu0 0
  %1580 = vmatprep.subr.bf16.mxu0 0
  %1581 = vmatpush1.bf16.msra.mxu0 0
  %1582 = vmatprep.subr.bf16.mxu0 0
  %1583 = vmatpush1.bf16.msra.mxu0 0
  %1584 = vmatprep.subr.bf16.mxu0 0
  %1585 = vmatpush1.bf16.msra.mxu0 0
  %1586 = vmatprep.mubr.bf16.mxu0 0
  %1587 = vmatmul.mubr.bf16.gmra.mrb[0].mxu0 %v366
  %v1588 = vpop.f32.mrb[0].mxu0
  %v1589 = vadd.f32 0.0, %v1588
  %v1590 = vpop.f32.mrb[0].mxu0
  %v1591 = vpop.f32.mrb[0].mxu0
  %v1592 = vadd.f32 0.0, %v1591
  %v1593 = vpop.f32.mrb[0].mxu0
  %1594 = vmatprep.mubr.bf16.mxu0 0
  %1595 = vmatmul.mubr.bf16.gmra.mrb[0].mxu0 %v369
  %v1596 = vpop.f32.mrb[0].mxu0
  %v1597 = vadd.f32 0.0, %v1596
  %v1598 = vpop.f32.mrb[0].mxu0
  %v1599 = vpop.f32.mrb[0].mxu0
  %v1600 = vadd.f32 0.0, %v1599
  %v1601 = vpop.f32.mrb[0].mxu0
  %1602 = vdwg.mxu0
  %v1603 = vadd.f32 %v1540, %v1589
  %v1604 = vadd.f32 %v1543, %v1592
  %v1605 = vadd.f32 %v1548, %v1597
  %v1606 = vadd.f32 %v1551, %v1600
  %v1607 = vadd.f32 %v1603, %v59
  %v1608 = vadd.f32 %v1604, %v60
  %v1609 = vadd.f32 %v1605, %v61
  %v1610 = vadd.f32 %v1606, %v62
  %v1611 = vadd.f32 %v1434, %v67
  %v1612 = vadd.f32 %v1438, %v67
  %v1613 = vadd.f32 %v1444, %v67
  %v1614 = vadd.f32 %v1448, %v67
  %v1615 = vadd.f32 %v1607, %v1611
  %v1616 = vadd.f32 %v1608, %v1612
  %v1617 = vadd.f32 %v1609, %v1613
  %v1618 = vadd.f32 %v1610, %v1614
  %v1619 = vxor.u32 %v1615, 2147483648
  %v1620 = vxor.u32 %v1616, 2147483648
  %v1621 = vxor.u32 %v1617, 2147483648
  %v1622 = vxor.u32 %v1618, 2147483648
  %v1623 = vmul.f32 %v1619, 1.442695
  %v1624 = vpow.pop %v1623
  %v1625 = vmul.f32 %v1620, 1.442695
  %v1626 = vpow.pop %v1625
  %v1627 = vmul.f32 %v1621, 1.442695
  %v1628 = vpow.pop %v1627
  %v1629 = vmul.f32 %v1622, 1.442695
  %v1630 = vpow.pop %v1629
  %v1631 = vadd.f32 %v1624, 1.0
  %v1632 = vadd.f32 %v1626, 1.0
  %v1633 = vadd.f32 %v1628, 1.0
  %v1634 = vadd.f32 %v1630, 1.0
  %v1635 = vrcp.pop %v1631
  %v1636 = vmul.f32 1.0, %v1635
  %v1637 = vrcp.pop %v1632
  %v1638 = vmul.f32 1.0, %v1637
  %v1639 = vrcp.pop %v1633
  %v1640 = vmul.f32 1.0, %v1639
  %v1641 = vrcp.pop %v1634
  %v1642 = vmul.f32 1.0, %v1641
  %1647 = vrot.lane.b32.xlu0 %v1611, 64
  %v1648 = vpop.permute.xlu0 %1647
  %1649 = vrot.lane.b32.xlu0 %v1612, 64
  %v1650 = vpop.permute.xlu0 %1649
  %1651 = vrot.lane.b32.xlu0 %v1613, 64
  %v1652 = vpop.permute.xlu0 %1651
  %1653 = vrot.lane.b32.xlu0 %v1614, 64
  %v1654 = vpop.permute.xlu0 %1653
  %v1659 = vmul.f32 %v1636, %v1648
  %v1660 = vmul.f32 %v1638, %v1650
  %v1661 = vmul.f32 %v1640, %v1652
  %v1662 = vmul.f32 %v1642, %v1654
  %1667 = vrot.lane.b32.xlu0 %v1659, 64
  %v1668 = vpop.permute.xlu0 %1667
  %1669 = vrot.lane.b32.xlu0 %v1660, 64
  %v1670 = vpop.permute.xlu0 %1669
  %1671 = vrot.lane.b32.xlu0 %v1661, 64
  %v1672 = vpop.permute.xlu0 %1671
  %1673 = vrot.lane.b32.xlu0 %v1662, 64
  %v1674 = vpop.permute.xlu0 %1673
  %v1679 = vadd.f32 %v1607, %v1668
  %v1680 = vadd.f32 %v1608, %v1670
  %v1681 = vadd.f32 %v1609, %v1672
  %v1682 = vadd.f32 %v1610, %v1674
  %v1683 = vtanh.pop %v1679
  %v1684 = vtanh.pop %v1680
  %v1685 = vtanh.pop %v1681
  %v1686 = vtanh.pop %v1682
  %v1687 = vsub.f32 1.0, %v1636
  %v1688 = vsub.f32 1.0, %v1638
  %v1689 = vsub.f32 1.0, %v1640
  %v1690 = vsub.f32 1.0, %v1642
  %1695 = vrot.lane.b32.xlu0 %v1683, 96
  %v1696 = vpop.permute.xlu0 %1695
  %1697 = vrot.lane.b32.xlu0 %v1684, 96
  %v1698 = vpop.permute.xlu0 %1697
  %1699 = vrot.lane.b32.xlu0 %v1685, 96
  %v1700 = vpop.permute.xlu0 %1699
  %1701 = vrot.lane.b32.xlu0 %v1686, 96
  %v1702 = vpop.permute.xlu0 %1701
  %v1707 = vmul.f32 %v1687, %v1696
  %v1708 = vmul.f32 %v1688, %v1698
  %v1709 = vmul.f32 %v1689, %v1700
  %v1710 = vmul.f32 %v1690, %v1702
  %v1711 = vmul.f32 %v1636, %v1326
  %v1712 = vmul.f32 %v1638, %v1327
  %v1713 = vmul.f32 %v1640, %v1328
  %v1714 = vmul.f32 %v1642, %v1329
  %v1715 = vadd.f32 %v1707, %v1711
  %v1716 = vadd.f32 %v1708, %v1712
  %v1717 = vadd.f32 %v1709, %v1713
  %v1718 = vadd.f32 %v1710, %v1714
  %v1719 = vpack.c.bf16 %v1716, %v1715
  %v1720 = vpack.c.bf16 %v1718, %v1717
  %1723 = vrot.lane.b32.xlu0 %v1719, 96
  %v1724 = vpop.permute.xlu0 %1723
  %1725 = vrot.lane.b32.xlu0 %v1720, 96
  %v1726 = vpop.permute.xlu0 %1725
  %v1728 = vsel %vm110, %v1724, 0
  %v1731 = vsel %vm110, %v1726, 0
  %1733 = vmatprep.subr.bf16.mxu0 %v95
  %1734 = vmatpush1.bf16.msra.mxu0 %v94
  %1735 = vmatprep.subr.bf16.mxu0 %v99
  %1736 = vmatpush1.bf16.msra.mxu0 %v98
  %1737 = vmatprep.subr.bf16.mxu0 0
  %1738 = vmatpush1.bf16.msra.mxu0 0
  %1739 = vmatprep.subr.bf16.mxu0 0
  %1740 = vmatpush1.bf16.msra.mxu0 0
  %1741 = vmatprep.subr.bf16.mxu0 0
  %1742 = vmatpush1.bf16.msra.mxu0 0
  %1743 = vmatprep.subr.bf16.mxu0 0
  %1744 = vmatpush1.bf16.msra.mxu0 0
  %1745 = vmatprep.subr.bf16.mxu0 0
  %1746 = vmatpush1.bf16.msra.mxu0 0
  %1747 = vmatprep.subr.bf16.mxu0 0
  %1748 = vmatpush1.bf16.msra.mxu0 0
  %1749 = vmatprep.subr.bf16.mxu0 0
  %1750 = vmatpush1.bf16.msra.mxu0 0
  %1751 = vmatprep.subr.bf16.mxu0 0
  %1752 = vmatpush1.bf16.msra.mxu0 0
  %1753 = vmatprep.subr.bf16.mxu0 0
  %1754 = vmatpush1.bf16.msra.mxu0 0
  %1755 = vmatprep.subr.bf16.mxu0 0
  %1756 = vmatpush1.bf16.msra.mxu0 0
  %1757 = vmatprep.subr.bf16.mxu0 0
  %1758 = vmatpush1.bf16.msra.mxu0 0
  %1759 = vmatprep.subr.bf16.mxu0 0
  %1760 = vmatpush1.bf16.msra.mxu0 0
  %1761 = vmatprep.subr.bf16.mxu0 0
  %1762 = vmatpush1.bf16.msra.mxu0 0
  %1763 = vmatprep.subr.bf16.mxu0 0
  %1764 = vmatpush1.bf16.msra.mxu0 0
  %1765 = vmatprep.mubr.bf16.mxu0 0
  %1766 = vmatmul.mubr.bf16.gmra.mrb[0].mxu0 %v1728
  %v1767 = vpop.f32.mrb[0].mxu0
  %v1768 = vadd.f32 0.0, %v1767
  %v1769 = vpop.f32.mrb[0].mxu0
  %v1770 = vadd.f32 0.0, %v1769
  %v1771 = vpop.f32.mrb[0].mxu0
  %v1772 = vadd.f32 0.0, %v1771
  %v1773 = vpop.f32.mrb[0].mxu0
  %v1774 = vadd.f32 0.0, %v1773
  %1775 = vmatprep.mubr.bf16.mxu0 0
  %1776 = vmatmul.mubr.bf16.gmra.mrb[0].mxu0 %v1731
  %v1777 = vpop.f32.mrb[0].mxu0
  %v1778 = vadd.f32 0.0, %v1777
  %v1779 = vpop.f32.mrb[0].mxu0
  %v1780 = vadd.f32 0.0, %v1779
  %v1781 = vpop.f32.mrb[0].mxu0
  %v1782 = vadd.f32 0.0, %v1781
  %v1783 = vpop.f32.mrb[0].mxu0
  %v1784 = vadd.f32 0.0, %v1783
  %1785 = vdwg.mxu0
  %1786 = vmatprep.subr.bf16.mxu0 %v97
  %1787 = vmatpush1.bf16.msra.mxu0 %v96
  %1788 = vmatprep.subr.bf16.mxu0 %v101
  %1789 = vmatpush1.bf16.msra.mxu0 %v100
  %1790 = vmatprep.subr.bf16.mxu0 0
  %1791 = vmatpush1.bf16.msra.mxu0 0
  %1792 = vmatprep.subr.bf16.mxu0 0
  %1793 = vmatpush1.bf16.msra.mxu0 0
  %1794 = vmatprep.subr.bf16.mxu0 0
  %1795 = vmatpush1.bf16.msra.mxu0 0
  %1796 = vmatprep.subr.bf16.mxu0 0
  %1797 = vmatpush1.bf16.msra.mxu0 0
  %1798 = vmatprep.subr.bf16.mxu0 0
  %1799 = vmatpush1.bf16.msra.mxu0 0
  %1800 = vmatprep.subr.bf16.mxu0 0
  %1801 = vmatpush1.bf16.msra.mxu0 0
  %1802 = vmatprep.subr.bf16.mxu0 0
  %1803 = vmatpush1.bf16.msra.mxu0 0
  %1804 = vmatprep.subr.bf16.mxu0 0
  %1805 = vmatpush1.bf16.msra.mxu0 0
  %1806 = vmatprep.subr.bf16.mxu0 0
  %1807 = vmatpush1.bf16.msra.mxu0 0
  %1808 = vmatprep.subr.bf16.mxu0 0
  %1809 = vmatpush1.bf16.msra.mxu0 0
  %1810 = vmatprep.subr.bf16.mxu0 0
  %1811 = vmatpush1.bf16.msra.mxu0 0
  %1812 = vmatprep.subr.bf16.mxu0 0
  %1813 = vmatpush1.bf16.msra.mxu0 0
  %1814 = vmatprep.subr.bf16.mxu0 0
  %1815 = vmatpush1.bf16.msra.mxu0 0
  %1816 = vmatprep.subr.bf16.mxu0 0
  %1817 = vmatpush1.bf16.msra.mxu0 0
  %1818 = vmatprep.mubr.bf16.mxu0 0
  %1819 = vmatmul.mubr.bf16.gmra.mrb[0].mxu0 %v1728
  %v1820 = vpop.f32.mrb[0].mxu0
  %v1821 = vadd.f32 0.0, %v1820
  %v1822 = vpop.f32.mrb[0].mxu0
  %v1823 = vadd.f32 0.0, %v1822
  %v1824 = vpop.f32.mrb[0].mxu0
  %v1825 = vadd.f32 0.0, %v1824
  %v1826 = vpop.f32.mrb[0].mxu0
  %v1827 = vadd.f32 0.0, %v1826
  %1828 = vmatprep.mubr.bf16.mxu0 0
  %1829 = vmatmul.mubr.bf16.gmra.mrb[0].mxu0 %v1731
  %v1830 = vpop.f32.mrb[0].mxu0
  %v1831 = vadd.f32 0.0, %v1830
  %v1832 = vpop.f32.mrb[0].mxu0
  %v1833 = vadd.f32 0.0, %v1832
  %v1834 = vpop.f32.mrb[0].mxu0
  %v1835 = vadd.f32 0.0, %v1834
  %v1836 = vpop.f32.mrb[0].mxu0
  %v1837 = vadd.f32 0.0, %v1836
  %1838 = vdwg.mxu0
  %v1839 = vpack.c.bf16 %v1772, %v1768
  %v1840 = vpack.c.bf16 %v1782, %v1778
  %v1841 = vpack.c.bf16 %v1774, %v1770
  %v1842 = vpack.c.bf16 %v1784, %v1780
  %v1843 = vpack.c.bf16 %v1825, %v1821
  %v1844 = vpack.c.bf16 %v1835, %v1831
  %1845 = vmatprep.subr.bf16.mxu0 0
  %1846 = vmatpush1.bf16.msra.mxu0 %v1841
  %1847 = vmatprep.subr.bf16.mxu0 0
  %1848 = vmatpush1.bf16.msra.mxu0 %v1842
  %1849 = vmatprep.subr.bf16.mxu0 0
  %1850 = vmatpush1.bf16.msra.mxu0 0
  %1851 = vmatprep.subr.bf16.mxu0 0
  %1852 = vmatpush1.bf16.msra.mxu0 0
  %1853 = vmatprep.subr.bf16.mxu0 0
  %1854 = vmatpush1.bf16.msra.mxu0 0
  %1855 = vmatprep.subr.bf16.mxu0 0
  %1856 = vmatpush1.bf16.msra.mxu0 0
  %1857 = vmatprep.subr.bf16.mxu0 0
  %1858 = vmatpush1.bf16.msra.mxu0 0
  %1859 = vmatprep.subr.bf16.mxu0 0
  %1860 = vmatpush1.bf16.msra.mxu0 0
  %1861 = vmatprep.subr.bf16.mxu0 0
  %1862 = vmatpush1.bf16.msra.mxu0 0
  %1863 = vmatprep.subr.bf16.mxu0 0
  %1864 = vmatpush1.bf16.msra.mxu0 0
  %1865 = vmatprep.subr.bf16.mxu0 0
  %1866 = vmatpush1.bf16.msra.mxu0 0
  %1867 = vmatprep.subr.bf16.mxu0 0
  %1868 = vmatpush1.bf16.msra.mxu0 0
  %1869 = vmatprep.subr.bf16.mxu0 0
  %1870 = vmatpush1.bf16.msra.mxu0 0
  %1871 = vmatprep.subr.bf16.mxu0 0
  %1872 = vmatpush1.bf16.msra.mxu0 0
  %1873 = vmatprep.subr.bf16.mxu0 0
  %1874 = vmatpush1.bf16.msra.mxu0 0
  %1875 = vmatprep.subr.bf16.mxu0 0
  %1876 = vmatpush1.bf16.msra.mxu0 0
  %1877 = vmatprep.mubr.bf16.mxu0 0
  %1878 = vmatmul.mubr.bf16.gmra.mrb[0].mxu0 %v240
  %v1879 = vpop.f32.mrb[0].mxu0
  %v1880 = vadd.f32 0.0, %v1879
  %v1881 = vpop.f32.mrb[0].mxu0
  %v1882 = vpop.f32.mrb[0].mxu0
  %v1883 = vadd.f32 0.0, %v1882
  %v1884 = vpop.f32.mrb[0].mxu0
  %1885 = vmatprep.mubr.bf16.mxu0 0
  %1886 = vmatmul.mubr.bf16.gmra.mrb[0].mxu0 %v243
  %v1887 = vpop.f32.mrb[0].mxu0
  %v1888 = vadd.f32 0.0, %v1887
  %v1889 = vpop.f32.mrb[0].mxu0
  %v1890 = vpop.f32.mrb[0].mxu0
  %v1891 = vadd.f32 0.0, %v1890
  %v1892 = vpop.f32.mrb[0].mxu0
  %1893 = vdwg.mxu0
  %1894 = vmatprep.subr.bf16.mxu0 0
  %1895 = vmatpush1.bf16.msra.mxu0 %v1839
  %1896 = vmatprep.subr.bf16.mxu0 0
  %1897 = vmatpush1.bf16.msra.mxu0 %v1840
  %1898 = vmatprep.subr.bf16.mxu0 0
  %1899 = vmatpush1.bf16.msra.mxu0 0
  %1900 = vmatprep.subr.bf16.mxu0 0
  %1901 = vmatpush1.bf16.msra.mxu0 0
  %1902 = vmatprep.subr.bf16.mxu0 0
  %1903 = vmatpush1.bf16.msra.mxu0 0
  %1904 = vmatprep.subr.bf16.mxu0 0
  %1905 = vmatpush1.bf16.msra.mxu0 0
  %1906 = vmatprep.subr.bf16.mxu0 0
  %1907 = vmatpush1.bf16.msra.mxu0 0
  %1908 = vmatprep.subr.bf16.mxu0 0
  %1909 = vmatpush1.bf16.msra.mxu0 0
  %1910 = vmatprep.subr.bf16.mxu0 0
  %1911 = vmatpush1.bf16.msra.mxu0 0
  %1912 = vmatprep.subr.bf16.mxu0 0
  %1913 = vmatpush1.bf16.msra.mxu0 0
  %1914 = vmatprep.subr.bf16.mxu0 0
  %1915 = vmatpush1.bf16.msra.mxu0 0
  %1916 = vmatprep.subr.bf16.mxu0 0
  %1917 = vmatpush1.bf16.msra.mxu0 0
  %1918 = vmatprep.subr.bf16.mxu0 0
  %1919 = vmatpush1.bf16.msra.mxu0 0
  %1920 = vmatprep.subr.bf16.mxu0 0
  %1921 = vmatpush1.bf16.msra.mxu0 0
  %1922 = vmatprep.subr.bf16.mxu0 0
  %1923 = vmatpush1.bf16.msra.mxu0 0
  %1924 = vmatprep.subr.bf16.mxu0 0
  %1925 = vmatpush1.bf16.msra.mxu0 0
  %1926 = vmatprep.mubr.bf16.mxu0 0
  %1927 = vmatmul.mubr.bf16.gmra.mrb[0].mxu0 %v301
  %v1928 = vpop.f32.mrb[0].mxu0
  %v1929 = vadd.f32 %v1880, %v1928
  %v1930 = vpop.f32.mrb[0].mxu0
  %v1931 = vpop.f32.mrb[0].mxu0
  %v1932 = vadd.f32 %v1883, %v1931
  %v1933 = vpop.f32.mrb[0].mxu0
  %1934 = vmatprep.mubr.bf16.mxu0 0
  %1935 = vmatmul.mubr.bf16.gmra.mrb[0].mxu0 %v304
  %v1936 = vpop.f32.mrb[0].mxu0
  %v1937 = vadd.f32 %v1888, %v1936
  %v1938 = vpop.f32.mrb[0].mxu0
  %v1939 = vpop.f32.mrb[0].mxu0
  %v1940 = vadd.f32 %v1891, %v1939
  %v1941 = vpop.f32.mrb[0].mxu0
  %1942 = vdwg.mxu0
  %1943 = vmatprep.subr.bf16.mxu0 0
  %1944 = vmatpush1.bf16.msra.mxu0 %v1843
  %1945 = vmatprep.subr.bf16.mxu0 0
  %1946 = vmatpush1.bf16.msra.mxu0 %v1844
  %1947 = vmatprep.subr.bf16.mxu0 0
  %1948 = vmatpush1.bf16.msra.mxu0 0
  %1949 = vmatprep.subr.bf16.mxu0 0
  %1950 = vmatpush1.bf16.msra.mxu0 0
  %1951 = vmatprep.subr.bf16.mxu0 0
  %1952 = vmatpush1.bf16.msra.mxu0 0
  %1953 = vmatprep.subr.bf16.mxu0 0
  %1954 = vmatpush1.bf16.msra.mxu0 0
  %1955 = vmatprep.subr.bf16.mxu0 0
  %1956 = vmatpush1.bf16.msra.mxu0 0
  %1957 = vmatprep.subr.bf16.mxu0 0
  %1958 = vmatpush1.bf16.msra.mxu0 0
  %1959 = vmatprep.subr.bf16.mxu0 0
  %1960 = vmatpush1.bf16.msra.mxu0 0
  %1961 = vmatprep.subr.bf16.mxu0 0
  %1962 = vmatpush1.bf16.msra.mxu0 0
  %1963 = vmatprep.subr.bf16.mxu0 0
  %1964 = vmatpush1.bf16.msra.mxu0 0
  %1965 = vmatprep.subr.bf16.mxu0 0
  %1966 = vmatpush1.bf16.msra.mxu0 0
  %1967 = vmatprep.subr.bf16.mxu0 0
  %1968 = vmatpush1.bf16.msra.mxu0 0
  %1969 = vmatprep.subr.bf16.mxu0 0
  %1970 = vmatpush1.bf16.msra.mxu0 0
  %1971 = vmatprep.subr.bf16.mxu0 0
  %1972 = vmatpush1.bf16.msra.mxu0 0
  %1973 = vmatprep.subr.bf16.mxu0 0
  %1974 = vmatpush1.bf16.msra.mxu0 0
  %1975 = vmatprep.mubr.bf16.mxu0 0
  %1976 = vmatmul.mubr.bf16.gmra.mrb[0].mxu0 %v366
  %v1977 = vpop.f32.mrb[0].mxu0
  %v1978 = vadd.f32 0.0, %v1977
  %v1979 = vpop.f32.mrb[0].mxu0
  %v1980 = vpop.f32.mrb[0].mxu0
  %v1981 = vadd.f32 0.0, %v1980
  %v1982 = vpop.f32.mrb[0].mxu0
  %1983 = vmatprep.mubr.bf16.mxu0 0
  %1984 = vmatmul.mubr.bf16.gmra.mrb[0].mxu0 %v369
  %v1985 = vpop.f32.mrb[0].mxu0
  %v1986 = vadd.f32 0.0, %v1985
  %v1987 = vpop.f32.mrb[0].mxu0
  %v1988 = vpop.f32.mrb[0].mxu0
  %v1989 = vadd.f32 0.0, %v1988
  %v1990 = vpop.f32.mrb[0].mxu0
  %1991 = vdwg.mxu0
  %v1992 = vadd.f32 %v1929, %v1978
  %v1993 = vadd.f32 %v1932, %v1981
  %v1994 = vadd.f32 %v1937, %v1986
  %v1995 = vadd.f32 %v1940, %v1989
  %v1996 = vadd.f32 %v1992, %v59
  %v1997 = vadd.f32 %v1993, %v60
  %v1998 = vadd.f32 %v1994, %v61
  %v1999 = vadd.f32 %v1995, %v62
  %v2000 = vadd.f32 %v1823, %v67
  %v2001 = vadd.f32 %v1827, %v67
  %v2002 = vadd.f32 %v1833, %v67
  %v2003 = vadd.f32 %v1837, %v67
  %v2004 = vadd.f32 %v1996, %v2000
  %v2005 = vadd.f32 %v1997, %v2001
  %v2006 = vadd.f32 %v1998, %v2002
  %v2007 = vadd.f32 %v1999, %v2003
  %v2008 = vxor.u32 %v2004, 2147483648
  %v2009 = vxor.u32 %v2005, 2147483648
  %v2010 = vxor.u32 %v2006, 2147483648
  %v2011 = vxor.u32 %v2007, 2147483648
  %v2012 = vmul.f32 %v2008, 1.442695
  %v2013 = vpow.pop %v2012
  %v2014 = vmul.f32 %v2009, 1.442695
  %v2015 = vpow.pop %v2014
  %v2016 = vmul.f32 %v2010, 1.442695
  %v2017 = vpow.pop %v2016
  %v2018 = vmul.f32 %v2011, 1.442695
  %v2019 = vpow.pop %v2018
  %v2020 = vadd.f32 %v2013, 1.0
  %v2021 = vadd.f32 %v2015, 1.0
  %v2022 = vadd.f32 %v2017, 1.0
  %v2023 = vadd.f32 %v2019, 1.0
  %v2024 = vrcp.pop %v2020
  %v2025 = vmul.f32 1.0, %v2024
  %v2026 = vrcp.pop %v2021
  %v2027 = vmul.f32 1.0, %v2026
  %v2028 = vrcp.pop %v2022
  %v2029 = vmul.f32 1.0, %v2028
  %v2030 = vrcp.pop %v2023
  %v2031 = vmul.f32 1.0, %v2030
  %2036 = vrot.lane.b32.xlu0 %v2000, 64
  %v2037 = vpop.permute.xlu0 %2036
  %2038 = vrot.lane.b32.xlu0 %v2001, 64
  %v2039 = vpop.permute.xlu0 %2038
  %2040 = vrot.lane.b32.xlu0 %v2002, 64
  %v2041 = vpop.permute.xlu0 %2040
  %2042 = vrot.lane.b32.xlu0 %v2003, 64
  %v2043 = vpop.permute.xlu0 %2042
  %v2048 = vmul.f32 %v2025, %v2037
  %v2049 = vmul.f32 %v2027, %v2039
  %v2050 = vmul.f32 %v2029, %v2041
  %v2051 = vmul.f32 %v2031, %v2043
  %2056 = vrot.lane.b32.xlu0 %v2048, 64
  %v2057 = vpop.permute.xlu0 %2056
  %2058 = vrot.lane.b32.xlu0 %v2049, 64
  %v2059 = vpop.permute.xlu0 %2058
  %2060 = vrot.lane.b32.xlu0 %v2050, 64
  %v2061 = vpop.permute.xlu0 %2060
  %2062 = vrot.lane.b32.xlu0 %v2051, 64
  %v2063 = vpop.permute.xlu0 %2062
  %v2068 = vadd.f32 %v1996, %v2057
  %v2069 = vadd.f32 %v1997, %v2059
  %v2070 = vadd.f32 %v1998, %v2061
  %v2071 = vadd.f32 %v1999, %v2063
  %v2072 = vtanh.pop %v2068
  %v2073 = vtanh.pop %v2069
  %v2074 = vtanh.pop %v2070
  %v2075 = vtanh.pop %v2071
  %v2076 = vsub.f32 1.0, %v2025
  %v2077 = vsub.f32 1.0, %v2027
  %v2078 = vsub.f32 1.0, %v2029
  %v2079 = vsub.f32 1.0, %v2031
  %2084 = vrot.lane.b32.xlu0 %v2072, 96
  %v2085 = vpop.permute.xlu0 %2084
  %2086 = vrot.lane.b32.xlu0 %v2073, 96
  %v2087 = vpop.permute.xlu0 %2086
  %2088 = vrot.lane.b32.xlu0 %v2074, 96
  %v2089 = vpop.permute.xlu0 %2088
  %2090 = vrot.lane.b32.xlu0 %v2075, 96
  %v2091 = vpop.permute.xlu0 %2090
  %v2096 = vmul.f32 %v2076, %v2085
  %v2097 = vmul.f32 %v2077, %v2087
  %v2098 = vmul.f32 %v2078, %v2089
  %v2099 = vmul.f32 %v2079, %v2091
  %v2100 = vmul.f32 %v2025, %v1715
  %v2101 = vmul.f32 %v2027, %v1716
  %v2102 = vmul.f32 %v2029, %v1717
  %v2103 = vmul.f32 %v2031, %v1718
  %v2104 = vadd.f32 %v2096, %v2100
  %v2105 = vadd.f32 %v2097, %v2101
  %v2106 = vadd.f32 %v2098, %v2102
  %v2107 = vadd.f32 %v2099, %v2103
  %v2108 = vpack.c.bf16 %v2105, %v2104
  %v2109 = vpack.c.bf16 %v2107, %v2106
  %2112 = vrot.lane.b32.xlu0 %v2108, 96
  %v2113 = vpop.permute.xlu0 %2112
  %2114 = vrot.lane.b32.xlu0 %v2109, 96
  %v2115 = vpop.permute.xlu0 %2114
  %v2117 = vsel %vm110, %v2113, 0
  %v2120 = vsel %vm110, %v2115, 0
  %2122 = vmatprep.subr.bf16.mxu0 %v95
  %2123 = vmatpush1.bf16.msra.mxu0 %v94
  %2124 = vmatprep.subr.bf16.mxu0 %v99
  %2125 = vmatpush1.bf16.msra.mxu0 %v98
  %2126 = vmatprep.subr.bf16.mxu0 0
  %2127 = vmatpush1.bf16.msra.mxu0 0
  %2128 = vmatprep.subr.bf16.mxu0 0
  %2129 = vmatpush1.bf16.msra.mxu0 0
  %2130 = vmatprep.subr.bf16.mxu0 0
  %2131 = vmatpush1.bf16.msra.mxu0 0
  %2132 = vmatprep.subr.bf16.mxu0 0
  %2133 = vmatpush1.bf16.msra.mxu0 0
  %2134 = vmatprep.subr.bf16.mxu0 0
  %2135 = vmatpush1.bf16.msra.mxu0 0
  %2136 = vmatprep.subr.bf16.mxu0 0
  %2137 = vmatpush1.bf16.msra.mxu0 0
  %2138 = vmatprep.subr.bf16.mxu0 0
  %2139 = vmatpush1.bf16.msra.mxu0 0
  %2140 = vmatprep.subr.bf16.mxu0 0
  %2141 = vmatpush1.bf16.msra.mxu0 0
  %2142 = vmatprep.subr.bf16.mxu0 0
  %2143 = vmatpush1.bf16.msra.mxu0 0
  %2144 = vmatprep.subr.bf16.mxu0 0
  %2145 = vmatpush1.bf16.msra.mxu0 0
  %2146 = vmatprep.subr.bf16.mxu0 0
  %2147 = vmatpush1.bf16.msra.mxu0 0
  %2148 = vmatprep.subr.bf16.mxu0 0
  %2149 = vmatpush1.bf16.msra.mxu0 0
  %2150 = vmatprep.subr.bf16.mxu0 0
  %2151 = vmatpush1.bf16.msra.mxu0 0
  %2152 = vmatprep.subr.bf16.mxu0 0
  %2153 = vmatpush1.bf16.msra.mxu0 0
  %2154 = vmatprep.mubr.bf16.mxu0 0
  %2155 = vmatmul.mubr.bf16.gmra.mrb[0].mxu0 %v2117
  %v2156 = vpop.f32.mrb[0].mxu0
  %v2157 = vadd.f32 0.0, %v2156
  %v2158 = vpop.f32.mrb[0].mxu0
  %v2159 = vadd.f32 0.0, %v2158
  %v2160 = vpop.f32.mrb[0].mxu0
  %v2161 = vadd.f32 0.0, %v2160
  %v2162 = vpop.f32.mrb[0].mxu0
  %v2163 = vadd.f32 0.0, %v2162
  %2164 = vmatprep.mubr.bf16.mxu0 0
  %2165 = vmatmul.mubr.bf16.gmra.mrb[0].mxu0 %v2120
  %v2166 = vpop.f32.mrb[0].mxu0
  %v2167 = vadd.f32 0.0, %v2166
  %v2168 = vpop.f32.mrb[0].mxu0
  %v2169 = vadd.f32 0.0, %v2168
  %v2170 = vpop.f32.mrb[0].mxu0
  %v2171 = vadd.f32 0.0, %v2170
  %v2172 = vpop.f32.mrb[0].mxu0
  %v2173 = vadd.f32 0.0, %v2172
  %2174 = vdwg.mxu0
  %2175 = vmatprep.subr.bf16.mxu0 %v97
  %2176 = vmatpush1.bf16.msra.mxu0 %v96
  %2177 = vmatprep.subr.bf16.mxu0 %v101
  %2178 = vmatpush1.bf16.msra.mxu0 %v100
  %2179 = vmatprep.subr.bf16.mxu0 0
  %2180 = vmatpush1.bf16.msra.mxu0 0
  %2181 = vmatprep.subr.bf16.mxu0 0
  %2182 = vmatpush1.bf16.msra.mxu0 0
  %2183 = vmatprep.subr.bf16.mxu0 0
  %2184 = vmatpush1.bf16.msra.mxu0 0
  %2185 = vmatprep.subr.bf16.mxu0 0
  %2186 = vmatpush1.bf16.msra.mxu0 0
  %2187 = vmatprep.subr.bf16.mxu0 0
  %2188 = vmatpush1.bf16.msra.mxu0 0
  %2189 = vmatprep.subr.bf16.mxu0 0
  %2190 = vmatpush1.bf16.msra.mxu0 0
  %2191 = vmatprep.subr.bf16.mxu0 0
  %2192 = vmatpush1.bf16.msra.mxu0 0
  %2193 = vmatprep.subr.bf16.mxu0 0
  %2194 = vmatpush1.bf16.msra.mxu0 0
  %2195 = vmatprep.subr.bf16.mxu0 0
  %2196 = vmatpush1.bf16.msra.mxu0 0
  %2197 = vmatprep.subr.bf16.mxu0 0
  %2198 = vmatpush1.bf16.msra.mxu0 0
  %2199 = vmatprep.subr.bf16.mxu0 0
  %2200 = vmatpush1.bf16.msra.mxu0 0
  %2201 = vmatprep.subr.bf16.mxu0 0
  %2202 = vmatpush1.bf16.msra.mxu0 0
  %2203 = vmatprep.subr.bf16.mxu0 0
  %2204 = vmatpush1.bf16.msra.mxu0 0
  %2205 = vmatprep.subr.bf16.mxu0 0
  %2206 = vmatpush1.bf16.msra.mxu0 0
  %2207 = vmatprep.mubr.bf16.mxu0 0
  %2208 = vmatmul.mubr.bf16.gmra.mrb[0].mxu0 %v2117
  %v2209 = vpop.f32.mrb[0].mxu0
  %v2210 = vadd.f32 0.0, %v2209
  %v2211 = vpop.f32.mrb[0].mxu0
  %v2212 = vadd.f32 0.0, %v2211
  %v2213 = vpop.f32.mrb[0].mxu0
  %v2214 = vadd.f32 0.0, %v2213
  %v2215 = vpop.f32.mrb[0].mxu0
  %v2216 = vadd.f32 0.0, %v2215
  %2217 = vmatprep.mubr.bf16.mxu0 0
  %2218 = vmatmul.mubr.bf16.gmra.mrb[0].mxu0 %v2120
  %v2219 = vpop.f32.mrb[0].mxu0
  %v2220 = vadd.f32 0.0, %v2219
  %v2221 = vpop.f32.mrb[0].mxu0
  %v2222 = vadd.f32 0.0, %v2221
  %v2223 = vpop.f32.mrb[0].mxu0
  %v2224 = vadd.f32 0.0, %v2223
  %v2225 = vpop.f32.mrb[0].mxu0
  %v2226 = vadd.f32 0.0, %v2225
  %2227 = vdwg.mxu0
  %v2228 = vpack.c.bf16 %v2161, %v2157
  %v2229 = vpack.c.bf16 %v2171, %v2167
  %v2230 = vpack.c.bf16 %v2163, %v2159
  %v2231 = vpack.c.bf16 %v2173, %v2169
  %v2232 = vpack.c.bf16 %v2214, %v2210
  %v2233 = vpack.c.bf16 %v2224, %v2220
  %2234 = vmatprep.subr.bf16.mxu0 0
  %2235 = vmatpush1.bf16.msra.mxu0 %v2230
  %2236 = vmatprep.subr.bf16.mxu0 0
  %2237 = vmatpush1.bf16.msra.mxu0 %v2231
  %2238 = vmatprep.subr.bf16.mxu0 0
  %2239 = vmatpush1.bf16.msra.mxu0 0
  %2240 = vmatprep.subr.bf16.mxu0 0
  %2241 = vmatpush1.bf16.msra.mxu0 0
  %2242 = vmatprep.subr.bf16.mxu0 0
  %2243 = vmatpush1.bf16.msra.mxu0 0
  %2244 = vmatprep.subr.bf16.mxu0 0
  %2245 = vmatpush1.bf16.msra.mxu0 0
  %2246 = vmatprep.subr.bf16.mxu0 0
  %2247 = vmatpush1.bf16.msra.mxu0 0
  %2248 = vmatprep.subr.bf16.mxu0 0
  %2249 = vmatpush1.bf16.msra.mxu0 0
  %2250 = vmatprep.subr.bf16.mxu0 0
  %2251 = vmatpush1.bf16.msra.mxu0 0
  %2252 = vmatprep.subr.bf16.mxu0 0
  %2253 = vmatpush1.bf16.msra.mxu0 0
  %2254 = vmatprep.subr.bf16.mxu0 0
  %2255 = vmatpush1.bf16.msra.mxu0 0
  %2256 = vmatprep.subr.bf16.mxu0 0
  %2257 = vmatpush1.bf16.msra.mxu0 0
  %2258 = vmatprep.subr.bf16.mxu0 0
  %2259 = vmatpush1.bf16.msra.mxu0 0
  %2260 = vmatprep.subr.bf16.mxu0 0
  %2261 = vmatpush1.bf16.msra.mxu0 0
  %2262 = vmatprep.subr.bf16.mxu0 0
  %2263 = vmatpush1.bf16.msra.mxu0 0
  %2264 = vmatprep.subr.bf16.mxu0 0
  %2265 = vmatpush1.bf16.msra.mxu0 0
  %2266 = vmatprep.mubr.bf16.mxu0 0
  %2267 = vmatmul.mubr.bf16.gmra.mrb[0].mxu0 %v240
  %v2268 = vpop.f32.mrb[0].mxu0
  %v2269 = vadd.f32 0.0, %v2268
  %v2270 = vpop.f32.mrb[0].mxu0
  %v2271 = vpop.f32.mrb[0].mxu0
  %v2272 = vadd.f32 0.0, %v2271
  %v2273 = vpop.f32.mrb[0].mxu0
  %2274 = vmatprep.mubr.bf16.mxu0 0
  %2275 = vmatmul.mubr.bf16.gmra.mrb[0].mxu0 %v243
  %v2276 = vpop.f32.mrb[0].mxu0
  %v2277 = vadd.f32 0.0, %v2276
  %v2278 = vpop.f32.mrb[0].mxu0
  %v2279 = vpop.f32.mrb[0].mxu0
  %v2280 = vadd.f32 0.0, %v2279
  %v2281 = vpop.f32.mrb[0].mxu0
  %2282 = vdwg.mxu0
  %2283 = vmatprep.subr.bf16.mxu0 0
  %2284 = vmatpush1.bf16.msra.mxu0 %v2228
  %2285 = vmatprep.subr.bf16.mxu0 0
  %2286 = vmatpush1.bf16.msra.mxu0 %v2229
  %2287 = vmatprep.subr.bf16.mxu0 0
  %2288 = vmatpush1.bf16.msra.mxu0 0
  %2289 = vmatprep.subr.bf16.mxu0 0
  %2290 = vmatpush1.bf16.msra.mxu0 0
  %2291 = vmatprep.subr.bf16.mxu0 0
  %2292 = vmatpush1.bf16.msra.mxu0 0
  %2293 = vmatprep.subr.bf16.mxu0 0
  %2294 = vmatpush1.bf16.msra.mxu0 0
  %2295 = vmatprep.subr.bf16.mxu0 0
  %2296 = vmatpush1.bf16.msra.mxu0 0
  %2297 = vmatprep.subr.bf16.mxu0 0
  %2298 = vmatpush1.bf16.msra.mxu0 0
  %2299 = vmatprep.subr.bf16.mxu0 0
  %2300 = vmatpush1.bf16.msra.mxu0 0
  %2301 = vmatprep.subr.bf16.mxu0 0
  %2302 = vmatpush1.bf16.msra.mxu0 0
  %2303 = vmatprep.subr.bf16.mxu0 0
  %2304 = vmatpush1.bf16.msra.mxu0 0
  %2305 = vmatprep.subr.bf16.mxu0 0
  %2306 = vmatpush1.bf16.msra.mxu0 0
  %2307 = vmatprep.subr.bf16.mxu0 0
  %2308 = vmatpush1.bf16.msra.mxu0 0
  %2309 = vmatprep.subr.bf16.mxu0 0
  %2310 = vmatpush1.bf16.msra.mxu0 0
  %2311 = vmatprep.subr.bf16.mxu0 0
  %2312 = vmatpush1.bf16.msra.mxu0 0
  %2313 = vmatprep.subr.bf16.mxu0 0
  %2314 = vmatpush1.bf16.msra.mxu0 0
  %2315 = vmatprep.mubr.bf16.mxu0 0
  %2316 = vmatmul.mubr.bf16.gmra.mrb[0].mxu0 %v301
  %v2317 = vpop.f32.mrb[0].mxu0
  %v2318 = vadd.f32 %v2269, %v2317
  %v2319 = vpop.f32.mrb[0].mxu0
  %v2320 = vpop.f32.mrb[0].mxu0
  %v2321 = vadd.f32 %v2272, %v2320
  %v2322 = vpop.f32.mrb[0].mxu0
  %2323 = vmatprep.mubr.bf16.mxu0 0
  %2324 = vmatmul.mubr.bf16.gmra.mrb[0].mxu0 %v304
  %v2325 = vpop.f32.mrb[0].mxu0
  %v2326 = vadd.f32 %v2277, %v2325
  %v2327 = vpop.f32.mrb[0].mxu0
  %v2328 = vpop.f32.mrb[0].mxu0
  %v2329 = vadd.f32 %v2280, %v2328
  %v2330 = vpop.f32.mrb[0].mxu0
  %2331 = vdwg.mxu0
  %2332 = vmatprep.subr.bf16.mxu0 0
  %2333 = vmatpush1.bf16.msra.mxu0 %v2232
  %2334 = vmatprep.subr.bf16.mxu0 0
  %2335 = vmatpush1.bf16.msra.mxu0 %v2233
  %2336 = vmatprep.subr.bf16.mxu0 0
  %2337 = vmatpush1.bf16.msra.mxu0 0
  %2338 = vmatprep.subr.bf16.mxu0 0
  %2339 = vmatpush1.bf16.msra.mxu0 0
  %2340 = vmatprep.subr.bf16.mxu0 0
  %2341 = vmatpush1.bf16.msra.mxu0 0
  %2342 = vmatprep.subr.bf16.mxu0 0
  %2343 = vmatpush1.bf16.msra.mxu0 0
  %2344 = vmatprep.subr.bf16.mxu0 0
  %2345 = vmatpush1.bf16.msra.mxu0 0
  %2346 = vmatprep.subr.bf16.mxu0 0
  %2347 = vmatpush1.bf16.msra.mxu0 0
  %2348 = vmatprep.subr.bf16.mxu0 0
  %2349 = vmatpush1.bf16.msra.mxu0 0
  %2350 = vmatprep.subr.bf16.mxu0 0
  %2351 = vmatpush1.bf16.msra.mxu0 0
  %2352 = vmatprep.subr.bf16.mxu0 0
  %2353 = vmatpush1.bf16.msra.mxu0 0
  %2354 = vmatprep.subr.bf16.mxu0 0
  %2355 = vmatpush1.bf16.msra.mxu0 0
  %2356 = vmatprep.subr.bf16.mxu0 0
  %2357 = vmatpush1.bf16.msra.mxu0 0
  %2358 = vmatprep.subr.bf16.mxu0 0
  %2359 = vmatpush1.bf16.msra.mxu0 0
  %2360 = vmatprep.subr.bf16.mxu0 0
  %2361 = vmatpush1.bf16.msra.mxu0 0
  %2362 = vmatprep.subr.bf16.mxu0 0
  %2363 = vmatpush1.bf16.msra.mxu0 0
  %2364 = vmatprep.mubr.bf16.mxu0 0
  %2365 = vmatmul.mubr.bf16.gmra.mrb[0].mxu0 %v366
  %v2366 = vpop.f32.mrb[0].mxu0
  %v2367 = vadd.f32 0.0, %v2366
  %v2368 = vpop.f32.mrb[0].mxu0
  %v2369 = vpop.f32.mrb[0].mxu0
  %v2370 = vadd.f32 0.0, %v2369
  %v2371 = vpop.f32.mrb[0].mxu0
  %2372 = vmatprep.mubr.bf16.mxu0 0
  %2373 = vmatmul.mubr.bf16.gmra.mrb[0].mxu0 %v369
  %v2374 = vpop.f32.mrb[0].mxu0
  %v2375 = vadd.f32 0.0, %v2374
  %v2376 = vpop.f32.mrb[0].mxu0
  %v2377 = vpop.f32.mrb[0].mxu0
  %v2378 = vadd.f32 0.0, %v2377
  %v2379 = vpop.f32.mrb[0].mxu0
  %2380 = vdwg.mxu0
  %v2381 = vadd.f32 %v2318, %v2367
  %v2382 = vadd.f32 %v2321, %v2370
  %v2383 = vadd.f32 %v2326, %v2375
  %v2384 = vadd.f32 %v2329, %v2378
  %v2385 = vadd.f32 %v2381, %v59
  %v2386 = vadd.f32 %v2382, %v60
  %v2387 = vadd.f32 %v2383, %v61
  %v2388 = vadd.f32 %v2384, %v62
  %v2389 = vadd.f32 %v2212, %v67
  %v2390 = vadd.f32 %v2216, %v67
  %v2391 = vadd.f32 %v2222, %v67
  %v2392 = vadd.f32 %v2226, %v67
  %v2393 = vadd.f32 %v2385, %v2389
  %v2394 = vadd.f32 %v2386, %v2390
  %v2395 = vadd.f32 %v2387, %v2391
  %v2396 = vadd.f32 %v2388, %v2392
  %v2397 = vxor.u32 %v2393, 2147483648
  %v2398 = vxor.u32 %v2394, 2147483648
  %v2399 = vxor.u32 %v2395, 2147483648
  %v2400 = vxor.u32 %v2396, 2147483648
  %v2401 = vmul.f32 %v2397, 1.442695
  %v2402 = vpow.pop %v2401
  %v2403 = vmul.f32 %v2398, 1.442695
  %v2404 = vpow.pop %v2403
  %v2405 = vmul.f32 %v2399, 1.442695
  %v2406 = vpow.pop %v2405
  %v2407 = vmul.f32 %v2400, 1.442695
  %v2408 = vpow.pop %v2407
  %v2409 = vadd.f32 %v2402, 1.0
  %v2410 = vadd.f32 %v2404, 1.0
  %v2411 = vadd.f32 %v2406, 1.0
  %v2412 = vadd.f32 %v2408, 1.0
  %v2413 = vrcp.pop %v2409
  %v2414 = vmul.f32 1.0, %v2413
  %v2415 = vrcp.pop %v2410
  %v2416 = vmul.f32 1.0, %v2415
  %v2417 = vrcp.pop %v2411
  %v2418 = vmul.f32 1.0, %v2417
  %v2419 = vrcp.pop %v2412
  %v2420 = vmul.f32 1.0, %v2419
  %2425 = vrot.lane.b32.xlu0 %v2389, 64
  %v2426 = vpop.permute.xlu0 %2425
  %2427 = vrot.lane.b32.xlu0 %v2390, 64
  %v2428 = vpop.permute.xlu0 %2427
  %2429 = vrot.lane.b32.xlu0 %v2391, 64
  %v2430 = vpop.permute.xlu0 %2429
  %2431 = vrot.lane.b32.xlu0 %v2392, 64
  %v2432 = vpop.permute.xlu0 %2431
  %v2437 = vmul.f32 %v2414, %v2426
  %v2438 = vmul.f32 %v2416, %v2428
  %v2439 = vmul.f32 %v2418, %v2430
  %v2440 = vmul.f32 %v2420, %v2432
  %2445 = vrot.lane.b32.xlu0 %v2437, 64
  %v2446 = vpop.permute.xlu0 %2445
  %2447 = vrot.lane.b32.xlu0 %v2438, 64
  %v2448 = vpop.permute.xlu0 %2447
  %2449 = vrot.lane.b32.xlu0 %v2439, 64
  %v2450 = vpop.permute.xlu0 %2449
  %2451 = vrot.lane.b32.xlu0 %v2440, 64
  %v2452 = vpop.permute.xlu0 %2451
  %v2457 = vadd.f32 %v2385, %v2446
  %v2458 = vadd.f32 %v2386, %v2448
  %v2459 = vadd.f32 %v2387, %v2450
  %v2460 = vadd.f32 %v2388, %v2452
  %v2461 = vtanh.pop %v2457
  %v2462 = vtanh.pop %v2458
  %v2463 = vtanh.pop %v2459
  %v2464 = vtanh.pop %v2460
  %v2465 = vsub.f32 1.0, %v2414
  %v2466 = vsub.f32 1.0, %v2416
  %v2467 = vsub.f32 1.0, %v2418
  %v2468 = vsub.f32 1.0, %v2420
  %2473 = vrot.lane.b32.xlu0 %v2461, 96
  %v2474 = vpop.permute.xlu0 %2473
  %2475 = vrot.lane.b32.xlu0 %v2462, 96
  %v2476 = vpop.permute.xlu0 %2475
  %2477 = vrot.lane.b32.xlu0 %v2463, 96
  %v2478 = vpop.permute.xlu0 %2477
  %2479 = vrot.lane.b32.xlu0 %v2464, 96
  %v2480 = vpop.permute.xlu0 %2479
  %v2485 = vmul.f32 %v2465, %v2474
  %v2486 = vmul.f32 %v2466, %v2476
  %v2487 = vmul.f32 %v2467, %v2478
  %v2488 = vmul.f32 %v2468, %v2480
  %v2489 = vmul.f32 %v2414, %v2104
  %v2490 = vmul.f32 %v2416, %v2105
  %v2491 = vmul.f32 %v2418, %v2106
  %v2492 = vmul.f32 %v2420, %v2107
  %v2493 = vadd.f32 %v2485, %v2489
  %v2494 = vadd.f32 %v2486, %v2490
  %v2495 = vadd.f32 %v2487, %v2491
  %v2496 = vadd.f32 %v2488, %v2492
  %2501 = vrot.lane.b32.xlu0 %v2493, 96
  %v2502 = vpop.permute.xlu0 %2501
  %2503 = vrot.lane.b32.xlu0 %v2494, 96
  %v2504 = vpop.permute.xlu0 %2503
  %2505 = vrot.lane.b32.xlu0 %v2495, 96
  %v2506 = vpop.permute.xlu0 %2505
  %2507 = vrot.lane.b32.xlu0 %v2496, 96
  %v2508 = vpop.permute.xlu0 %2507
  %2513 = vrot.lane.b32.xlu0 %v39, 64
  %v2514 = vpop.permute.xlu0 %2513
  %2515 = vrot.lane.b32.xlu0 %v40, 64
  %v2516 = vpop.permute.xlu0 %2515
  %2517 = vrot.lane.b32.xlu0 %v41, 64
  %v2518 = vpop.permute.xlu0 %2517
  %2519 = vrot.lane.b32.xlu0 %v42, 64
  %v2520 = vpop.permute.xlu0 %2519
  %v2525 = vsel %vm110, %v2502, %v2493
  %v2526 = vsel %vm110, %v2504, %v2494
  %v2527 = vsel %vm110, %v2506, %v2495
  %v2528 = vsel %vm110, %v2508, %v2496
  %vm2529 = vcmask 523264
  %v2530 = vsel %vm2529, %v2525, %v2514
  %v2531 = vsel %vm2529, %v2526, %v2516
  %v2532 = vsel %vm2529, %v2527, %v2518
  %v2533 = vsel %vm2529, %v2528, %v2520
  %vm2538 = vcmask 1046528
  %v2539 = vrot.slane %v2530, 1
  %v2540 = vrot.slane %v2531, 1
  %v2541 = vsel %vm2538, %v2539, %v2540
  %v2542 = vrot.slane %v2532, 1
  %v2543 = vsel %vm2538, %v2540, %v2542
  %v2544 = vrot.slane %v2533, 1
  %v2545 = vsel %vm2538, %v2542, %v2544
  %2546 = vrot.lane.b32.xlu0 %v2541, 80
  %v2547 = vpop.permute.xlu0 %2546
  %2548 = vrot.lane.b32.xlu0 %v2543, 80
  %v2549 = vpop.permute.xlu0 %2548
  %2550 = vrot.lane.b32.xlu0 %v2545, 80
  %v2551 = vpop.permute.xlu0 %2550
  %2552 = vrot.lane.b32.xlu0 %v2544, 80
  %v2553 = vpop.permute.xlu0 %2552
  %vm2558 = vcmask 1045504
  %v2559 = vrot.slane %v2530, 2
  %v2560 = vrot.slane %v2531, 2
  %v2561 = vsel %vm2558, %v2559, %v2560
  %v2562 = vrot.slane %v2532, 2
  %v2563 = vsel %vm2558, %v2560, %v2562
  %v2564 = vrot.slane %v2533, 2
  %v2565 = vsel %vm2558, %v2562, %v2564
  %2566 = vrot.lane.b32.xlu0 %v2561, 32
  %v2567 = vpop.permute.xlu0 %2566
  %2568 = vrot.lane.b32.xlu0 %v2563, 32
  %v2569 = vpop.permute.xlu0 %2568
  %2570 = vrot.lane.b32.xlu0 %v2565, 32
  %v2571 = vpop.permute.xlu0 %2570
  %2572 = vrot.lane.b32.xlu0 %v2564, 32
  %v2573 = vpop.permute.xlu0 %2572
  %vm2578 = vcmask 654336
  %v2579 = vsel %vm2578, %v2530, %v2547
  %v2580 = vsel %vm2578, %v2531, %v2549
  %v2581 = vsel %vm2578, %v2532, %v2551
  %v2582 = vsel %vm2578, %v2533, %v2553
  %v2583 = vsel %vm110, %v2547, %v2567
  %v2584 = vsel %vm110, %v2549, %v2569
  %v2585 = vsel %vm110, %v2551, %v2571
  %v2586 = vsel %vm110, %v2553, %v2573
  %v2587 = vpack.c.bf16 %v2580, %v2579
  %v2588 = vpack.c.bf16 %v2584, %v2583
  %v2589 = vpack.c.bf16 %v2582, %v2581
  %v2590 = vpack.c.bf16 %v2586, %v2585
  %v2591 = vlaneseq
  %v2592 = vshrl.u32 %v2591, 7
  %v2593 = vsub.s32 1, %v2592
  %v2594 = vrot.slane %v63, %v2593
  %v2595 = vld [vmem:[%s6] sm:$0xf]
  %v2596 = vld [vmem:[%s6 + $0x4] sm:$0xf]
  %v2597 = vld [vmem:[%s6 + $0x8] sm:$0xf]
  %v2598 = vld [vmem:[%s6 + $0xc] sm:$0xf]
  %v2599 = vld [vmem:[%s6 + $0x10] sm:$0xf]
  %v2600 = vld [vmem:[%s6 + $0x14] sm:$0xf]
  %v2601 = vld [vmem:[%s6 + $0x18] sm:$0xf]
  %v2602 = vld [vmem:[%s6 + $0x1c] sm:$0xf]
  %v2603 = vld [vmem:[%s6 + $0x20] sm:$0xf]
  %v2604 = vld [vmem:[%s6 + $0x24] sm:$0xf]
  %v2605 = vld [vmem:[%s6 + $0x28] sm:$0xf]
  %v2606 = vld [vmem:[%s6 + $0x2c] sm:$0xf]
  %v2607 = vld [vmem:[%s6 + $0x30] sm:$0xf]
  %v2608 = vld [vmem:[%s6 + $0x34] sm:$0xf]
  %v2609 = vld [vmem:[%s6 + $0x38] sm:$0xf]
  %v2610 = vld [vmem:[%s6 + $0x3c] sm:$0xf]
  %v2611 = vld [vmem:[%s6 + $0x40] sm:$0xf]
  %v2612 = vld [vmem:[%s6 + $0x44] sm:$0xf]
  %v2613 = vld [vmem:[%s6 + $0x48] sm:$0xf]
  %v2614 = vld [vmem:[%s6 + $0x4c] sm:$0xf]
  %v2615 = vld [vmem:[%s6 + $0x50] sm:$0xf]
  %v2616 = vld [vmem:[%s6 + $0x54] sm:$0xf]
  %v2617 = vld [vmem:[%s6 + $0x58] sm:$0xf]
  %v2618 = vld [vmem:[%s6 + $0x5c] sm:$0xf]
  %v2619 = vld [vmem:[%s6 + $0x60] sm:$0xf]
  %v2620 = vld [vmem:[%s6 + $0x64] sm:$0xf]
  %v2621 = vld [vmem:[%s6 + $0x68] sm:$0xf]
  %v2622 = vld [vmem:[%s6 + $0x6c] sm:$0xf]
  %v2623 = vld [vmem:[%s6 + $0x70] sm:$0xf]
  %v2624 = vld [vmem:[%s6 + $0x74] sm:$0xf]
  %v2655 = vunpack.c.l.b16 %v2595
  %v2656 = vunpack.c.l.b16 %v2596
  %v2657 = vunpack.c.l.b16 %v2597
  %v2658 = vunpack.c.l.b16 %v2598
  %v2659 = vunpack.c.l.b16 %v2599
  %v2660 = vunpack.c.l.b16 %v2600
  %v2661 = vunpack.c.l.b16 %v2601
  %v2662 = vunpack.c.l.b16 %v2602
  %v2663 = vunpack.c.l.b16 %v2603
  %v2664 = vunpack.c.l.b16 %v2604
  %v2665 = vunpack.c.l.b16 %v2605
  %v2666 = vunpack.c.l.b16 %v2606
  %v2667 = vunpack.c.l.b16 %v2607
  %v2668 = vunpack.c.l.b16 %v2608
  %v2669 = vunpack.c.l.b16 %v2609
  %v2670 = vunpack.c.l.b16 %v2610
  %v2671 = vunpack.c.l.b16 %v2611
  %v2672 = vunpack.c.l.b16 %v2612
  %v2673 = vunpack.c.l.b16 %v2613
  %v2674 = vunpack.c.l.b16 %v2614
  %v2675 = vunpack.c.l.b16 %v2615
  %v2676 = vunpack.c.l.b16 %v2616
  %v2677 = vunpack.c.l.b16 %v2617
  %v2678 = vunpack.c.l.b16 %v2618
  %v2679 = vunpack.c.l.b16 %v2619
  %v2680 = vunpack.c.l.b16 %v2620
  %v2681 = vunpack.c.l.b16 %v2621
  %v2682 = vunpack.c.l.b16 %v2622
  %v2683 = vunpack.c.l.b16 %v2623
  %v2684 = vunpack.c.l.b16 %v2624
  %v2685 = vpack.c.b16 %v2656, %v2655
  %v2686 = vpack.c.b16 %v2658, %v2657
  %v2687 = vpack.c.b16 %v2660, %v2659
  %v2688 = vpack.c.b16 %v2662, %v2661
  %v2689 = vpack.c.b16 %v2664, %v2663
  %v2690 = vpack.c.b16 %v2666, %v2665
  %v2691 = vpack.c.b16 %v2668, %v2667
  %v2692 = vpack.c.b16 %v2670, %v2669
  %v2693 = vpack.c.b16 %v2672, %v2671
  %v2694 = vpack.c.b16 %v2674, %v2673
  %v2695 = vpack.c.b16 %v2676, %v2675
  %v2696 = vpack.c.b16 %v2678, %v2677
  %v2697 = vpack.c.b16 %v2680, %v2679
  %v2698 = vpack.c.b16 %v2682, %v2681
  %v2699 = vpack.c.b16 %v2684, %v2683
  %vm2715 = vcmask 916480
  %v2717 = vsel %vm2715, %v2588, 0
  %v2720 = vsel %vm2715, %v2590, 0
  %2722 = vmatprep.subr.bf16.mxu0 0
  %2723 = vmatpush1.bf16.msra.mxu0 %v2685
  %2724 = vmatprep.subr.bf16.mxu0 0
  %2725 = vmatpush1.bf16.msra.mxu0 %v2686
  %2726 = vmatprep.subr.bf16.mxu0 0
  %2727 = vmatpush1.bf16.msra.mxu0 %v2687
  %2728 = vmatprep.subr.bf16.mxu0 0
  %2729 = vmatpush1.bf16.msra.mxu0 %v2688
  %2730 = vmatprep.subr.bf16.mxu0 0
  %2731 = vmatpush1.bf16.msra.mxu0 %v2689
  %2732 = vmatprep.subr.bf16.mxu0 0
  %2733 = vmatpush1.bf16.msra.mxu0 %v2690
  %2734 = vmatprep.subr.bf16.mxu0 0
  %2735 = vmatpush1.bf16.msra.mxu0 %v2691
  %2736 = vmatprep.subr.bf16.mxu0 0
  %2737 = vmatpush1.bf16.msra.mxu0 %v2692
  %2738 = vmatprep.subr.bf16.mxu0 0
  %2739 = vmatpush1.bf16.msra.mxu0 %v2693
  %2740 = vmatprep.subr.bf16.mxu0 0
  %2741 = vmatpush1.bf16.msra.mxu0 %v2694
  %2742 = vmatprep.subr.bf16.mxu0 0
  %2743 = vmatpush1.bf16.msra.mxu0 %v2695
  %2744 = vmatprep.subr.bf16.mxu0 0
  %2745 = vmatpush1.bf16.msra.mxu0 %v2696
  %2746 = vmatprep.subr.bf16.mxu0 0
  %2747 = vmatpush1.bf16.msra.mxu0 %v2697
  %2748 = vmatprep.subr.bf16.mxu0 0
  %2749 = vmatpush1.bf16.msra.mxu0 %v2698
  %2750 = vmatprep.subr.bf16.mxu0 0
  %2751 = vmatpush1.bf16.msra.mxu0 %v2699
  %2752 = vmatprep.subr.bf16.mxu0 0
  %2753 = vmatpush1.bf16.msra.mxu0 0
  %2754 = vmatprep.mubr.bf16.mxu0 %v2717
  %2755 = vmatmul.mubr.bf16.gmra.mrb[0].mxu0 %v2587
  %v2756 = vpop.f32.mrb[0].mxu0
  %v2757 = vadd.f32 %v2594, %v2756
  %v2758 = vpop.f32.mrb[0].mxu0
  %v2759 = vpop.f32.mrb[0].mxu0
  %v2760 = vadd.f32 %v2594, %v2759
  %v2761 = vpop.f32.mrb[0].mxu0
  %2762 = vmatprep.mubr.bf16.mxu0 %v2720
  %2763 = vmatmul.mubr.bf16.gmra.mrb[0].mxu0 %v2589
  %v2764 = vpop.f32.mrb[0].mxu0
  %v2765 = vadd.f32 %v2594, %v2764
  %v2766 = vpop.f32.mrb[0].mxu0
  %v2767 = vpop.f32.mrb[0].mxu0
  %v2768 = vadd.f32 %v2594, %v2767
  %v2769 = vpop.f32.mrb[0].mxu0
  %2770 = vdwg.mxu0
  %v2771 = vmax.f32 %v2757, 0.0
  %v2772 = vmax.f32 %v2760, 0.0
  %v2773 = vmax.f32 %v2765, 0.0
  %v2774 = vmax.f32 %v2768, 0.0
  %2775 = vst.msk [vmem:[#allocation2] sm:$0xff] %vm2578, %v2771
  %2776 = vst.msk [vmem:[#allocation2 + $0x8] sm:$0xff] %vm2578, %v2772
  %2777 = vst.msk [vmem:[#allocation2 + $0x10] sm:$0xff] %vm2578, %v2773
  %vm2778 = vcmask 652288
  %2779 = vst.msk [vmem:[#allocation2 + $0x18] sm:$0x3f] %vm2778, %v2774
  %v2780 = vld [vmem:[#allocation2] ss:$2 sm:$0x3f]
  %s2781 = scalar_lea.vmem [#allocation2], 1
  %v2782 = vld [vmem:[%s2781] ss:$2 sm:$0x3f]
  %v2783 = vmax.f32 %v2780, %v2782
  %s2784 = scalar_lea.vmem [#allocation2], 2
  %v2785 = vld [vmem:[%s2784] ss:$2 sm:$0x3f]
  %v2786 = vmax.f32 %v2783, %v2785
  %s2787 = scalar_lea.vmem [#allocation2], 16
  %v2788 = vld [vmem:[%s2787] ss:$2 sm:$0x3f]
  %s2789 = scalar_lea.vmem [#allocation2], 17
  %v2790 = vld [vmem:[%s2789] ss:$2 sm:$0x3f]
  %v2791 = vmax.f32 %v2788, %v2790
  %s2792 = scalar_lea.vmem [#allocation2], 18
  %v2793 = vld [vmem:[%s2792] ss:$2 sm:$0x3f]
  %v2794 = vmax.f32 %v2791, %v2793
  %v2796 = vrot.slane %v2794, 2
  %v2798 = vsel %vm2558, %v2786, %v2796
  %v2799 = vlaneseq
  %v2800 = vshrl.u32 %v2799, 7
  %v2801 = vsub.s32 2, %v2800
  %v2802 = vrot.slane %v63, %v2801
  %v2803 = vpack.c.bf16 %v2796, %v2798
  %v2804 = vld [vmem:[%s7] sm:$0xf]
  %v2805 = vld [vmem:[%s7 + $0x4] sm:$0xf]
  %v2806 = vld [vmem:[%s7 + $0x8] sm:$0xf]
  %v2807 = vld [vmem:[%s7 + $0xc] sm:$0xf]
  %v2808 = vld [vmem:[%s7 + $0x10] sm:$0xf]
  %v2809 = vld [vmem:[%s7 + $0x14] sm:$0xf]
  %v2810 = vld [vmem:[%s7 + $0x18] sm:$0xf]
  %v2811 = vld [vmem:[%s7 + $0x1c] sm:$0xf]
  %v2812 = vld [vmem:[%s7 + $0x20] sm:$0xf]
  %v2813 = vld [vmem:[%s7 + $0x24] sm:$0xf]
  %v2824 = vunpack.c.l.b16 %v2804
  %v2825 = vunpack.c.l.b16 %v2805
  %v2826 = vunpack.c.l.b16 %v2806
  %v2827 = vunpack.c.l.b16 %v2807
  %v2828 = vunpack.c.l.b16 %v2808
  %v2829 = vunpack.c.l.b16 %v2809
  %v2830 = vunpack.c.l.b16 %v2810
  %v2831 = vunpack.c.l.b16 %v2811
  %v2832 = vunpack.c.l.b16 %v2812
  %v2833 = vunpack.c.l.b16 %v2813
  %v2834 = vpack.c.b16 %v2825, %v2824
  %v2835 = vpack.c.b16 %v2827, %v2826
  %v2836 = vpack.c.b16 %v2829, %v2828
  %v2837 = vpack.c.b16 %v2831, %v2830
  %v2838 = vpack.c.b16 %v2833, %v2832
  %v2845 = vsel %vm2578, %v2803, 0
  %2847 = vmatprep.subr.bf16.mxu0 0
  %2848 = vmatpush1.bf16.msra.mxu0 %v2834
  %2849 = vmatprep.subr.bf16.mxu0 0
  %2850 = vmatpush1.bf16.msra.mxu0 %v2835
  %2851 = vmatprep.subr.bf16.mxu0 0
  %2852 = vmatpush1.bf16.msra.mxu0 %v2836
  %2853 = vmatprep.subr.bf16.mxu0 0
  %2854 = vmatpush1.bf16.msra.mxu0 %v2837
  %2855 = vmatprep.subr.bf16.mxu0 0
  %2856 = vmatpush1.bf16.msra.mxu0 %v2838
  %2857 = vmatprep.subr.bf16.mxu0 0
  %2858 = vmatpush1.bf16.msra.mxu0 0
  %2859 = vmatprep.subr.bf16.mxu0 0
  %2860 = vmatpush1.bf16.msra.mxu0 0
  %2861 = vmatprep.subr.bf16.mxu0 0
  %2862 = vmatpush1.bf16.msra.mxu0 0
  %2863 = vmatprep.subr.bf16.mxu0 0
  %2864 = vmatpush1.bf16.msra.mxu0 0
  %2865 = vmatprep.subr.bf16.mxu0 0
  %2866 = vmatpush1.bf16.msra.mxu0 0
  %2867 = vmatprep.subr.bf16.mxu0 0
  %2868 = vmatpush1.bf16.msra.mxu0 0
  %2869 = vmatprep.subr.bf16.mxu0 0
  %2870 = vmatpush1.bf16.msra.mxu0 0
  %2871 = vmatprep.subr.bf16.mxu0 0
  %2872 = vmatpush1.bf16.msra.mxu0 0
  %2873 = vmatprep.subr.bf16.mxu0 0
  %2874 = vmatpush1.bf16.msra.mxu0 0
  %2875 = vmatprep.subr.bf16.mxu0 0
  %2876 = vmatpush1.bf16.msra.mxu0 0
  %2877 = vmatprep.subr.bf16.mxu0 0
  %2878 = vmatpush1.bf16.msra.mxu0 0
  %2879 = vmatprep.mubr.bf16.mxu0 0
  %2880 = vmatmul.mubr.bf16.gmra.mrb[0].mxu0 %v2845
  %v2881 = vpop.f32.mrb[0].mxu0
  %v2882 = vadd.f32 %v2802, %v2881
  %v2883 = vpop.f32.mrb[0].mxu0
  %v2884 = vpop.f32.mrb[0].mxu0
  %v2885 = vadd.f32 %v2802, %v2884
  %v2886 = vpop.f32.mrb[0].mxu0
  %2887 = vdwg.mxu0
  %v2888 = vmax.f32 %v2882, 0.0
  %v2889 = vmax.f32 %v2885, 0.0
  %2890 = vst.msk [vmem:[#allocation3] sm:$0xff] %vm2578, %v2888
  %vm2891 = vcmask 650240
  %2892 = vst.msk [vmem:[#allocation3 + $0x8] sm:$0xf] %vm2891, %v2889
  %v2893 = vld [vmem:[#allocation3] ss:$2 sm:$0x7]
  %s2894 = scalar_lea.vmem [#allocation3], 1
  %v2895 = vld [vmem:[%s2894] ss:$2 sm:$0x7]
  %v2896 = vmax.f32 %v2893, %v2895
  %s2897 = scalar_lea.vmem [#allocation3], 6
  %v2898 = vld [vmem:[%s2897] ss:$2 sm:$0x7]
  %s2899 = scalar_lea.vmem [#allocation3], 7
  %v2900 = vld [vmem:[%s2899] ss:$2 sm:$0x7]
  %v2901 = vmax.f32 %v2898, %v2900
  %v2903 = vrot.slane %v2901, 5
  %vm2905 = vcmask 1042432
  %v2906 = vsel %vm2905, %v2896, %v2903
  %v2907 = vld [vmem:[%s8] sm:$0xff]
  %v2908 = vld [vmem:[%s8 + $0x8] sm:$0xff]
  %v2909 = vld [vmem:[%s8 + $0x10] sm:$0xff]
  %v2910 = vld [vmem:[%s8 + $0x18] sm:$0xff]
  %v2911 = vld [vmem:[%s8 + $0x20] sm:$0xff]
  %v2912 = vld [vmem:[%s8 + $0x28] sm:$0xff]
  %v2913 = vld [vmem:[%s8 + $0x30] sm:$0xff]
  %v2914 = vld [vmem:[%s8 + $0x38] sm:$0xff]
  %v2915 = vld [vmem:[%s8 + $0x40] sm:$0xff]
  %v2916 = vld [vmem:[%s8 + $0x48] sm:$0xff]
  %v2917 = vlaneseq
  %v2918 = vshrl.u32 %v2917, 7
  %v2919 = vsub.s32 3, %v2918
  %v2920 = vrot.slane %v63, %v2919
  %v2922 = vsel %vm2578, %v2906, 0
  %2924 = vmatprep.subr.mxu0 0.0
  %2925 = vmatpush1.msra.mxu0 %v2907
  %2926 = vmatprep.subr.mxu0 0.0
  %2927 = vmatpush1.msra.mxu0 %v2908
  %2928 = vmatprep.subr.mxu0 0.0
  %2929 = vmatpush1.msra.mxu0 %v2909
  %2930 = vmatprep.subr.mxu0 0.0
  %2931 = vmatpush1.msra.mxu0 %v2910
  %2932 = vmatprep.subr.mxu0 0.0
  %2933 = vmatpush1.msra.mxu0 %v2911
  %2934 = vmatprep.subr.mxu0 0.0
  %2935 = vmatpush1.msra.mxu0 %v2912
  %2936 = vmatprep.subr.mxu0 0.0
  %2937 = vmatpush1.msra.mxu0 %v2913
  %2938 = vmatprep.subr.mxu0 0.0
  %2939 = vmatpush1.msra.mxu0 %v2914
  %2940 = vmatprep.subr.mxu0 0.0
  %2941 = vmatpush1.msra.mxu0 %v2915
  %2942 = vmatprep.subr.mxu0 0.0
  %2943 = vmatpush1.msra.mxu0 %v2916
  %2944 = vmatprep.subr.mxu0 0.0
  %2945 = vmatpush1.msra.mxu0 0.0
  %2946 = vmatprep.subr.mxu0 0.0
  %2947 = vmatpush1.msra.mxu0 0.0
  %2948 = vmatprep.subr.mxu0 0.0
  %2949 = vmatpush1.msra.mxu0 0.0
  %2950 = vmatprep.subr.mxu0 0.0
  %2951 = vmatpush1.msra.mxu0 0.0
  %2952 = vmatprep.subr.mxu0 0.0
  %2953 = vmatpush1.msra.mxu0 0.0
  %2954 = vmatprep.subr.mxu0 0.0
  %2955 = vmatpush1.msra.mxu0 0.0
  %2956 = vmatprep.subr.mxu0 0.0
  %2957 = vmatpush1.msra.mxu0 0.0
  %2958 = vmatprep.subr.mxu0 0.0
  %2959 = vmatpush1.msra.mxu0 0.0
  %2960 = vmatprep.subr.mxu0 0.0
  %2961 = vmatpush1.msra.mxu0 0.0
  %2962 = vmatprep.subr.mxu0 0.0
  %2963 = vmatpush1.msra.mxu0 0.0
  %2964 = vmatprep.subr.mxu0 0.0
  %2965 = vmatpush1.msra.mxu0 0.0
  %2966 = vmatprep.subr.mxu0 0.0
  %2967 = vmatpush1.msra.mxu0 0.0
  %2968 = vmatprep.subr.mxu0 0.0
  %2969 = vmatpush1.msra.mxu0 0.0
  %2970 = vmatprep.subr.mxu0 0.0
  %2971 = vmatpush1.msra.mxu0 0.0
  %2972 = vmatprep.subr.mxu0 0.0
  %2973 = vmatpush1.msra.mxu0 0.0
  %2974 = vmatprep.subr.mxu0 0.0
  %2975 = vmatpush1.msra.mxu0 0.0
  %2976 = vmatprep.subr.mxu0 0.0
  %2977 = vmatpush1.msra.mxu0 0.0
  %2978 = vmatprep.subr.mxu0 0.0
  %2979 = vmatpush1.msra.mxu0 0.0
  %2980 = vmatprep.subr.mxu0 0.0
  %2981 = vmatpush1.msra.mxu0 0.0
  %2982 = vmatprep.subr.mxu0 0.0
  %2983 = vmatpush1.msra.mxu0 0.0
  %2984 = vmatprep.subr.mxu0 0.0
  %2985 = vmatpush1.msra.mxu0 0.0
  %2986 = vmatprep.subr.mxu0 0.0
  %2987 = vmatpush1.msra.mxu0 0.0
  %2988 = vmatprep.mubr.f32.mxu0 0.0
  %2989 = vmatmul.mubr.f32.gmra.mrb[0].mxu0 %v2922
  %v2990 = vpop.f32.mrb[0].mxu0
  %v2991 = vadd.f32 %v2920, %v2990
  %v2992 = vpop.f32.mrb[0].mxu0
  %2993 = vdwg.mxu0
  %2995 = vrot.lane.b32.xlu0 %v2991, 127
  %v2996 = vpop.permute.xlu0 %2995
  %v2998 = vmul.f32 %v2991, %v2996
  %vm2999 = vcmask 2048
  %v3000 = vsel %vm2999, %v2998, 0.0
  %v3001 = vrot.slane %v3000, 4
  %v3002 = vadd.f32 %v3000, %v3001
  %v3003 = vrot.slane %v3002, 2
  %v3004 = vadd.f32 %v3002, %v3003
  %v3005 = vrot.slane %v3004, 1
  %v3006 = vadd.f32 %v3004, %v3005
  %v3008 = vrot.slane %v2998, 3
  %v3010 = vsel %vm2999, %v3008, 0.0
  %v3011 = vrot.slane %v3010, 4
  %v3012 = vadd.f32 %v3010, %v3011
  %v3013 = vrot.slane %v3012, 2
  %v3014 = vadd.f32 %v3012, %v3013
  %v3015 = vrot.slane %v3014, 1
  %v3016 = vadd.f32 %v3014, %v3015
  %vm3017 = vcmask 1040384
  %v3018 = vsel %vm3017, %v3006, %v3016
  %v3019 = vmul.f32 %v3018, 0.33333334
  %vm3020 = vcmask 649216
  %v3021 = vsel %vm3020, %v2906, 0.0
  %v3022 = vrot.slane %v3021, 4
  %v3023 = vadd.f32 %v3021, %v3022
  %v3024 = vrot.slane %v3023, 2
  %v3025 = vadd.f32 %v3023, %v3024
  %v3026 = vrot.slane %v3025, 1
  %v3027 = vadd.f32 %v3025, %v3026
  %v3028 = vrot.slane %v2906, 3
  %v3030 = vsel %vm3020, %v3028, 0.0
  %v3031 = vrot.slane %v3030, 4
  %v3032 = vadd.f32 %v3030, %v3031
  %v3033 = vrot.slane %v3032, 2
  %v3034 = vadd.f32 %v3032, %v3033
  %v3035 = vrot.slane %v3034, 1
  %v3036 = vadd.f32 %v3034, %v3035
  %v3037 = vsel %vm3017, %v3027, %v3036
  %v3038 = vxor.u32 %v3019, 2147483648
  %v3039 = vmul.f32 %v3038, 1.442695
  %v3040 = vpow.pop %v3039
  %v3041 = vadd.f32 %v3040, 1.0
  %v3042 = vrcp.pop %v3041
  %v3043 = vmul.f32 1.0, %v3042
  %v3044 = vld [vmem:[%s3] sm:$0x3]
  %3046 = vrot.lane.b32.xlu0 %v3037, 32
  %v3047 = vpop.permute.xlu0 %3046
  %v3049 = vsel %vm110, %v3044, %v3047
  %v3050 = vld [vmem:[%s9] sm:$0xff]
  %v3051 = vld [vmem:[%s9 + $0x8] sm:$0xff]
  %v3052 = vld [vmem:[%s9 + $0x10] sm:$0xff]
  %v3053 = vld [vmem:[%s9 + $0x18] sm:$0xff]
  %v3054 = vld [vmem:[%s9 + $0x20] sm:$0xff]
  %v3055 = vld [vmem:[%s9 + $0x28] sm:$0xff]
  %v3056 = vld [vmem:[%s9 + $0x30] sm:$0xff]
  %v3057 = vld [vmem:[%s9 + $0x38] sm:$0xff]
  %v3058 = vld [vmem:[%s9 + $0x40] sm:$0xff]
  %v3059 = vld [vmem:[%s9 + $0x48] sm:$0xff]
  %v3060 = vld [vmem:[%s9 + $0x50] sm:$0xff]
  %v3061 = vld [vmem:[%s9 + $0x58] sm:$0xff]
  %v3062 = vld [vmem:[%s9 + $0x60] sm:$0xff]
  %v3063 = vld [vmem:[%s9 + $0x68] sm:$0xff]
  %v3064 = vlaneseq
  %v3065 = vshrl.u32 %v3064, 7
  %v3066 = vsub.s32 4, %v3065
  %v3067 = vrot.slane %v63, %v3066
  %v3069 = vsel %vm2715, %v3049, 0
  %3071 = vmatprep.subr.mxu0 0.0
  %3072 = vmatpush1.msra.mxu0 %v3050
  %3073 = vmatprep.subr.mxu0 0.0
  %3074 = vmatpush1.msra.mxu0 %v3051
  %3075 = vmatprep.subr.mxu0 0.0
  %3076 = vmatpush1.msra.mxu0 %v3052
  %3077 = vmatprep.subr.mxu0 0.0
  %3078 = vmatpush1.msra.mxu0 %v3053
  %3079 = vmatprep.subr.mxu0 0.0
  %3080 = vmatpush1.msra.mxu0 %v3054
  %3081 = vmatprep.subr.mxu0 0.0
  %3082 = vmatpush1.msra.mxu0 %v3055
  %3083 = vmatprep.subr.mxu0 0.0
  %3084 = vmatpush1.msra.mxu0 %v3056
  %3085 = vmatprep.subr.mxu0 0.0
  %3086 = vmatpush1.msra.mxu0 %v3057
  %3087 = vmatprep.subr.mxu0 0.0
  %3088 = vmatpush1.msra.mxu0 %v3058
  %3089 = vmatprep.subr.mxu0 0.0
  %3090 = vmatpush1.msra.mxu0 %v3059
  %3091 = vmatprep.subr.mxu0 0.0
  %3092 = vmatpush1.msra.mxu0 %v3060
  %3093 = vmatprep.subr.mxu0 0.0
  %3094 = vmatpush1.msra.mxu0 %v3061
  %3095 = vmatprep.subr.mxu0 0.0
  %3096 = vmatpush1.msra.mxu0 %v3062
  %3097 = vmatprep.subr.mxu0 0.0
  %3098 = vmatpush1.msra.mxu0 %v3063
  %3099 = vmatprep.subr.mxu0 0.0
  %3100 = vmatpush1.msra.mxu0 0.0
  %3101 = vmatprep.subr.mxu0 0.0
  %3102 = vmatpush1.msra.mxu0 0.0
  %3103 = vmatprep.subr.mxu0 0.0
  %3104 = vmatpush1.msra.mxu0 0.0
  %3105 = vmatprep.subr.mxu0 0.0
  %3106 = vmatpush1.msra.mxu0 0.0
  %3107 = vmatprep.subr.mxu0 0.0
  %3108 = vmatpush1.msra.mxu0 0.0
  %3109 = vmatprep.subr.mxu0 0.0
  %3110 = vmatpush1.msra.mxu0 0.0
  %3111 = vmatprep.subr.mxu0 0.0
  %3112 = vmatpush1.msra.mxu0 0.0
  %3113 = vmatprep.subr.mxu0 0.0
  %3114 = vmatpush1.msra.mxu0 0.0
  %3115 = vmatprep.subr.mxu0 0.0
  %3116 = vmatpush1.msra.mxu0 0.0
  %3117 = vmatprep.subr.mxu0 0.0
  %3118 = vmatpush1.msra.mxu0 0.0
  %3119 = vmatprep.subr.mxu0 0.0
  %3120 = vmatpush1.msra.mxu0 0.0
  %3121 = vmatprep.subr.mxu0 0.0
  %3122 = vmatpush1.msra.mxu0 0.0
  %3123 = vmatprep.subr.mxu0 0.0
  %3124 = vmatpush1.msra.mxu0 0.0
  %3125 = vmatprep.subr.mxu0 0.0
  %3126 = vmatpush1.msra.mxu0 0.0
  %3127 = vmatprep.subr.mxu0 0.0
  %3128 = vmatpush1.msra.mxu0 0.0
  %3129 = vmatprep.subr.mxu0 0.0
  %3130 = vmatpush1.msra.mxu0 0.0
  %3131 = vmatprep.subr.mxu0 0.0
  %3132 = vmatpush1.msra.mxu0 0.0
  %3133 = vmatprep.subr.mxu0 0.0
  %3134 = vmatpush1.msra.mxu0 0.0
  %3135 = vmatprep.mubr.f32.mxu0 0.0
  %3136 = vmatmul.mubr.f32.gmra.mrb[0].mxu0 %v3069
  %v3137 = vpop.f32.mrb[0].mxu0
  %v3138 = vadd.f32 %v3067, %v3137
  %v3139 = vpop.f32.mrb[0].mxu0
  %3140 = vdwg.mxu0
  %v3141 = vmax.f32 %v3138, 0.0
  %v3142 = vld [vmem:[%s10] sm:$0xff]
  %v3143 = vld [vmem:[%s10 + $0x8] sm:$0xff]
  %v3144 = vld [vmem:[%s10 + $0x10] sm:$0xff]
  %v3145 = vld [vmem:[%s10 + $0x18] sm:$0xff]
  %v3146 = vlaneseq
  %v3147 = vshrl.u32 %v3146, 7
  %v3148 = vsub.s32 5, %v3147
  %v3149 = vrot.slane %v63, %v3148
  %v3151 = vsel %vm110, %v3141, 0
  %3153 = vmatprep.subr.mxu0 0.0
  %3154 = vmatpush1.msra.mxu0 %v3142
  %3155 = vmatprep.subr.mxu0 0.0
  %3156 = vmatpush1.msra.mxu0 %v3143
  %3157 = vmatprep.subr.mxu0 0.0
  %3158 = vmatpush1.msra.mxu0 %v3144
  %3159 = vmatprep.subr.mxu0 0.0
  %3160 = vmatpush1.msra.mxu0 %v3145
  %3161 = vmatprep.subr.mxu0 0.0
  %3162 = vmatpush1.msra.mxu0 0.0
  %3163 = vmatprep.subr.mxu0 0.0
  %3164 = vmatpush1.msra.mxu0 0.0
  %3165 = vmatprep.subr.mxu0 0.0
  %3166 = vmatpush1.msra.mxu0 0.0
  %3167 = vmatprep.subr.mxu0 0.0
  %3168 = vmatpush1.msra.mxu0 0.0
  %3169 = vmatprep.subr.mxu0 0.0
  %3170 = vmatpush1.msra.mxu0 0.0
  %3171 = vmatprep.subr.mxu0 0.0
  %3172 = vmatpush1.msra.mxu0 0.0
  %3173 = vmatprep.subr.mxu0 0.0
  %3174 = vmatpush1.msra.mxu0 0.0
  %3175 = vmatprep.subr.mxu0 0.0
  %3176 = vmatpush1.msra.mxu0 0.0
  %3177 = vmatprep.subr.mxu0 0.0
  %3178 = vmatpush1.msra.mxu0 0.0
  %3179 = vmatprep.subr.mxu0 0.0
  %3180 = vmatpush1.msra.mxu0 0.0
  %3181 = vmatprep.subr.mxu0 0.0
  %3182 = vmatpush1.msra.mxu0 0.0
  %3183 = vmatprep.subr.mxu0 0.0
  %3184 = vmatpush1.msra.mxu0 0.0
  %3185 = vmatprep.subr.mxu0 0.0
  %3186 = vmatpush1.msra.mxu0 0.0
  %3187 = vmatprep.subr.mxu0 0.0
  %3188 = vmatpush1.msra.mxu0 0.0
  %3189 = vmatprep.subr.mxu0 0.0
  %3190 = vmatpush1.msra.mxu0 0.0
  %3191 = vmatprep.subr.mxu0 0.0
  %3192 = vmatpush1.msra.mxu0 0.0
  %3193 = vmatprep.subr.mxu0 0.0
  %3194 = vmatpush1.msra.mxu0 0.0
  %3195 = vmatprep.subr.mxu0 0.0
  %3196 = vmatpush1.msra.mxu0 0.0
  %3197 = vmatprep.subr.mxu0 0.0
  %3198 = vmatpush1.msra.mxu0 0.0
  %3199 = vmatprep.subr.mxu0 0.0
  %3200 = vmatpush1.msra.mxu0 0.0
  %3201 = vmatprep.subr.mxu0 0.0
  %3202 = vmatpush1.msra.mxu0 0.0
  %3203 = vmatprep.subr.mxu0 0.0
  %3204 = vmatpush1.msra.mxu0 0.0
  %3205 = vmatprep.subr.mxu0 0.0
  %3206 = vmatpush1.msra.mxu0 0.0
  %3207 = vmatprep.subr.mxu0 0.0
  %3208 = vmatpush1.msra.mxu0 0.0
  %3209 = vmatprep.subr.mxu0 0.0
  %3210 = vmatpush1.msra.mxu0 0.0
  %3211 = vmatprep.subr.mxu0 0.0
  %3212 = vmatpush1.msra.mxu0 0.0
  %3213 = vmatprep.subr.mxu0 0.0
  %3214 = vmatpush1.msra.mxu0 0.0
  %3215 = vmatprep.subr.mxu0 0.0
  %3216 = vmatpush1.msra.mxu0 0.0
  %3217 = vmatprep.mubr.f32.mxu0 0.0
  %3218 = vmatmul.mubr.f32.gmra.mrb[0].mxu0 %v3151
  %v3219 = vpop.f32.mrb[0].mxu0
  %v3220 = vadd.f32 %v3149, %v3219
  %v3221 = vpop.f32.mrb[0].mxu0
  %3222 = vdwg.mxu0
  %v3223 = vxor.u32 %v3220, 2147483648
  %v3224 = vmul.f32 %v3223, 1.442695
  %v3225 = vpow.pop %v3224
  %v3226 = vadd.f32 %v3225, 1.0
  %v3227 = vrcp.pop %v3226
  %v3228 = vmul.f32 1.0, %v3227
  %3230 = vrot.lane.b32.xlu0 %v3043, 1
  %v3231 = vpop.permute.xlu0 %3230
  %3234 = vrot.lane.b32.xlu0 %v3019, 2
  %v3235 = vpop.permute.xlu0 %3234
  %vm3237 = vcmask 7168
  %v3238 = vsel %vm3237, %v3228, %v3231
  %vm3239 = vcmask 15360
  %v3240 = vsel %vm3239, %v3238, %v3235
  %vm3241 = vcmask 23552
  %v3242 = vsel %vm3241, %v3240, 0.0
  %3243 = vst [vmem:[%s11] sm:$0x3] %v3242
  // Predicated region
  $region46: #{combined_forward.1} parent=0 // pred_check
    _
  $region47: #{combined_forward.1} parent=0 // pred_check_branch
    %3245 = sbr.rel (0) target = $region49
  $region48: #{combined_forward.1} parent=0 // pred_region
    _
  $region49: #{combined_forward.1} parent=0 // pred_fallthru
    _
  // Predicated region
  $region50: #{combined_forward.1} parent=0 // pred_check
    _
  $region51: #{combined_forward.1} parent=0 // pred_check_branch
    %3247 = sbr.rel (0) target = $region53
  $region52: #{combined_forward.1} parent=0 // pred_region
    _
  $region53: #{combined_forward.1} parent=0 // pred_fallthru
    _

</llo_original>
